<compile_context>
chip_gen: v5e
topology: v5e:2x2
jax: 0.10.0
libtpu: 0.0.40
codegen_flags: <defaults>
</compile_context>

<pallas_src>
import functools

import jax
import jax.numpy as jnp
from jax import lax
from jax.experimental import pallas as pl
from jax.experimental.pallas import tpu as pltpu

HIDDEN = 50        # torch module hidden_dim
EMB_DIM = 50       # embeddings.shape[1]
NUM_CLASSES = 2    # nn.Linear(50, 2)

# padded (lane/sublane dense) kernel dimensions
HP = 128           # hidden padded to one full lane tile
CP = 128           # classifier output padded to one full lane tile
GATES = 4
G4 = GATES * HP    # fused gate width (512 lanes; each gate in a 128-lane slot)


def _sigmoid(x):
    # sigmoid(x) = 0.5*tanh(0.5*x) + 0.5 : one EUP tanh + one VPU fma,
    # instead of exp + divide on the serial recurrence critical path.
    return 0.5 * jnp.tanh(0.5 * x) + 0.5


def _self_attention_kernel(non_linearity, T,
                           lens_ref, tok_ref, tproj_ref, whh_ref,
                           b_ref, aw_ref, w3_ref, b3_ref,
                           out_ref,
                           xproj_ref, hts_ref, gates_ref, c_ref):
    """One batch tile (TB rows), whole sequence.

    lens_ref  : (1, TB, 1)  int32  sequence lengths
    tok_ref   : (T, TB, 1)  int32  token ids, time-major
    tproj_ref : (VP, 4*HP)  bf16   embedding table folded into W_ih (gate slots [i|f|g|o])
    whh_ref   : (HP, 4*HP)  bf16   fused hidden->gate weights
    b_ref     : (1, 4*HP)   f32    fused gate bias (b_ih + b_hh)
    aw_ref    : (1, HP)     f32    attention weight vector
    w3_ref    : (HP, CP)    bf16   final linear weight
    b3_ref    : (1, CP)     f32    final linear bias
    out_ref   : (TB, CP)    f32    logits (first NUM_CLASSES lanes valid)
    xproj_ref : (T*TB, 4*HP) bf16  scratch: hoisted embedded input projection
    hts_ref   : (T*TB, HP)   f32   scratch: per-step hidden states
    gates_ref : (TB, 4*HP)   f32   scratch: per-step gate pre-activations (VMEM-staged)
    c_ref     : (TB, HP)     f32   scratch: cell state
    """
    TB = out_ref.shape[0]
    Hp = whh_ref.shape[0]
    VP = tproj_ref.shape[0]
    TBT = T * TB

    # ---- 1) embedding lookup + input projection, fused: onehot @ (E @ W_ih) ----
    # Exact: the one-hot selects a single (bf16) row of tproj, so bf16 operands
    # and the bf16 scratch store are lossless here.
    tok = tok_ref[...].reshape(TBT, 1)                                   # (T*TB, 1)
    onehot = (tok == lax.broadcasted_iota(jnp.int32, (TBT, VP), 1)
              ).astype(jnp.float32).astype(jnp.bfloat16)                 # (T*TB, VP)
    xproj_ref[...] = jnp.dot(onehot, tproj_ref[...],
                             preferred_element_type=jnp.float32
                             ).astype(jnp.bfloat16)                      # (T*TB, 4*HP)

    # ---- 2) LSTM recurrence: fully unrolled, one fused matmul per step ----
    bias = b_ref[...]                                                    # (1, 4*HP) f32
    c_ref[...] = jnp.zeros_like(c_ref)
    for t in range(T):                      # static unroll: T is small and fixed
        r0 = t * TB
        if t == 0:
            hh = jnp.zeros((TB, G4), jnp.float32)        # h0 == 0 -> h @ W_hh == 0
        else:
            h_prev = hts_ref[pl.ds((t - 1) * TB, TB), :]
            hh = jnp.dot(h_prev.astype(jnp.bfloat16), whh_ref[...],
                         preferred_element_type=jnp.float32)             # (TB, 4*HP)
        # stage the full gate tensor in VMEM so big batch tiles don't spill vregs
        gates_ref[...] = xproj_ref[pl.ds(r0, TB), :].astype(jnp.float32) + bias + hh
        i_g = _sigmoid(gates_ref[:, 0 * Hp:1 * Hp])      # gate math stays f32 (v5e-safe)
        f_g = _sigmoid(gates_ref[:, 1 * Hp:2 * Hp])
        g_g = jnp.tanh(gates_ref[:, 2 * Hp:3 * Hp])
        o_g = _sigmoid(gates_ref[:, 3 * Hp:4 * Hp])
        c_ref[...] = f_g * c_ref[...] + i_g * g_g
        hts_ref[pl.ds(r0, TB), :] = o_g * jnp.tanh(c_ref[...])  # lane-dense store

    # ---- 3) attention over time + classifier head ----
    # valid[t, b] = 1.0 iff t < length[b]   (emulates pad_packed_sequence zeros)
    row_t = lax.broadcasted_iota(jnp.int32, (T, TB, 1), 0)               # (T, TB, 1)
    valid3 = (row_t < lens_ref[...]).astype(jnp.float32)                 # (T, TB, 1)
    valid = valid3.reshape(TBT, 1)                                       # (T*TB, 1)

    hts = hts_ref[...] * valid                                           # (T*TB, HP)
    pre = jnp.sum(hts * aw_ref[...], axis=-1, keepdims=True)             # (T*TB, 1)
    if non_linearity == 'relu':
        s2 = jnp.maximum(pre, 0.0)
    else:
        s2 = jnp.tanh(pre)

    # softmax over the time axis, then mask + renormalize (matches the torch module)
    s2 = s2.reshape(T, TB, 1)
    m = jnp.max(s2, axis=0, keepdims=True)
    e = jnp.exp(s2 - m)
    soft = e / jnp.sum(e, axis=0, keepdims=True)
    masked = soft * valid3
    sums = jnp.sum(masked, axis=0, keepdims=True)
    scores = masked / jnp.maximum(sums, 1e-9)   # guard: length-0 (batch padding) rows

    rep = jnp.sum(hts.reshape(T, TB, Hp) * scores, axis=0)               # (TB, HP)
    out_ref[...] = (jnp.dot(rep.astype(jnp.bfloat16), w3_ref[...],
                            preferred_element_type=jnp.float32)
                    + b3_ref[...])


def init_params(key, vocab_size=20):
    """Synthetic parameters in the torch module's native shapes, gate order [i,f,g,o]."""
    keys = jax.random.split(key, 8)
    k = HIDDEN ** -0.5
    return dict(
        embeddings=0.1 * jax.random.normal(keys[0], (vocab_size, EMB_DIM), jnp.float32),
        w_ih=jax.random.uniform(keys[1], (4 * HIDDEN, EMB_DIM), jnp.float32, -k, k),
        w_hh=jax.random.uniform(keys[2], (4 * HIDDEN, HIDDEN), jnp.float32, -k, k),
        b_ih=jax.random.uniform(keys[3], (4 * HIDDEN,), jnp.float32, -k, k),
        b_hh=jax.random.uniform(keys[4], (4 * HIDDEN,), jnp.float32, -k, k),
        attn_w=jax.random.uniform(keys[5], (EMB_DIM,), jnp.float32, -0.005, 0.005),
        w3=jax.random.uniform(keys[6], (NUM_CLASSES, HIDDEN), jnp.float32, -k, k),
        b3=jax.random.uniform(keys[7], (NUM_CLASSES,), jnp.float32, -k, k),
    )


def _prepare_kernel_params(p):
    """Fuse the 4 LSTM gates, transpose to (in, out), zero-pad to lane-dense tiles,
    fold the embedding table into W_ih (tproj = E @ W_ih^T, per gate slot), and
    cast matmul weights to bf16 (accumulation stays f32 in the kernel).
    Zero padding is mathematically inert: padded gate lanes see zero weights/bias,
    so their cell state stays 0 and their hidden state stays 0 throughout."""
    V = p['embeddings'].shape[0]
    VP = ((V + 127) // 128) * 128          # full 128-lane contraction tile

    table = jnp.zeros((VP, EMB_DIM), jnp.float32).at[:V, :].set(p['embeddings'])
    wih = jnp.zeros((EMB_DIM, G4), jnp.float32)
    whh = jnp.zeros((HP, G4), jnp.float32)
    b = jnp.zeros((1, G4), jnp.float32)
    for g in range(GATES):          # torch gate order [i, f, g, o]
        sl = slice(g * HIDDEN, (g + 1) * HIDDEN)
        wih = wih.at[:, g * HP:g * HP + HIDDEN].set(p['w_ih'][sl, :].T)
        whh = whh.at[:HIDDEN, g * HP:g * HP + HIDDEN].set(p['w_hh'][sl, :].T)
        b = b.at[0, g * HP:g * HP + HIDDEN].set(p['b_ih'][sl] + p['b_hh'][sl])
    tproj = (table @ wih).astype(jnp.bfloat16)          # (VP, 4*HP) folded projection
    aw = jnp.zeros((1, HP), jnp.float32).at[0, :HIDDEN].set(p['attn_w'])
    w3 = jnp.zeros((HP, CP), jnp.float32).at[:HIDDEN, :NUM_CLASSES].set(p['w3'].T)
    b3 = jnp.zeros((1, CP), jnp.float32).at[0, :NUM_CLASSES].set(p['b3'])
    return dict(tproj=tproj,
                w_hh=whh.astype(jnp.bfloat16),
                b=b, attn_w=aw,
                w3=w3.astype(jnp.bfloat16), b3=b3)


def self_attention_forward(tokens, lengths, params, non_linearity='tanh',
                           batch_tile=128):
    """tokens: (B, T) int32, lengths: (B,) int32 (1 <= length <= T).

    batch_tile=128 fills the MXU rows on v5e (and is a good default on
    v6e/v7x; 256 is also fine there). It is clamped down for small batches;
    batches spanning >= 2 tiles shard across v7x's two TensorCores via the
    "parallel" grid axis.
    """
    B, T = tokens.shape
    Bp_min = ((B + 7) // 8) * 8
    batch_tile = max(8, min(((batch_tile + 7) // 8) * 8, Bp_min))
    Bp = pl.cdiv(B, batch_tile) * batch_tile
    kp = _prepare_kernel_params(params)

    tok = jnp.pad(jnp.transpose(tokens.astype(jnp.int32), (1, 0)),
                  ((0, 0), (0, Bp - B)))[:, :, None]                       # (T, Bp, 1)
    lens = jnp.pad(lengths.astype(jnp.int32), (0, Bp - B))[None, :, None]  # (1, Bp, 1)

    def full_spec(arr):
        nd = arr.ndim
        return pl.BlockSpec(arr.shape, lambda i, _nd=nd: (0,) * _nd)

    kernel = functools.partial(_self_attention_kernel, non_linearity, T)
    out_p = pl.pallas_call(
        kernel,
        out_shape=jax.ShapeDtypeStruct((Bp, CP), jnp.float32),
        grid=(Bp // batch_tile,),
        in_specs=[
            pl.BlockSpec((1, batch_tile, 1), lambda i: (0, i, 0)),   # lengths
            pl.BlockSpec((T, batch_tile, 1), lambda i: (0, i, 0)),   # tokens
            full_spec(kp['tproj']), full_spec(kp['w_hh']),
            full_spec(kp['b']), full_spec(kp['attn_w']),
            full_spec(kp['w3']), full_spec(kp['b3']),
        ],
        out_specs=pl.BlockSpec((batch_tile, CP), lambda i: (i, 0)),
        scratch_shapes=[
            pltpu.VMEM((T * batch_tile, G4), jnp.bfloat16),  # hoisted input projection
            pltpu.VMEM((T * batch_tile, HP), jnp.float32),   # per-step hidden states
            pltpu.VMEM((batch_tile, G4), jnp.float32),       # per-step gates (staged)
            pltpu.VMEM((batch_tile, HP), jnp.float32),       # cell state
        ],
        compiler_params=pltpu.CompilerParams(
            dimension_semantics=("parallel",)),
    )(lens, tok, kp['tproj'], kp['w_hh'], kp['b'],
      kp['attn_w'], kp['w3'], kp['b3'])
    return out_p[:B, :NUM_CLASSES]


def self_attention_reference(tokens, lengths, p, non_linearity='tanh'):
    """Pure-JAX f32 reference with the exact torch-module semantics."""
    B, T = tokens.shape
    emb = p['embeddings'][tokens]                            # (B, T, D)

    def cell(carry, x_t):
        h, c = carry
        gates = (x_t @ p['w_ih'].T + h @ p['w_hh'].T
                 + p['b_ih'] + p['b_hh'])                    # (B, 4H), [i|f|g|o]
        i, f, g, o = jnp.split(gates, 4, axis=-1)
        c = jax.nn.sigmoid(f) * c + jax.nn.sigmoid(i) * jnp.tanh(g)
        h = jax.nn.sigmoid(o) * jnp.tanh(c)
        return (h, c), h

    h0 = jnp.zeros((B, HIDDEN), jnp.float32)
    _, hts = lax.scan(cell, (h0, h0), jnp.transpose(emb, (1, 0, 2)))
    ht = jnp.transpose(hts, (1, 0, 2))                       # (B, T, H)

    valid = (jnp.arange(T)[None, :] < lengths[:, None]).astype(jnp.float32)
    ht = ht * valid[:, :, None]                              # pad_packed zeros
    pre = ht @ p['attn_w']                                   # (B, T)
    s2 = jnp.maximum(pre, 0.0) if non_linearity == 'relu' else jnp.tanh(pre)
    soft = jax.nn.softmax(s2, axis=-1)
    masked = soft * valid
    scores = masked / masked.sum(-1, keepdims=True)
    rep = (ht * scores[:, :, None]).sum(1)                   # (B, H)
    return rep @ p['w3'].T + p['b3']


if __name__ == "__main__":
    key = jax.random.PRNGKey(0)
    pkey, tkey = jax.random.split(key)

    B, T, V = 4, 8, 20
    params = init_params(pkey, vocab_size=V)
    tokens = jax.random.randint(tkey, (B, T), 0, V, dtype=jnp.int32)
    lengths = jnp.array([T, 5, 3, T], dtype=jnp.int32)       # max(lengths) == T

    fwd = jax.jit(functools.partial(self_attention_forward, non_linearity='tanh'))
    logits = jax.block_until_ready(fwd(tokens, lengths, params))

    assert logits.shape == (B, NUM_CLASSES)
    assert bool(jnp.all(jnp.isfinite(logits)))

    # loose tolerance: kernel uses bf16 matmul operands with f32 accumulation
    ref = self_attention_reference(tokens, lengths, params, non_linearity='tanh')
    assert bool(jnp.allclose(logits, ref, atol=5e-2, rtol=5e-2)), (logits, ref)

    print("KERNEL_OK")
</pallas_src>

<mosaic_0001>
module attributes {stable_mosaic.version = 11 : i64} {
  func.func @_self_attention_kernel(%arg0: i32, %arg1: memref<1x8x1xi32, #tpu.memory_space<vmem>>, %arg2: memref<8x8x1xi32, #tpu.memory_space<vmem>>, %arg3: memref<128x512xbf16, #tpu.memory_space<vmem>>, %arg4: memref<128x512xbf16, #tpu.memory_space<vmem>>, %arg5: memref<1x512xf32, #tpu.memory_space<vmem>>, %arg6: memref<1x128xf32, #tpu.memory_space<vmem>>, %arg7: memref<128x128xbf16, #tpu.memory_space<vmem>>, %arg8: memref<1x128xf32, #tpu.memory_space<vmem>>, %arg9: memref<8x128xf32, #tpu.memory_space<vmem>>, %arg10: memref<64x512xbf16, #tpu.memory_space<vmem>>, %arg11: memref<64x128xf32, #tpu.memory_space<vmem>>, %arg12: memref<8x512xf32, #tpu.memory_space<vmem>>, %arg13: memref<8x128xf32, #tpu.memory_space<vmem>>) attributes {dimension_semantics = [#tpu.dimension_semantics<parallel>], iteration_bounds = array<i64: 1>, scalar_prefetch = 0 : i64, scratch_operands = 4 : i64, tpu.core_type = #tpu.core_type<tc>, window_params = [{transform_indices = @transform_0, window_bounds = array<i64: 1, 8, 1>}, {transform_indices = @transform_1, window_bounds = array<i64: 8, 8, 1>}, {pipeline_mode = #tpu.pipeline_mode<synchronous>, transform_indices = @transform_2, window_bounds = array<i64: 128, 512>}, {pipeline_mode = #tpu.pipeline_mode<synchronous>, transform_indices = @transform_3, window_bounds = array<i64: 128, 512>}, {pipeline_mode = #tpu.pipeline_mode<synchronous>, transform_indices = @transform_4, window_bounds = array<i64: 1, 512>}, {pipeline_mode = #tpu.pipeline_mode<synchronous>, transform_indices = @transform_5, window_bounds = array<i64: 1, 128>}, {pipeline_mode = #tpu.pipeline_mode<synchronous>, transform_indices = @transform_6, window_bounds = array<i64: 128, 128>}, {pipeline_mode = #tpu.pipeline_mode<synchronous>, transform_indices = @transform_7, window_bounds = array<i64: 1, 128>}, {transform_indices = @transform_8, window_bounds = array<i64: 8, 128>}]} {
    %c0 = arith.constant 0 : index
    %c0_0 = arith.constant 0 : index
    %c0_1 = arith.constant 0 : index
    %0 = vector.load %arg2[%c0, %c0_0, %c0_1] : memref<8x8x1xi32, #tpu.memory_space<vmem>>, vector<8x8x1xi32>
    %1 = vector.shape_cast %0 : vector<8x8x1xi32> to vector<64x1xi32>
    %2 = tpu.iota {dimensions = array<i32: 1>} : vector<64x128xi32>
    %3 = vector.broadcast %1 : vector<64x1xi32> to vector<64x128xi32>
    %4 = arith.cmpi eq, %3, %2 : vector<64x128xi32>
    %5 = arith.extui %4 : vector<64x128xi1> to vector<64x128xi32>
    %6 = arith.sitofp %5 : vector<64x128xi32> to vector<64x128xf32>
    %7 = arith.truncf %6 : vector<64x128xf32> to vector<64x128xbf16>
    %c0_2 = arith.constant 0 : index
    %c0_3 = arith.constant 0 : index
    %8 = vector.load %arg3[%c0_2, %c0_3] : memref<128x512xbf16, #tpu.memory_space<vmem>>, vector<128x512xbf16>
    %cst = arith.constant dense<0.000000e+00> : vector<64x512xf32>
    %9 = tpu.matmul %7, %8, %cst {dimension_numbers = #tpu.dot_dimension_numbers<[1], [0], [0], [1], [0, 0, 1, 1], [], []>} : vector<64x128xbf16>, vector<128x512xbf16>, vector<64x512xf32> -> vector<64x512xf32>
    %10 = arith.truncf %9 : vector<64x512xf32> to vector<64x512xbf16>
    %c0_4 = arith.constant 0 : index
    %c0_5 = arith.constant 0 : index
    %11 = vector.load %arg10[%c0_4, %c0_5] : memref<64x512xbf16, #tpu.memory_space<vmem>>, vector<64x512xbf16>
    tpu.vector_store %arg10[%c0_4, %c0_5], %10 {strides = array<i32>} : memref<64x512xbf16, #tpu.memory_space<vmem>>, vector<64x512xbf16>,
    %c0_6 = arith.constant 0 : index
    %c0_7 = arith.constant 0 : index
    %12 = vector.load %arg5[%c0_6, %c0_7] : memref<1x512xf32, #tpu.memory_space<vmem>>, vector<1x512xf32>
    %cst_8 = arith.constant 0.000000e+00 : f32
    %13 = vector.broadcast %cst_8 : f32 to vector<8x128xf32>
    %c0_9 = arith.constant 0 : index
    %c0_10 = arith.constant 0 : index
    %14 = vector.load %arg13[%c0_9, %c0_10] : memref<8x128xf32, #tpu.memory_space<vmem>>, vector<8x128xf32>
    tpu.vector_store %arg13[%c0_9, %c0_10], %13 {strides = array<i32>} : memref<8x128xf32, #tpu.memory_space<vmem>>, vector<8x128xf32>,
    %cst_11 = arith.constant 0.000000e+00 : f32
    %15 = vector.broadcast %cst_11 : f32 to vector<8x512xf32>
    %c0_12 = arith.constant 0 : index
    %c0_13 = arith.constant 0 : index
    %16 = vector.load %arg10[%c0_12, %c0_13] : memref<64x512xbf16, #tpu.memory_space<vmem>>, vector<8x512xbf16>
    %17 = arith.extf %16 : vector<8x512xbf16> to vector<8x512xf32>
    %18 = vector.broadcast %12 : vector<1x512xf32> to vector<8x512xf32>
    %19 = arith.addf %17, %18 : vector<8x512xf32>
    %20 = arith.addf %19, %15 : vector<8x512xf32>
    %c0_14 = arith.constant 0 : index
    %c0_15 = arith.constant 0 : index
    %21 = vector.load %arg12[%c0_14, %c0_15] : memref<8x512xf32, #tpu.memory_space<vmem>>, vector<8x512xf32>
    tpu.vector_store %arg12[%c0_14, %c0_15], %20 {strides = array<i32>} : memref<8x512xf32, #tpu.memory_space<vmem>>, vector<8x512xf32>,
    %c0_16 = arith.constant 0 : index
    %c0_17 = arith.constant 0 : index
    %22 = vector.load %arg12[%c0_16, %c0_17] : memref<8x512xf32, #tpu.memory_space<vmem>>, vector<8x128xf32>
    %cst_18 = arith.constant 5.000000e-01 : f32
    %23 = vector.broadcast %cst_18 : f32 to vector<8x128xf32>
    %24 = arith.mulf %23, %22 : vector<8x128xf32>
    %25 = math.tanh %24 : vector<8x128xf32>
    %cst_19 = arith.constant 5.000000e-01 : f32
    %26 = vector.broadcast %cst_19 : f32 to vector<8x128xf32>
    %27 = arith.mulf %26, %25 : vector<8x128xf32>
    %cst_20 = arith.constant 5.000000e-01 : f32
    %28 = vector.broadcast %cst_20 : f32 to vector<8x128xf32>
    %29 = arith.addf %27, %28 : vector<8x128xf32>
    %c0_21 = arith.constant 0 : index
    %c128 = arith.constant 128 : index
    %30 = vector.load %arg12[%c0_21, %c128] : memref<8x512xf32, #tpu.memory_space<vmem>>, vector<8x128xf32>
    %cst_22 = arith.constant 5.000000e-01 : f32
    %31 = vector.broadcast %cst_22 : f32 to vector<8x128xf32>
    %32 = arith.mulf %31, %30 : vector<8x128xf32>
    %33 = math.tanh %32 : vector<8x128xf32>
    %cst_23 = arith.constant 5.000000e-01 : f32
    %34 = vector.broadcast %cst_23 : f32 to vector<8x128xf32>
    %35 = arith.mulf %34, %33 : vector<8x128xf32>
    %cst_24 = arith.constant 5.000000e-01 : f32
    %36 = vector.broadcast %cst_24 : f32 to vector<8x128xf32>
    %37 = arith.addf %35, %36 : vector<8x128xf32>
    %c0_25 = arith.constant 0 : index
    %c256 = arith.constant 256 : index
    %38 = vector.load %arg12[%c0_25, %c256] : memref<8x512xf32, #tpu.memory_space<vmem>>, vector<8x128xf32>
    %39 = math.tanh %38 : vector<8x128xf32>
    %c0_26 = arith.constant 0 : index
    %c384 = arith.constant 384 : index
    %40 = vector.load %arg12[%c0_26, %c384] : memref<8x512xf32, #tpu.memory_space<vmem>>, vector<8x128xf32>
    %cst_27 = arith.constant 5.000000e-01 : f32
    %41 = vector.broadcast %cst_27 : f32 to vector<8x128xf32>
    %42 = arith.mulf %41, %40 : vector<8x128xf32>
    %43 = math.tanh %42 : vector<8x128xf32>
    %cst_28 = arith.constant 5.000000e-01 : f32
    %44 = vector.broadcast %cst_28 : f32 to vector<8x128xf32>
    %45 = arith.mulf %44, %43 : vector<8x128xf32>
    %cst_29 = arith.constant 5.000000e-01 : f32
    %46 = vector.broadcast %cst_29 : f32 to vector<8x128xf32>
    %47 = arith.addf %45, %46 : vector<8x128xf32>
    %c0_30 = arith.constant 0 : index
    %c0_31 = arith.constant 0 : index
    %48 = vector.load %arg13[%c0_30, %c0_31] : memref<8x128xf32, #tpu.memory_space<vmem>>, vector<8x128xf32>
    %49 = arith.mulf %37, %48 : vector<8x128xf32>
    %50 = arith.mulf %29, %39 : vector<8x128xf32>
    %51 = arith.addf %49, %50 : vector<8x128xf32>
    %c0_32 = arith.constant 0 : index
    %c0_33 = arith.constant 0 : index
    %52 = vector.load %arg13[%c0_32, %c0_33] : memref<8x128xf32, #tpu.memory_space<vmem>>, vector<8x128xf32>
    tpu.vector_store %arg13[%c0_32, %c0_33], %51 {strides = array<i32>} : memref<8x128xf32, #tpu.memory_space<vmem>>, vector<8x128xf32>,
    %c0_34 = arith.constant 0 : index
    %c0_35 = arith.constant 0 : index
    %53 = vector.load %arg13[%c0_34, %c0_35] : memref<8x128xf32, #tpu.memory_space<vmem>>, vector<8x128xf32>
    %54 = math.tanh %53 : vector<8x128xf32>
    %55 = arith.mulf %47, %54 : vector<8x128xf32>
    %c0_36 = arith.constant 0 : index
    %c0_37 = arith.constant 0 : index
    %56 = vector.load %arg11[%c0_36, %c0_37] : memref<64x128xf32, #tpu.memory_space<vmem>>, vector<8x128xf32>
    tpu.vector_store %arg11[%c0_36, %c0_37], %55 {strides = array<i32>} : memref<64x128xf32, #tpu.memory_space<vmem>>, vector<8x128xf32>,
    %c0_38 = arith.constant 0 : index
    %c0_39 = arith.constant 0 : index
    %57 = vector.load %arg11[%c0_38, %c0_39] : memref<64x128xf32, #tpu.memory_space<vmem>>, vector<8x128xf32>
    %58 = arith.truncf %57 : vector<8x128xf32> to vector<8x128xbf16>
    %c0_40 = arith.constant 0 : index
    %c0_41 = arith.constant 0 : index
    %59 = vector.load %arg4[%c0_40, %c0_41] : memref<128x512xbf16, #tpu.memory_space<vmem>>, vector<128x512xbf16>
    %cst_42 = arith.constant dense<0.000000e+00> : vector<8x512xf32>
    %60 = tpu.matmul %58, %59, %cst_42 {dimension_numbers = #tpu.dot_dimension_numbers<[1], [0], [0], [1], [0, 0, 1, 1], [], []>} : vector<8x128xbf16>, vector<128x512xbf16>, vector<8x512xf32> -> vector<8x512xf32>
    %c8 = arith.constant 8 : index
    %c0_43 = arith.constant 0 : index
    %61 = vector.load %arg10[%c8, %c0_43] : memref<64x512xbf16, #tpu.memory_space<vmem>>, vector<8x512xbf16>
    %62 = arith.extf %61 : vector<8x512xbf16> to vector<8x512xf32>
    %63 = vector.broadcast %12 : vector<1x512xf32> to vector<8x512xf32>
    %64 = arith.addf %62, %63 : vector<8x512xf32>
    %65 = arith.addf %64, %60 : vector<8x512xf32>
    %c0_44 = arith.constant 0 : index
    %c0_45 = arith.constant 0 : index
    %66 = vector.load %arg12[%c0_44, %c0_45] : memref<8x512xf32, #tpu.memory_space<vmem>>, vector<8x512xf32>
    tpu.vector_store %arg12[%c0_44, %c0_45], %65 {strides = array<i32>} : memref<8x512xf32, #tpu.memory_space<vmem>>, vector<8x512xf32>,
    %c0_46 = arith.constant 0 : index
    %c0_47 = arith.constant 0 : index
    %67 = vector.load %arg12[%c0_46, %c0_47] : memref<8x512xf32, #tpu.memory_space<vmem>>, vector<8x128xf32>
    %cst_48 = arith.constant 5.000000e-01 : f32
    %68 = vector.broadcast %cst_48 : f32 to vector<8x128xf32>
    %69 = arith.mulf %68, %67 : vector<8x128xf32>
    %70 = math.tanh %69 : vector<8x128xf32>
    %cst_49 = arith.constant 5.000000e-01 : f32
    %71 = vector.broadcast %cst_49 : f32 to vector<8x128xf32>
    %72 = arith.mulf %71, %70 : vector<8x128xf32>
    %cst_50 = arith.constant 5.000000e-01 : f32
    %73 = vector.broadcast %cst_50 : f32 to vector<8x128xf32>
    %74 = arith.addf %72, %73 : vector<8x128xf32>
    %c0_51 = arith.constant 0 : index
    %c128_52 = arith.constant 128 : index
    %75 = vector.load %arg12[%c0_51, %c128_52] : memref<8x512xf32, #tpu.memory_space<vmem>>, vector<8x128xf32>
    %cst_53 = arith.constant 5.000000e-01 : f32
    %76 = vector.broadcast %cst_53 : f32 to vector<8x128xf32>
    %77 = arith.mulf %76, %75 : vector<8x128xf32>
    %78 = math.tanh %77 : vector<8x128xf32>
    %cst_54 = arith.constant 5.000000e-01 : f32
    %79 = vector.broadcast %cst_54 : f32 to vector<8x128xf32>
    %80 = arith.mulf %79, %78 : vector<8x128xf32>
    %cst_55 = arith.constant 5.000000e-01 : f32
    %81 = vector.broadcast %cst_55 : f32 to vector<8x128xf32>
    %82 = arith.addf %80, %81 : vector<8x128xf32>
    %c0_56 = arith.constant 0 : index
    %c256_57 = arith.constant 256 : index
    %83 = vector.load %arg12[%c0_56, %c256_57] : memref<8x512xf32, #tpu.memory_space<vmem>>, vector<8x128xf32>
    %84 = math.tanh %83 : vector<8x128xf32>
    %c0_58 = arith.constant 0 : index
    %c384_59 = arith.constant 384 : index
    %85 = vector.load %arg12[%c0_58, %c384_59] : memref<8x512xf32, #tpu.memory_space<vmem>>, vector<8x128xf32>
    %cst_60 = arith.constant 5.000000e-01 : f32
    %86 = vector.broadcast %cst_60 : f32 to vector<8x128xf32>
    %87 = arith.mulf %86, %85 : vector<8x128xf32>
    %88 = math.tanh %87 : vector<8x128xf32>
    %cst_61 = arith.constant 5.000000e-01 : f32
    %89 = vector.broadcast %cst_61 : f32 to vector<8x128xf32>
    %90 = arith.mulf %89, %88 : vector<8x128xf32>
    %cst_62 = arith.constant 5.000000e-01 : f32
    %91 = vector.broadcast %cst_62 : f32 to vector<8x128xf32>
    %92 = arith.addf %90, %91 : vector<8x128xf32>
    %c0_63 = arith.constant 0 : index
    %c0_64 = arith.constant 0 : index
    %93 = vector.load %arg13[%c0_63, %c0_64] : memref<8x128xf32, #tpu.memory_space<vmem>>, vector<8x128xf32>
    %94 = arith.mulf %82, %93 : vector<8x128xf32>
    %95 = arith.mulf %74, %84 : vector<8x128xf32>
    %96 = arith.addf %94, %95 : vector<8x128xf32>
    %c0_65 = arith.constant 0 : index
    %c0_66 = arith.constant 0 : index
    %97 = vector.load %arg13[%c0_65, %c0_66] : memref<8x128xf32, #tpu.memory_space<vmem>>, vector<8x128xf32>
    tpu.vector_store %arg13[%c0_65, %c0_66], %96 {strides = array<i32>} : memref<8x128xf32, #tpu.memory_space<vmem>>, vector<8x128xf32>,
    %c0_67 = arith.constant 0 : index
    %c0_68 = arith.constant 0 : index
    %98 = vector.load %arg13[%c0_67, %c0_68] : memref<8x128xf32, #tpu.memory_space<vmem>>, vector<8x128xf32>
    %99 = math.tanh %98 : vector<8x128xf32>
    %100 = arith.mulf %92, %99 : vector<8x128xf32>
    %c8_69 = arith.constant 8 : index
    %c0_70 = arith.constant 0 : index
    %101 = vector.load %arg11[%c8_69, %c0_70] : memref<64x128xf32, #tpu.memory_space<vmem>>, vector<8x128xf32>
    tpu.vector_store %arg11[%c8_69, %c0_70], %100 {strides = array<i32>} : memref<64x128xf32, #tpu.memory_space<vmem>>, vector<8x128xf32>,
    %c8_71 = arith.constant 8 : index
    %c0_72 = arith.constant 0 : index
    %102 = vector.load %arg11[%c8_71, %c0_72] : memref<64x128xf32, #tpu.memory_space<vmem>>, vector<8x128xf32>
    %103 = arith.truncf %102 : vector<8x128xf32> to vector<8x128xbf16>
    %c0_73 = arith.constant 0 : index
    %c0_74 = arith.constant 0 : index
    %104 = vector.load %arg4[%c0_73, %c0_74] : memref<128x512xbf16, #tpu.memory_space<vmem>>, vector<128x512xbf16>
    %cst_75 = arith.constant dense<0.000000e+00> : vector<8x512xf32>
    %105 = tpu.matmul %103, %104, %cst_75 {dimension_numbers = #tpu.dot_dimension_numbers<[1], [0], [0], [1], [0, 0, 1, 1], [], []>} : vector<8x128xbf16>, vector<128x512xbf16>, vector<8x512xf32> -> vector<8x512xf32>
    %c16 = arith.constant 16 : index
    %c0_76 = arith.constant 0 : index
    %106 = vector.load %arg10[%c16, %c0_76] : memref<64x512xbf16, #tpu.memory_space<vmem>>, vector<8x512xbf16>
    %107 = arith.extf %106 : vector<8x512xbf16> to vector<8x512xf32>
    %108 = vector.broadcast %12 : vector<1x512xf32> to vector<8x512xf32>
    %109 = arith.addf %107, %108 : vector<8x512xf32>
    %110 = arith.addf %109, %105 : vector<8x512xf32>
    %c0_77 = arith.constant 0 : index
    %c0_78 = arith.constant 0 : index
    %111 = vector.load %arg12[%c0_77, %c0_78] : memref<8x512xf32, #tpu.memory_space<vmem>>, vector<8x512xf32>
    tpu.vector_store %arg12[%c0_77, %c0_78], %110 {strides = array<i32>} : memref<8x512xf32, #tpu.memory_space<vmem>>, vector<8x512xf32>,
    %c0_79 = arith.constant 0 : index
    %c0_80 = arith.constant 0 : index
    %112 = vector.load %arg12[%c0_79, %c0_80] : memref<8x512xf32, #tpu.memory_space<vmem>>, vector<8x128xf32>
    %cst_81 = arith.constant 5.000000e-01 : f32
    %113 = vector.broadcast %cst_81 : f32 to vector<8x128xf32>
    %114 = arith.mulf %113, %112 : vector<8x128xf32>
    %115 = math.tanh %114 : vector<8x128xf32>
    %cst_82 = arith.constant 5.000000e-01 : f32
    %116 = vector.broadcast %cst_82 : f32 to vector<8x128xf32>
    %117 = arith.mulf %116, %115 : vector<8x128xf32>
    %cst_83 = arith.constant 5.000000e-01 : f32
    %118 = vector.broadcast %cst_83 : f32 to vector<8x128xf32>
    %119 = arith.addf %117, %118 : vector<8x128xf32>
    %c0_84 = arith.constant 0 : index
    %c128_85 = arith.constant 128 : index
    %120 = vector.load %arg12[%c0_84, %c128_85] : memref<8x512xf32, #tpu.memory_space<vmem>>, vector<8x128xf32>
    %cst_86 = arith.constant 5.000000e-01 : f32
    %121 = vector.broadcast %cst_86 : f32 to vector<8x128xf32>
    %122 = arith.mulf %121, %120 : vector<8x128xf32>
    %123 = math.tanh %122 : vector<8x128xf32>
    %cst_87 = arith.constant 5.000000e-01 : f32
    %124 = vector.broadcast %cst_87 : f32 to vector<8x128xf32>
    %125 = arith.mulf %124, %123 : vector<8x128xf32>
    %cst_88 = arith.constant 5.000000e-01 : f32
    %126 = vector.broadcast %cst_88 : f32 to vector<8x128xf32>
    %127 = arith.addf %125, %126 : vector<8x128xf32>
    %c0_89 = arith.constant 0 : index
    %c256_90 = arith.constant 256 : index
    %128 = vector.load %arg12[%c0_89, %c256_90] : memref<8x512xf32, #tpu.memory_space<vmem>>, vector<8x128xf32>
    %129 = math.tanh %128 : vector<8x128xf32>
    %c0_91 = arith.constant 0 : index
    %c384_92 = arith.constant 384 : index
    %130 = vector.load %arg12[%c0_91, %c384_92] : memref<8x512xf32, #tpu.memory_space<vmem>>, vector<8x128xf32>
    %cst_93 = arith.constant 5.000000e-01 : f32
    %131 = vector.broadcast %cst_93 : f32 to vector<8x128xf32>
    %132 = arith.mulf %131, %130 : vector<8x128xf32>
    %133 = math.tanh %132 : vector<8x128xf32>
    %cst_94 = arith.constant 5.000000e-01 : f32
    %134 = vector.broadcast %cst_94 : f32 to vector<8x128xf32>
    %135 = arith.mulf %134, %133 : vector<8x128xf32>
    %cst_95 = arith.constant 5.000000e-01 : f32
    %136 = vector.broadcast %cst_95 : f32 to vector<8x128xf32>
    %137 = arith.addf %135, %136 : vector<8x128xf32>
    %c0_96 = arith.constant 0 : index
    %c0_97 = arith.constant 0 : index
    %138 = vector.load %arg13[%c0_96, %c0_97] : memref<8x128xf32, #tpu.memory_space<vmem>>, vector<8x128xf32>
    %139 = arith.mulf %127, %138 : vector<8x128xf32>
    %140 = arith.mulf %119, %129 : vector<8x128xf32>
    %141 = arith.addf %139, %140 : vector<8x128xf32>
    %c0_98 = arith.constant 0 : index
    %c0_99 = arith.constant 0 : index
    %142 = vector.load %arg13[%c0_98, %c0_99] : memref<8x128xf32, #tpu.memory_space<vmem>>, vector<8x128xf32>
    tpu.vector_store %arg13[%c0_98, %c0_99], %141 {strides = array<i32>} : memref<8x128xf32, #tpu.memory_space<vmem>>, vector<8x128xf32>,
    %c0_100 = arith.constant 0 : index
    %c0_101 = arith.constant 0 : index
    %143 = vector.load %arg13[%c0_100, %c0_101] : memref<8x128xf32, #tpu.memory_space<vmem>>, vector<8x128xf32>
    %144 = math.tanh %143 : vector<8x128xf32>
    %145 = arith.mulf %137, %144 : vector<8x128xf32>
    %c16_102 = arith.constant 16 : index
    %c0_103 = arith.constant 0 : index
    %146 = vector.load %arg11[%c16_102, %c0_103] : memref<64x128xf32, #tpu.memory_space<vmem>>, vector<8x128xf32>
    tpu.vector_store %arg11[%c16_102, %c0_103], %145 {strides = array<i32>} : memref<64x128xf32, #tpu.memory_space<vmem>>, vector<8x128xf32>,
    %c16_104 = arith.constant 16 : index
    %c0_105 = arith.constant 0 : index
    %147 = vector.load %arg11[%c16_104, %c0_105] : memref<64x128xf32, #tpu.memory_space<vmem>>, vector<8x128xf32>
    %148 = arith.truncf %147 : vector<8x128xf32> to vector<8x128xbf16>
    %c0_106 = arith.constant 0 : index
    %c0_107 = arith.constant 0 : index
    %149 = vector.load %arg4[%c0_106, %c0_107] : memref<128x512xbf16, #tpu.memory_space<vmem>>, vector<128x512xbf16>
    %cst_108 = arith.constant dense<0.000000e+00> : vector<8x512xf32>
    %150 = tpu.matmul %148, %149, %cst_108 {dimension_numbers = #tpu.dot_dimension_numbers<[1], [0], [0], [1], [0, 0, 1, 1], [], []>} : vector<8x128xbf16>, vector<128x512xbf16>, vector<8x512xf32> -> vector<8x512xf32>
    %c24 = arith.constant 24 : index
    %c0_109 = arith.constant 0 : index
    %151 = vector.load %arg10[%c24, %c0_109] : memref<64x512xbf16, #tpu.memory_space<vmem>>, vector<8x512xbf16>
    %152 = arith.extf %151 : vector<8x512xbf16> to vector<8x512xf32>
    %153 = vector.broadcast %12 : vector<1x512xf32> to vector<8x512xf32>
    %154 = arith.addf %152, %153 : vector<8x512xf32>
    %155 = arith.addf %154, %150 : vector<8x512xf32>
    %c0_110 = arith.constant 0 : index
    %c0_111 = arith.constant 0 : index
    %156 = vector.load %arg12[%c0_110, %c0_111] : memref<8x512xf32, #tpu.memory_space<vmem>>, vector<8x512xf32>
    tpu.vector_store %arg12[%c0_110, %c0_111], %155 {strides = array<i32>} : memref<8x512xf32, #tpu.memory_space<vmem>>, vector<8x512xf32>,
    %c0_112 = arith.constant 0 : index
    %c0_113 = arith.constant 0 : index
    %157 = vector.load %arg12[%c0_112, %c0_113] : memref<8x512xf32, #tpu.memory_space<vmem>>, vector<8x128xf32>
    %cst_114 = arith.constant 5.000000e-01 : f32
    %158 = vector.broadcast %cst_114 : f32 to vector<8x128xf32>
    %159 = arith.mulf %158, %157 : vector<8x128xf32>
    %160 = math.tanh %159 : vector<8x128xf32>
    %cst_115 = arith.constant 5.000000e-01 : f32
    %161 = vector.broadcast %cst_115 : f32 to vector<8x128xf32>
    %162 = arith.mulf %161, %160 : vector<8x128xf32>
    %cst_116 = arith.constant 5.000000e-01 : f32
    %163 = vector.broadcast %cst_116 : f32 to vector<8x128xf32>
    %164 = arith.addf %162, %163 : vector<8x128xf32>
    %c0_117 = arith.constant 0 : index
    %c128_118 = arith.constant 128 : index
    %165 = vector.load %arg12[%c0_117, %c128_118] : memref<8x512xf32, #tpu.memory_space<vmem>>, vector<8x128xf32>
    %cst_119 = arith.constant 5.000000e-01 : f32
    %166 = vector.broadcast %cst_119 : f32 to vector<8x128xf32>
    %167 = arith.mulf %166, %165 : vector<8x128xf32>
    %168 = math.tanh %167 : vector<8x128xf32>
    %cst_120 = arith.constant 5.000000e-01 : f32
    %169 = vector.broadcast %cst_120 : f32 to vector<8x128xf32>
    %170 = arith.mulf %169, %168 : vector<8x128xf32>
    %cst_121 = arith.constant 5.000000e-01 : f32
    %171 = vector.broadcast %cst_121 : f32 to vector<8x128xf32>
    %172 = arith.addf %170, %171 : vector<8x128xf32>
    %c0_122 = arith.constant 0 : index
    %c256_123 = arith.constant 256 : index
    %173 = vector.load %arg12[%c0_122, %c256_123] : memref<8x512xf32, #tpu.memory_space<vmem>>, vector<8x128xf32>
    %174 = math.tanh %173 : vector<8x128xf32>
    %c0_124 = arith.constant 0 : index
    %c384_125 = arith.constant 384 : index
    %175 = vector.load %arg12[%c0_124, %c384_125] : memref<8x512xf32, #tpu.memory_space<vmem>>, vector<8x128xf32>
    %cst_126 = arith.constant 5.000000e-01 : f32
    %176 = vector.broadcast %cst_126 : f32 to vector<8x128xf32>
    %177 = arith.mulf %176, %175 : vector<8x128xf32>
    %178 = math.tanh %177 : vector<8x128xf32>
    %cst_127 = arith.constant 5.000000e-01 : f32
    %179 = vector.broadcast %cst_127 : f32 to vector<8x128xf32>
    %180 = arith.mulf %179, %178 : vector<8x128xf32>
    %cst_128 = arith.constant 5.000000e-01 : f32
    %181 = vector.broadcast %cst_128 : f32 to vector<8x128xf32>
    %182 = arith.addf %180, %181 : vector<8x128xf32>
    %c0_129 = arith.constant 0 : index
    %c0_130 = arith.constant 0 : index
    %183 = vector.load %arg13[%c0_129, %c0_130] : memref<8x128xf32, #tpu.memory_space<vmem>>, vector<8x128xf32>
    %184 = arith.mulf %172, %183 : vector<8x128xf32>
    %185 = arith.mulf %164, %174 : vector<8x128xf32>
    %186 = arith.addf %184, %185 : vector<8x128xf32>
    %c0_131 = arith.constant 0 : index
    %c0_132 = arith.constant 0 : index
    %187 = vector.load %arg13[%c0_131, %c0_132] : memref<8x128xf32, #tpu.memory_space<vmem>>, vector<8x128xf32>
    tpu.vector_store %arg13[%c0_131, %c0_132], %186 {strides = array<i32>} : memref<8x128xf32, #tpu.memory_space<vmem>>, vector<8x128xf32>,
    %c0_133 = arith.constant 0 : index
    %c0_134 = arith.constant 0 : index
    %188 = vector.load %arg13[%c0_133, %c0_134] : memref<8x128xf32, #tpu.memory_space<vmem>>, vector<8x128xf32>
    %189 = math.tanh %188 : vector<8x128xf32>
    %190 = arith.mulf %182, %189 : vector<8x128xf32>
    %c24_135 = arith.constant 24 : index
    %c0_136 = arith.constant 0 : index
    %191 = vector.load %arg11[%c24_135, %c0_136] : memref<64x128xf32, #tpu.memory_space<vmem>>, vector<8x128xf32>
    tpu.vector_store %arg11[%c24_135, %c0_136], %190 {strides = array<i32>} : memref<64x128xf32, #tpu.memory_space<vmem>>, vector<8x128xf32>,
    %c24_137 = arith.constant 24 : index
    %c0_138 = arith.constant 0 : index
    %192 = vector.load %arg11[%c24_137, %c0_138] : memref<64x128xf32, #tpu.memory_space<vmem>>, vector<8x128xf32>
    %193 = arith.truncf %192 : vector<8x128xf32> to vector<8x128xbf16>
    %c0_139 = arith.constant 0 : index
    %c0_140 = arith.constant 0 : index
    %194 = vector.load %arg4[%c0_139, %c0_140] : memref<128x512xbf16, #tpu.memory_space<vmem>>, vector<128x512xbf16>
    %cst_141 = arith.constant dense<0.000000e+00> : vector<8x512xf32>
    %195 = tpu.matmul %193, %194, %cst_141 {dimension_numbers = #tpu.dot_dimension_numbers<[1], [0], [0], [1], [0, 0, 1, 1], [], []>} : vector<8x128xbf16>, vector<128x512xbf16>, vector<8x512xf32> -> vector<8x512xf32>
    %c32 = arith.constant 32 : index
    %c0_142 = arith.constant 0 : index
    %196 = vector.load %arg10[%c32, %c0_142] : memref<64x512xbf16, #tpu.memory_space<vmem>>, vector<8x512xbf16>
    %197 = arith.extf %196 : vector<8x512xbf16> to vector<8x512xf32>
    %198 = vector.broadcast %12 : vector<1x512xf32> to vector<8x512xf32>
    %199 = arith.addf %197, %198 : vector<8x512xf32>
    %200 = arith.addf %199, %195 : vector<8x512xf32>
    %c0_143 = arith.constant 0 : index
    %c0_144 = arith.constant 0 : index
    %201 = vector.load %arg12[%c0_143, %c0_144] : memref<8x512xf32, #tpu.memory_space<vmem>>, vector<8x512xf32>
    tpu.vector_store %arg12[%c0_143, %c0_144], %200 {strides = array<i32>} : memref<8x512xf32, #tpu.memory_space<vmem>>, vector<8x512xf32>,
    %c0_145 = arith.constant 0 : index
    %c0_146 = arith.constant 0 : index
    %202 = vector.load %arg12[%c0_145, %c0_146] : memref<8x512xf32, #tpu.memory_space<vmem>>, vector<8x128xf32>
    %cst_147 = arith.constant 5.000000e-01 : f32
    %203 = vector.broadcast %cst_147 : f32 to vector<8x128xf32>
    %204 = arith.mulf %203, %202 : vector<8x128xf32>
    %205 = math.tanh %204 : vector<8x128xf32>
    %cst_148 = arith.constant 5.000000e-01 : f32
    %206 = vector.broadcast %cst_148 : f32 to vector<8x128xf32>
    %207 = arith.mulf %206, %205 : vector<8x128xf32>
    %cst_149 = arith.constant 5.000000e-01 : f32
    %208 = vector.broadcast %cst_149 : f32 to vector<8x128xf32>
    %209 = arith.addf %207, %208 : vector<8x128xf32>
    %c0_150 = arith.constant 0 : index
    %c128_151 = arith.constant 128 : index
    %210 = vector.load %arg12[%c0_150, %c128_151] : memref<8x512xf32, #tpu.memory_space<vmem>>, vector<8x128xf32>
    %cst_152 = arith.constant 5.000000e-01 : f32
    %211 = vector.broadcast %cst_152 : f32 to vector<8x128xf32>
    %212 = arith.mulf %211, %210 : vector<8x128xf32>
    %213 = math.tanh %212 : vector<8x128xf32>
    %cst_153 = arith.constant 5.000000e-01 : f32
    %214 = vector.broadcast %cst_153 : f32 to vector<8x128xf32>
    %215 = arith.mulf %214, %213 : vector<8x128xf32>
    %cst_154 = arith.constant 5.000000e-01 : f32
    %216 = vector.broadcast %cst_154 : f32 to vector<8x128xf32>
    %217 = arith.addf %215, %216 : vector<8x128xf32>
    %c0_155 = arith.constant 0 : index
    %c256_156 = arith.constant 256 : index
    %218 = vector.load %arg12[%c0_155, %c256_156] : memref<8x512xf32, #tpu.memory_space<vmem>>, vector<8x128xf32>
    %219 = math.tanh %218 : vector<8x128xf32>
    %c0_157 = arith.constant 0 : index
    %c384_158 = arith.constant 384 : index
    %220 = vector.load %arg12[%c0_157, %c384_158] : memref<8x512xf32, #tpu.memory_space<vmem>>, vector<8x128xf32>
    %cst_159 = arith.constant 5.000000e-01 : f32
    %221 = vector.broadcast %cst_159 : f32 to vector<8x128xf32>
    %222 = arith.mulf %221, %220 : vector<8x128xf32>
    %223 = math.tanh %222 : vector<8x128xf32>
    %cst_160 = arith.constant 5.000000e-01 : f32
    %224 = vector.broadcast %cst_160 : f32 to vector<8x128xf32>
    %225 = arith.mulf %224, %223 : vector<8x128xf32>
    %cst_161 = arith.constant 5.000000e-01 : f32
    %226 = vector.broadcast %cst_161 : f32 to vector<8x128xf32>
    %227 = arith.addf %225, %226 : vector<8x128xf32>
    %c0_162 = arith.constant 0 : index
    %c0_163 = arith.constant 0 : index
    %228 = vector.load %arg13[%c0_162, %c0_163] : memref<8x128xf32, #tpu.memory_space<vmem>>, vector<8x128xf32>
    %229 = arith.mulf %217, %228 : vector<8x128xf32>
    %230 = arith.mulf %209, %219 : vector<8x128xf32>
    %231 = arith.addf %229, %230 : vector<8x128xf32>
    %c0_164 = arith.constant 0 : index
    %c0_165 = arith.constant 0 : index
    %232 = vector.load %arg13[%c0_164, %c0_165] : memref<8x128xf32, #tpu.memory_space<vmem>>, vector<8x128xf32>
    tpu.vector_store %arg13[%c0_164, %c0_165], %231 {strides = array<i32>} : memref<8x128xf32, #tpu.memory_space<vmem>>, vector<8x128xf32>,
    %c0_166 = arith.constant 0 : index
    %c0_167 = arith.constant 0 : index
    %233 = vector.load %arg13[%c0_166, %c0_167] : memref<8x128xf32, #tpu.memory_space<vmem>>, vector<8x128xf32>
    %234 = math.tanh %233 : vector<8x128xf32>
    %235 = arith.mulf %227, %234 : vector<8x128xf32>
    %c32_168 = arith.constant 32 : index
    %c0_169 = arith.constant 0 : index
    %236 = vector.load %arg11[%c32_168, %c0_169] : memref<64x128xf32, #tpu.memory_space<vmem>>, vector<8x128xf32>
    tpu.vector_store %arg11[%c32_168, %c0_169], %235 {strides = array<i32>} : memref<64x128xf32, #tpu.memory_space<vmem>>, vector<8x128xf32>,
    %c32_170 = arith.constant 32 : index
    %c0_171 = arith.constant 0 : index
    %237 = vector.load %arg11[%c32_170, %c0_171] : memref<64x128xf32, #tpu.memory_space<vmem>>, vector<8x128xf32>
    %238 = arith.truncf %237 : vector<8x128xf32> to vector<8x128xbf16>
    %c0_172 = arith.constant 0 : index
    %c0_173 = arith.constant 0 : index
    %239 = vector.load %arg4[%c0_172, %c0_173] : memref<128x512xbf16, #tpu.memory_space<vmem>>, vector<128x512xbf16>
    %cst_174 = arith.constant dense<0.000000e+00> : vector<8x512xf32>
    %240 = tpu.matmul %238, %239, %cst_174 {dimension_numbers = #tpu.dot_dimension_numbers<[1], [0], [0], [1], [0, 0, 1, 1], [], []>} : vector<8x128xbf16>, vector<128x512xbf16>, vector<8x512xf32> -> vector<8x512xf32>
    %c40 = arith.constant 40 : index
    %c0_175 = arith.constant 0 : index
    %241 = vector.load %arg10[%c40, %c0_175] : memref<64x512xbf16, #tpu.memory_space<vmem>>, vector<8x512xbf16>
    %242 = arith.extf %241 : vector<8x512xbf16> to vector<8x512xf32>
    %243 = vector.broadcast %12 : vector<1x512xf32> to vector<8x512xf32>
    %244 = arith.addf %242, %243 : vector<8x512xf32>
    %245 = arith.addf %244, %240 : vector<8x512xf32>
    %c0_176 = arith.constant 0 : index
    %c0_177 = arith.constant 0 : index
    %246 = vector.load %arg12[%c0_176, %c0_177] : memref<8x512xf32, #tpu.memory_space<vmem>>, vector<8x512xf32>
    tpu.vector_store %arg12[%c0_176, %c0_177], %245 {strides = array<i32>} : memref<8x512xf32, #tpu.memory_space<vmem>>, vector<8x512xf32>,
    %c0_178 = arith.constant 0 : index
    %c0_179 = arith.constant 0 : index
    %247 = vector.load %arg12[%c0_178, %c0_179] : memref<8x512xf32, #tpu.memory_space<vmem>>, vector<8x128xf32>
    %cst_180 = arith.constant 5.000000e-01 : f32
    %248 = vector.broadcast %cst_180 : f32 to vector<8x128xf32>
    %249 = arith.mulf %248, %247 : vector<8x128xf32>
    %250 = math.tanh %249 : vector<8x128xf32>
    %cst_181 = arith.constant 5.000000e-01 : f32
    %251 = vector.broadcast %cst_181 : f32 to vector<8x128xf32>
    %252 = arith.mulf %251, %250 : vector<8x128xf32>
    %cst_182 = arith.constant 5.000000e-01 : f32
    %253 = vector.broadcast %cst_182 : f32 to vector<8x128xf32>
    %254 = arith.addf %252, %253 : vector<8x128xf32>
    %c0_183 = arith.constant 0 : index
    %c128_184 = arith.constant 128 : index
    %255 = vector.load %arg12[%c0_183, %c128_184] : memref<8x512xf32, #tpu.memory_space<vmem>>, vector<8x128xf32>
    %cst_185 = arith.constant 5.000000e-01 : f32
    %256 = vector.broadcast %cst_185 : f32 to vector<8x128xf32>
    %257 = arith.mulf %256, %255 : vector<8x128xf32>
    %258 = math.tanh %257 : vector<8x128xf32>
    %cst_186 = arith.constant 5.000000e-01 : f32
    %259 = vector.broadcast %cst_186 : f32 to vector<8x128xf32>
    %260 = arith.mulf %259, %258 : vector<8x128xf32>
    %cst_187 = arith.constant 5.000000e-01 : f32
    %261 = vector.broadcast %cst_187 : f32 to vector<8x128xf32>
    %262 = arith.addf %260, %261 : vector<8x128xf32>
    %c0_188 = arith.constant 0 : index
    %c256_189 = arith.constant 256 : index
    %263 = vector.load %arg12[%c0_188, %c256_189] : memref<8x512xf32, #tpu.memory_space<vmem>>, vector<8x128xf32>
    %264 = math.tanh %263 : vector<8x128xf32>
    %c0_190 = arith.constant 0 : index
    %c384_191 = arith.constant 384 : index
    %265 = vector.load %arg12[%c0_190, %c384_191] : memref<8x512xf32, #tpu.memory_space<vmem>>, vector<8x128xf32>
    %cst_192 = arith.constant 5.000000e-01 : f32
    %266 = vector.broadcast %cst_192 : f32 to vector<8x128xf32>
    %267 = arith.mulf %266, %265 : vector<8x128xf32>
    %268 = math.tanh %267 : vector<8x128xf32>
    %cst_193 = arith.constant 5.000000e-01 : f32
    %269 = vector.broadcast %cst_193 : f32 to vector<8x128xf32>
    %270 = arith.mulf %269, %268 : vector<8x128xf32>
    %cst_194 = arith.constant 5.000000e-01 : f32
    %271 = vector.broadcast %cst_194 : f32 to vector<8x128xf32>
    %272 = arith.addf %270, %271 : vector<8x128xf32>
    %c0_195 = arith.constant 0 : index
    %c0_196 = arith.constant 0 : index
    %273 = vector.load %arg13[%c0_195, %c0_196] : memref<8x128xf32, #tpu.memory_space<vmem>>, vector<8x128xf32>
    %274 = arith.mulf %262, %273 : vector<8x128xf32>
    %275 = arith.mulf %254, %264 : vector<8x128xf32>
    %276 = arith.addf %274, %275 : vector<8x128xf32>
    %c0_197 = arith.constant 0 : index
    %c0_198 = arith.constant 0 : index
    %277 = vector.load %arg13[%c0_197, %c0_198] : memref<8x128xf32, #tpu.memory_space<vmem>>, vector<8x128xf32>
    tpu.vector_store %arg13[%c0_197, %c0_198], %276 {strides = array<i32>} : memref<8x128xf32, #tpu.memory_space<vmem>>, vector<8x128xf32>,
    %c0_199 = arith.constant 0 : index
    %c0_200 = arith.constant 0 : index
    %278 = vector.load %arg13[%c0_199, %c0_200] : memref<8x128xf32, #tpu.memory_space<vmem>>, vector<8x128xf32>
    %279 = math.tanh %278 : vector<8x128xf32>
    %280 = arith.mulf %272, %279 : vector<8x128xf32>
    %c40_201 = arith.constant 40 : index
    %c0_202 = arith.constant 0 : index
    %281 = vector.load %arg11[%c40_201, %c0_202] : memref<64x128xf32, #tpu.memory_space<vmem>>, vector<8x128xf32>
    tpu.vector_store %arg11[%c40_201, %c0_202], %280 {strides = array<i32>} : memref<64x128xf32, #tpu.memory_space<vmem>>, vector<8x128xf32>,
    %c40_203 = arith.constant 40 : index
    %c0_204 = arith.constant 0 : index
    %282 = vector.load %arg11[%c40_203, %c0_204] : memref<64x128xf32, #tpu.memory_space<vmem>>, vector<8x128xf32>
    %283 = arith.truncf %282 : vector<8x128xf32> to vector<8x128xbf16>
    %c0_205 = arith.constant 0 : index
    %c0_206 = arith.constant 0 : index
    %284 = vector.load %arg4[%c0_205, %c0_206] : memref<128x512xbf16, #tpu.memory_space<vmem>>, vector<128x512xbf16>
    %cst_207 = arith.constant dense<0.000000e+00> : vector<8x512xf32>
    %285 = tpu.matmul %283, %284, %cst_207 {dimension_numbers = #tpu.dot_dimension_numbers<[1], [0], [0], [1], [0, 0, 1, 1], [], []>} : vector<8x128xbf16>, vector<128x512xbf16>, vector<8x512xf32> -> vector<8x512xf32>
    %c48 = arith.constant 48 : index
    %c0_208 = arith.constant 0 : index
    %286 = vector.load %arg10[%c48, %c0_208] : memref<64x512xbf16, #tpu.memory_space<vmem>>, vector<8x512xbf16>
    %287 = arith.extf %286 : vector<8x512xbf16> to vector<8x512xf32>
    %288 = vector.broadcast %12 : vector<1x512xf32> to vector<8x512xf32>
    %289 = arith.addf %287, %288 : vector<8x512xf32>
    %290 = arith.addf %289, %285 : vector<8x512xf32>
    %c0_209 = arith.constant 0 : index
    %c0_210 = arith.constant 0 : index
    %291 = vector.load %arg12[%c0_209, %c0_210] : memref<8x512xf32, #tpu.memory_space<vmem>>, vector<8x512xf32>
    tpu.vector_store %arg12[%c0_209, %c0_210], %290 {strides = array<i32>} : memref<8x512xf32, #tpu.memory_space<vmem>>, vector<8x512xf32>,
    %c0_211 = arith.constant 0 : index
    %c0_212 = arith.constant 0 : index
    %292 = vector.load %arg12[%c0_211, %c0_212] : memref<8x512xf32, #tpu.memory_space<vmem>>, vector<8x128xf32>
    %cst_213 = arith.constant 5.000000e-01 : f32
    %293 = vector.broadcast %cst_213 : f32 to vector<8x128xf32>
    %294 = arith.mulf %293, %292 : vector<8x128xf32>
    %295 = math.tanh %294 : vector<8x128xf32>
    %cst_214 = arith.constant 5.000000e-01 : f32
    %296 = vector.broadcast %cst_214 : f32 to vector<8x128xf32>
    %297 = arith.mulf %296, %295 : vector<8x128xf32>
    %cst_215 = arith.constant 5.000000e-01 : f32
    %298 = vector.broadcast %cst_215 : f32 to vector<8x128xf32>
    %299 = arith.addf %297, %298 : vector<8x128xf32>
    %c0_216 = arith.constant 0 : index
    %c128_217 = arith.constant 128 : index
    %300 = vector.load %arg12[%c0_216, %c128_217] : memref<8x512xf32, #tpu.memory_space<vmem>>, vector<8x128xf32>
    %cst_218 = arith.constant 5.000000e-01 : f32
    %301 = vector.broadcast %cst_218 : f32 to vector<8x128xf32>
    %302 = arith.mulf %301, %300 : vector<8x128xf32>
    %303 = math.tanh %302 : vector<8x128xf32>
    %cst_219 = arith.constant 5.000000e-01 : f32
    %304 = vector.broadcast %cst_219 : f32 to vector<8x128xf32>
    %305 = arith.mulf %304, %303 : vector<8x128xf32>
    %cst_220 = arith.constant 5.000000e-01 : f32
    %306 = vector.broadcast %cst_220 : f32 to vector<8x128xf32>
    %307 = arith.addf %305, %306 : vector<8x128xf32>
    %c0_221 = arith.constant 0 : index
    %c256_222 = arith.constant 256 : index
    %308 = vector.load %arg12[%c0_221, %c256_222] : memref<8x512xf32, #tpu.memory_space<vmem>>, vector<8x128xf32>
    %309 = math.tanh %308 : vector<8x128xf32>
    %c0_223 = arith.constant 0 : index
    %c384_224 = arith.constant 384 : index
    %310 = vector.load %arg12[%c0_223, %c384_224] : memref<8x512xf32, #tpu.memory_space<vmem>>, vector<8x128xf32>
    %cst_225 = arith.constant 5.000000e-01 : f32
    %311 = vector.broadcast %cst_225 : f32 to vector<8x128xf32>
    %312 = arith.mulf %311, %310 : vector<8x128xf32>
    %313 = math.tanh %312 : vector<8x128xf32>
    %cst_226 = arith.constant 5.000000e-01 : f32
    %314 = vector.broadcast %cst_226 : f32 to vector<8x128xf32>
    %315 = arith.mulf %314, %313 : vector<8x128xf32>
    %cst_227 = arith.constant 5.000000e-01 : f32
    %316 = vector.broadcast %cst_227 : f32 to vector<8x128xf32>
    %317 = arith.addf %315, %316 : vector<8x128xf32>
    %c0_228 = arith.constant 0 : index
    %c0_229 = arith.constant 0 : index
    %318 = vector.load %arg13[%c0_228, %c0_229] : memref<8x128xf32, #tpu.memory_space<vmem>>, vector<8x128xf32>
    %319 = arith.mulf %307, %318 : vector<8x128xf32>
    %320 = arith.mulf %299, %309 : vector<8x128xf32>
    %321 = arith.addf %319, %320 : vector<8x128xf32>
    %c0_230 = arith.constant 0 : index
    %c0_231 = arith.constant 0 : index
    %322 = vector.load %arg13[%c0_230, %c0_231] : memref<8x128xf32, #tpu.memory_space<vmem>>, vector<8x128xf32>
    tpu.vector_store %arg13[%c0_230, %c0_231], %321 {strides = array<i32>} : memref<8x128xf32, #tpu.memory_space<vmem>>, vector<8x128xf32>,
    %c0_232 = arith.constant 0 : index
    %c0_233 = arith.constant 0 : index
    %323 = vector.load %arg13[%c0_232, %c0_233] : memref<8x128xf32, #tpu.memory_space<vmem>>, vector<8x128xf32>
    %324 = math.tanh %323 : vector<8x128xf32>
    %325 = arith.mulf %317, %324 : vector<8x128xf32>
    %c48_234 = arith.constant 48 : index
    %c0_235 = arith.constant 0 : index
    %326 = vector.load %arg11[%c48_234, %c0_235] : memref<64x128xf32, #tpu.memory_space<vmem>>, vector<8x128xf32>
    tpu.vector_store %arg11[%c48_234, %c0_235], %325 {strides = array<i32>} : memref<64x128xf32, #tpu.memory_space<vmem>>, vector<8x128xf32>,
    %c48_236 = arith.constant 48 : index
    %c0_237 = arith.constant 0 : index
    %327 = vector.load %arg11[%c48_236, %c0_237] : memref<64x128xf32, #tpu.memory_space<vmem>>, vector<8x128xf32>
    %328 = arith.truncf %327 : vector<8x128xf32> to vector<8x128xbf16>
    %c0_238 = arith.constant 0 : index
    %c0_239 = arith.constant 0 : index
    %329 = vector.load %arg4[%c0_238, %c0_239] : memref<128x512xbf16, #tpu.memory_space<vmem>>, vector<128x512xbf16>
    %cst_240 = arith.constant dense<0.000000e+00> : vector<8x512xf32>
    %330 = tpu.matmul %328, %329, %cst_240 {dimension_numbers = #tpu.dot_dimension_numbers<[1], [0], [0], [1], [0, 0, 1, 1], [], []>} : vector<8x128xbf16>, vector<128x512xbf16>, vector<8x512xf32> -> vector<8x512xf32>
    %c56 = arith.constant 56 : index
    %c0_241 = arith.constant 0 : index
    %331 = vector.load %arg10[%c56, %c0_241] : memref<64x512xbf16, #tpu.memory_space<vmem>>, vector<8x512xbf16>
    %332 = arith.extf %331 : vector<8x512xbf16> to vector<8x512xf32>
    %333 = vector.broadcast %12 : vector<1x512xf32> to vector<8x512xf32>
    %334 = arith.addf %332, %333 : vector<8x512xf32>
    %335 = arith.addf %334, %330 : vector<8x512xf32>
    %c0_242 = arith.constant 0 : index
    %c0_243 = arith.constant 0 : index
    %336 = vector.load %arg12[%c0_242, %c0_243] : memref<8x512xf32, #tpu.memory_space<vmem>>, vector<8x512xf32>
    tpu.vector_store %arg12[%c0_242, %c0_243], %335 {strides = array<i32>} : memref<8x512xf32, #tpu.memory_space<vmem>>, vector<8x512xf32>,
    %c0_244 = arith.constant 0 : index
    %c0_245 = arith.constant 0 : index
    %337 = vector.load %arg12[%c0_244, %c0_245] : memref<8x512xf32, #tpu.memory_space<vmem>>, vector<8x128xf32>
    %cst_246 = arith.constant 5.000000e-01 : f32
    %338 = vector.broadcast %cst_246 : f32 to vector<8x128xf32>
    %339 = arith.mulf %338, %337 : vector<8x128xf32>
    %340 = math.tanh %339 : vector<8x128xf32>
    %cst_247 = arith.constant 5.000000e-01 : f32
    %341 = vector.broadcast %cst_247 : f32 to vector<8x128xf32>
    %342 = arith.mulf %341, %340 : vector<8x128xf32>
    %cst_248 = arith.constant 5.000000e-01 : f32
    %343 = vector.broadcast %cst_248 : f32 to vector<8x128xf32>
    %344 = arith.addf %342, %343 : vector<8x128xf32>
    %c0_249 = arith.constant 0 : index
    %c128_250 = arith.constant 128 : index
    %345 = vector.load %arg12[%c0_249, %c128_250] : memref<8x512xf32, #tpu.memory_space<vmem>>, vector<8x128xf32>
    %cst_251 = arith.constant 5.000000e-01 : f32
    %346 = vector.broadcast %cst_251 : f32 to vector<8x128xf32>
    %347 = arith.mulf %346, %345 : vector<8x128xf32>
    %348 = math.tanh %347 : vector<8x128xf32>
    %cst_252 = arith.constant 5.000000e-01 : f32
    %349 = vector.broadcast %cst_252 : f32 to vector<8x128xf32>
    %350 = arith.mulf %349, %348 : vector<8x128xf32>
    %cst_253 = arith.constant 5.000000e-01 : f32
    %351 = vector.broadcast %cst_253 : f32 to vector<8x128xf32>
    %352 = arith.addf %350, %351 : vector<8x128xf32>
    %c0_254 = arith.constant 0 : index
    %c256_255 = arith.constant 256 : index
    %353 = vector.load %arg12[%c0_254, %c256_255] : memref<8x512xf32, #tpu.memory_space<vmem>>, vector<8x128xf32>
    %354 = math.tanh %353 : vector<8x128xf32>
    %c0_256 = arith.constant 0 : index
    %c384_257 = arith.constant 384 : index
    %355 = vector.load %arg12[%c0_256, %c384_257] : memref<8x512xf32, #tpu.memory_space<vmem>>, vector<8x128xf32>
    %cst_258 = arith.constant 5.000000e-01 : f32
    %356 = vector.broadcast %cst_258 : f32 to vector<8x128xf32>
    %357 = arith.mulf %356, %355 : vector<8x128xf32>
    %358 = math.tanh %357 : vector<8x128xf32>
    %cst_259 = arith.constant 5.000000e-01 : f32
    %359 = vector.broadcast %cst_259 : f32 to vector<8x128xf32>
    %360 = arith.mulf %359, %358 : vector<8x128xf32>
    %cst_260 = arith.constant 5.000000e-01 : f32
    %361 = vector.broadcast %cst_260 : f32 to vector<8x128xf32>
    %362 = arith.addf %360, %361 : vector<8x128xf32>
    %c0_261 = arith.constant 0 : index
    %c0_262 = arith.constant 0 : index
    %363 = vector.load %arg13[%c0_261, %c0_262] : memref<8x128xf32, #tpu.memory_space<vmem>>, vector<8x128xf32>
    %364 = arith.mulf %352, %363 : vector<8x128xf32>
    %365 = arith.mulf %344, %354 : vector<8x128xf32>
    %366 = arith.addf %364, %365 : vector<8x128xf32>
    %c0_263 = arith.constant 0 : index
    %c0_264 = arith.constant 0 : index
    %367 = vector.load %arg13[%c0_263, %c0_264] : memref<8x128xf32, #tpu.memory_space<vmem>>, vector<8x128xf32>
    tpu.vector_store %arg13[%c0_263, %c0_264], %366 {strides = array<i32>} : memref<8x128xf32, #tpu.memory_space<vmem>>, vector<8x128xf32>,
    %c0_265 = arith.constant 0 : index
    %c0_266 = arith.constant 0 : index
    %368 = vector.load %arg13[%c0_265, %c0_266] : memref<8x128xf32, #tpu.memory_space<vmem>>, vector<8x128xf32>
    %369 = math.tanh %368 : vector<8x128xf32>
    %370 = arith.mulf %362, %369 : vector<8x128xf32>
    %c56_267 = arith.constant 56 : index
    %c0_268 = arith.constant 0 : index
    %371 = vector.load %arg11[%c56_267, %c0_268] : memref<64x128xf32, #tpu.memory_space<vmem>>, vector<8x128xf32>
    tpu.vector_store %arg11[%c56_267, %c0_268], %370 {strides = array<i32>} : memref<64x128xf32, #tpu.memory_space<vmem>>, vector<8x128xf32>,
    %372 = tpu.iota {dimensions = array<i32: 0>} : vector<8x8x1xi32>
    %c0_269 = arith.constant 0 : index
    %c0_270 = arith.constant 0 : index
    %c0_271 = arith.constant 0 : index
    %373 = vector.load %arg1[%c0_269, %c0_270, %c0_271] : memref<1x8x1xi32, #tpu.memory_space<vmem>>, vector<1x8x1xi32>
    %374 = vector.broadcast %373 : vector<1x8x1xi32> to vector<8x8x1xi32>
    %375 = arith.cmpi slt, %372, %374 : vector<8x8x1xi32>
    %376 = arith.extui %375 : vector<8x8x1xi1> to vector<8x8x1xi32>
    %377 = arith.sitofp %376 : vector<8x8x1xi32> to vector<8x8x1xf32>
    %378 = vector.shape_cast %377 : vector<8x8x1xf32> to vector<64x1xf32>
    %c0_272 = arith.constant 0 : index
    %c0_273 = arith.constant 0 : index
    %379 = vector.load %arg11[%c0_272, %c0_273] : memref<64x128xf32, #tpu.memory_space<vmem>>, vector<64x128xf32>
    %380 = vector.broadcast %378 : vector<64x1xf32> to vector<64x128xf32>
    %381 = arith.mulf %379, %380 : vector<64x128xf32>
    %c0_274 = arith.constant 0 : index
    %c0_275 = arith.constant 0 : index
    %382 = vector.load %arg6[%c0_274, %c0_275] : memref<1x128xf32, #tpu.memory_space<vmem>>, vector<1x128xf32>
    %383 = vector.broadcast %382 : vector<1x128xf32> to vector<64x128xf32>
    %384 = arith.mulf %381, %383 : vector<64x128xf32>
    %cst_276 = arith.constant dense<0.000000e+00> : vector<64xf32>
    %385 = vector.multi_reduction <add>, %384, %cst_276 [1] : vector<64x128xf32> to vector<64xf32>
    %386 = vector.shape_cast %385 : vector<64xf32> to vector<64x1xf32>
    %387 = math.tanh %386 : vector<64x1xf32>
    %388 = vector.shape_cast %387 : vector<64x1xf32> to vector<8x8x1xf32>
    %cst_277 = arith.constant dense<0xFF800000> : vector<8x1xf32>
    %389 = vector.multi_reduction <maximumf>, %388, %cst_277 [0] : vector<8x8x1xf32> to vector<8x1xf32>
    %390 = vector.shape_cast %389 : vector<8x1xf32> to vector<1x8x1xf32>
    %391 = vector.broadcast %390 : vector<1x8x1xf32> to vector<8x8x1xf32>
    %392 = arith.subf %388, %391 : vector<8x8x1xf32>
    %393 = math.exp %392 : vector<8x8x1xf32>
    %cst_278 = arith.constant dense<0.000000e+00> : vector<8x1xf32>
    %394 = vector.multi_reduction <add>, %393, %cst_278 [0] : vector<8x8x1xf32> to vector<8x1xf32>
    %395 = vector.shape_cast %394 : vector<8x1xf32> to vector<1x8x1xf32>
    %396 = vector.broadcast %395 : vector<1x8x1xf32> to vector<8x8x1xf32>
    %397 = arith.divf %393, %396 : vector<8x8x1xf32>
    %398 = arith.mulf %397, %377 : vector<8x8x1xf32>
    %cst_279 = arith.constant dense<0.000000e+00> : vector<8x1xf32>
    %399 = vector.multi_reduction <add>, %398, %cst_279 [0] : vector<8x8x1xf32> to vector<8x1xf32>
    %400 = vector.shape_cast %399 : vector<8x1xf32> to vector<1x8x1xf32>
    %cst_280 = arith.constant 9.99999971E-10 : f32
    %401 = vector.broadcast %cst_280 : f32 to vector<1x8x1xf32>
    %402 = arith.maximumf %400, %401 : vector<1x8x1xf32>
    %403 = vector.broadcast %402 : vector<1x8x1xf32> to vector<8x8x1xf32>
    %404 = arith.divf %398, %403 : vector<8x8x1xf32>
    %405 = vector.shape_cast %381 : vector<64x128xf32> to vector<8x8x128xf32>
    %406 = vector.broadcast %404 : vector<8x8x1xf32> to vector<8x8x128xf32>
    %407 = arith.mulf %405, %406 : vector<8x8x128xf32>
    %cst_281 = arith.constant dense<0.000000e+00> : vector<8x128xf32>
    %408 = vector.multi_reduction <add>, %407, %cst_281 [0] : vector<8x8x128xf32> to vector<8x128xf32>
    %409 = arith.truncf %408 : vector<8x128xf32> to vector<8x128xbf16>
    %c0_282 = arith.constant 0 : index
    %c0_283 = arith.constant 0 : index
    %410 = vector.load %arg7[%c0_282, %c0_283] : memref<128x128xbf16, #tpu.memory_space<vmem>>, vector<128x128xbf16>
    %cst_284 = arith.constant dense<0.000000e+00> : vector<8x128xf32>
    %411 = tpu.matmul %409, %410, %cst_284 {dimension_numbers = #tpu.dot_dimension_numbers<[1], [0], [0], [1], [0, 0, 1, 1], [], []>} : vector<8x128xbf16>, vector<128x128xbf16>, vector<8x128xf32> -> vector<8x128xf32>
    %c0_285 = arith.constant 0 : index
    %c0_286 = arith.constant 0 : index
    %412 = vector.load %arg8[%c0_285, %c0_286] : memref<1x128xf32, #tpu.memory_space<vmem>>, vector<1x128xf32>
    %413 = vector.broadcast %412 : vector<1x128xf32> to vector<8x128xf32>
    %414 = arith.addf %411, %413 : vector<8x128xf32>
    %c0_287 = arith.constant 0 : index
    %c0_288 = arith.constant 0 : index
    %415 = vector.load %arg9[%c0_287, %c0_288] : memref<8x128xf32, #tpu.memory_space<vmem>>, vector<8x128xf32>
    tpu.vector_store %arg9[%c0_287, %c0_288], %414 {strides = array<i32>} : memref<8x128xf32, #tpu.memory_space<vmem>>, vector<8x128xf32>,
    return
  }
  func.func @transform_0(%arg0: i32) -> (i32, i32, i32) {
    %c0_i32 = arith.constant 0 : i32
    %c0_i32_0 = arith.constant 0 : i32
    %c0_i32_1 = arith.constant 0 : i32
    return %c0_i32, %arg0, %c0_i32_0 : i32, i32, i32
  }
  func.func @transform_1(%arg0: i32) -> (i32, i32, i32) {
    %c0_i32 = arith.constant 0 : i32
    %c0_i32_0 = arith.constant 0 : i32
    %c0_i32_1 = arith.constant 0 : i32
    return %c0_i32, %arg0, %c0_i32_0 : i32, i32, i32
  }
  func.func @transform_2(%arg0: i32) -> (i32, i32) {
    %c0_i32 = arith.constant 0 : i32
    %c0_i32_0 = arith.constant 0 : i32
    %c0_i32_1 = arith.constant 0 : i32
    return %c0_i32, %c0_i32_0 : i32, i32
  }
  func.func @transform_3(%arg0: i32) -> (i32, i32) {
    %c0_i32 = arith.constant 0 : i32
    %c0_i32_0 = arith.constant 0 : i32
    %c0_i32_1 = arith.constant 0 : i32
    return %c0_i32, %c0_i32_0 : i32, i32
  }
  func.func @transform_4(%arg0: i32) -> (i32, i32) {
    %c0_i32 = arith.constant 0 : i32
    %c0_i32_0 = arith.constant 0 : i32
    %c0_i32_1 = arith.constant 0 : i32
    return %c0_i32, %c0_i32_0 : i32, i32
  }
  func.func @transform_5(%arg0: i32) -> (i32, i32) {
    %c0_i32 = arith.constant 0 : i32
    %c0_i32_0 = arith.constant 0 : i32
    %c0_i32_1 = arith.constant 0 : i32
    return %c0_i32, %c0_i32_0 : i32, i32
  }
  func.func @transform_6(%arg0: i32) -> (i32, i32) {
    %c0_i32 = arith.constant 0 : i32
    %c0_i32_0 = arith.constant 0 : i32
    %c0_i32_1 = arith.constant 0 : i32
    return %c0_i32, %c0_i32_0 : i32, i32
  }
  func.func @transform_7(%arg0: i32) -> (i32, i32) {
    %c0_i32 = arith.constant 0 : i32
    %c0_i32_0 = arith.constant 0 : i32
    %c0_i32_1 = arith.constant 0 : i32
    return %c0_i32, %c0_i32_0 : i32, i32
  }
  func.func @transform_8(%arg0: i32) -> (i32, i32) {
    %c0_i32 = arith.constant 0 : i32
    %c0_i32_0 = arith.constant 0 : i32
    return %arg0, %c0_i32 : i32, i32
  }
}

</mosaic_0001>

<llo_original>
// kernel: self_attention_forward.1
$region0: #{self_attention_forward.1}
  #allocation0 [shape = 'u32[]', space=smem, size = 0x4, offset = 0x4, fixed_abs, tag = 'smem constant byte address 0x4 - core index']
  #allocation1 [shape = 'u32[72,128]{1,0:T(1,128)}', space=vmem, size = 0x9000, scoped, tag = 'internal scratch']
  #allocation2 [shape = 'bf16[64,512]{1,0:T(8,128)(2,1)}', space=vmem, size = 0x10000, scoped, tag = 'scratch operand']
  #allocation3 [shape = 'f32[64,128]{1,0:T(8,128)}', space=vmem, size = 0x8000, scoped, tag = 'scratch operand']
  #allocation4 [shape = 'f32[8,512]{1,0:T(8,128)}', space=vmem, size = 0x4000, scoped, tag = 'scratch operand']
  #allocation5 [shape = 'f32[8,128]{1,0:T(8,128)}', space=vmem, size = 0x1000, scoped, tag = 'scratch operand']
  %s0 = inlined_call_operand.vmem [shape: s32[1,8,1], index: 0, kind: input, shape index: {}]
  %s1 = inlined_call_operand.vmem [shape: s32[8,8,1], index: 1, kind: input, shape index: {}]
  %s2 = inlined_call_operand.vmem [shape: bf16[128,512], index: 2, kind: input, shape index: {}]
  %s3 = inlined_call_operand.vmem [shape: bf16[128,512], index: 3, kind: input, shape index: {}]
  %s4 = inlined_call_operand.vmem [shape: f32[1,512], index: 4, kind: input, shape index: {}]
  %s5 = inlined_call_operand.vmem [shape: f32[1,128], index: 5, kind: input, shape index: {}]
  %s6 = inlined_call_operand.vmem [shape: bf16[128,128], index: 6, kind: input, shape index: {}]
  %s7 = inlined_call_operand.vmem [shape: f32[1,128], index: 7, kind: input, shape index: {}]
  %s8 = inlined_call_operand.vmem [shape: f32[8,128], index: 8, kind: output, shape index: {}]
  %s9 = sld [smem:[#allocation0]]
  $region42: #{self_attention_forward.1} parent=0
    _
  %s11 = ssub.s32 1, %s9
  %s12 = scalar_select 0, %s11, %s9
  // Predicated region
  $region2: #{self_attention_forward.1} parent=0 // pred_check
    _
  $region3: #{self_attention_forward.1} parent=0 // pred_check_branch
    %14 = sbr.rel (0) target = $region5
  $region4: #{self_attention_forward.1} parent=0 // pred_region
    _
  $region5: #{self_attention_forward.1} parent=0 // pred_fallthru
    _
  // Predicated region
  $region6: #{self_attention_forward.1} parent=0 // pred_check
    _
  $region7: #{self_attention_forward.1} parent=0 // pred_check_branch
    %16 = sbr.rel (0) target = $region9
  $region8: #{self_attention_forward.1} parent=0 // pred_region
    _
  $region9: #{self_attention_forward.1} parent=0 // pred_fallthru
    _
  // Predicated region
  $region10: #{self_attention_forward.1} parent=0 // pred_check
    _
  $region11: #{self_attention_forward.1} parent=0 // pred_check_branch
    %18 = sbr.rel (0) target = $region13
  $region12: #{self_attention_forward.1} parent=0 // pred_region
    _
  $region13: #{self_attention_forward.1} parent=0 // pred_fallthru
    _
  // Predicated region
  $region14: #{self_attention_forward.1} parent=0 // pred_check
    _
  $region15: #{self_attention_forward.1} parent=0 // pred_check_branch
    %20 = sbr.rel (0) target = $region17
  $region16: #{self_attention_forward.1} parent=0 // pred_region
    _
  $region17: #{self_attention_forward.1} parent=0 // pred_fallthru
    _
  // Predicated region
  $region18: #{self_attention_forward.1} parent=0 // pred_check
    _
  $region19: #{self_attention_forward.1} parent=0 // pred_check_branch
    %22 = sbr.rel (0) target = $region21
  $region20: #{self_attention_forward.1} parent=0 // pred_region
    _
  $region21: #{self_attention_forward.1} parent=0 // pred_fallthru
    _
  // Predicated region
  $region22: #{self_attention_forward.1} parent=0 // pred_check
    _
  $region23: #{self_attention_forward.1} parent=0 // pred_check_branch
    %24 = sbr.rel (0) target = $region25
  $region24: #{self_attention_forward.1} parent=0 // pred_region
    _
  $region25: #{self_attention_forward.1} parent=0 // pred_fallthru
    _
  // Predicated region
  $region26: #{self_attention_forward.1} parent=0 // pred_check
    _
  $region27: #{self_attention_forward.1} parent=0 // pred_check_branch
    %26 = sbr.rel (0) target = $region29
  $region28: #{self_attention_forward.1} parent=0 // pred_region
    _
  $region29: #{self_attention_forward.1} parent=0 // pred_fallthru
    _
  // Predicated region
  $region30: #{self_attention_forward.1} parent=0 // pred_check
    _
  $region31: #{self_attention_forward.1} parent=0 // pred_check_branch
    %28 = sbr.rel (0) target = $region33
  $region32: #{self_attention_forward.1} parent=0 // pred_region
    _
  $region33: #{self_attention_forward.1} parent=0 // pred_fallthru
    _
  %v29 = vld [vmem:[%s1] sm:$0xff]
  %v30 = vld [vmem:[%s1 + $0x8] sm:$0xff]
  %v31 = vld [vmem:[%s1 + $0x10] sm:$0xff]
  %v32 = vld [vmem:[%s1 + $0x18] sm:$0xff]
  %v33 = vld [vmem:[%s1 + $0x20] sm:$0xff]
  %v34 = vld [vmem:[%s1 + $0x28] sm:$0xff]
  %v35 = vld [vmem:[%s1 + $0x30] sm:$0xff]
  %v36 = vld [vmem:[%s1 + $0x38] sm:$0xff]
  %v37 = vlaneseq
  %v38 = vand.u32 %v37, 127
  %39 = vset.pattern.permute.xlu0 0
  %40 = vperm.xlu0 %39, %v29
  %v41 = vpop.permute.xlu0 %40
  %42 = vset.pattern.permute.xlu0 0
  %43 = vperm.xlu0 %42, %v30
  %v44 = vpop.permute.xlu0 %43
  %45 = vset.pattern.permute.xlu0 0
  %46 = vperm.xlu0 %45, %v31
  %v47 = vpop.permute.xlu0 %46
  %48 = vset.pattern.permute.xlu0 0
  %49 = vperm.xlu0 %48, %v32
  %v50 = vpop.permute.xlu0 %49
  %51 = vset.pattern.permute.xlu0 0
  %52 = vperm.xlu0 %51, %v33
  %v53 = vpop.permute.xlu0 %52
  %54 = vset.pattern.permute.xlu0 0
  %55 = vperm.xlu0 %54, %v34
  %v56 = vpop.permute.xlu0 %55
  %57 = vset.pattern.permute.xlu0 0
  %58 = vperm.xlu0 %57, %v35
  %v59 = vpop.permute.xlu0 %58
  %60 = vset.pattern.permute.xlu0 0
  %61 = vperm.xlu0 %60, %v36
  %v62 = vpop.permute.xlu0 %61
  %vm63 = vcmp.eq.s32.totalorder %v41, %v38
  %vm64 = vcmp.eq.s32.totalorder %v44, %v38
  %vm65 = vcmp.eq.s32.totalorder %v47, %v38
  %vm66 = vcmp.eq.s32.totalorder %v50, %v38
  %vm67 = vcmp.eq.s32.totalorder %v53, %v38
  %vm68 = vcmp.eq.s32.totalorder %v56, %v38
  %vm69 = vcmp.eq.s32.totalorder %v59, %v38
  %vm70 = vcmp.eq.s32.totalorder %v62, %v38
  %v71 = vsel %vm63, 1, 0
  %v72 = vsel %vm64, 1, 0
  %v73 = vsel %vm65, 1, 0
  %v74 = vsel %vm66, 1, 0
  %v75 = vsel %vm67, 1, 0
  %v76 = vsel %vm68, 1, 0
  %v77 = vsel %vm69, 1, 0
  %v78 = vsel %vm70, 1, 0
  %v79 = vcvt.s32.f32 %v71
  %v80 = vcvt.s32.f32 %v72
  %v81 = vcvt.s32.f32 %v73
  %v82 = vcvt.s32.f32 %v74
  %v83 = vcvt.s32.f32 %v75
  %v84 = vcvt.s32.f32 %v76
  %v85 = vcvt.s32.f32 %v77
  %v86 = vcvt.s32.f32 %v78
  %v87 = vpack.c.bf16 %v80, %v79
  %v88 = vpack.c.bf16 %v82, %v81
  %v89 = vpack.c.bf16 %v84, %v83
  %v90 = vpack.c.bf16 %v86, %v85
  %v91 = vld [vmem:[%s2] sm:$0xff]
  %v92 = vld [vmem:[%s2 + $0x8] sm:$0xff]
  %v93 = vld [vmem:[%s2 + $0x10] sm:$0xff]
  %v94 = vld [vmem:[%s2 + $0x18] sm:$0xff]
  %v95 = vld [vmem:[%s2 + $0x20] sm:$0xff]
  %v96 = vld [vmem:[%s2 + $0x28] sm:$0xff]
  %v97 = vld [vmem:[%s2 + $0x30] sm:$0xff]
  %v98 = vld [vmem:[%s2 + $0x38] sm:$0xff]
  %v99 = vld [vmem:[%s2 + $0x40] sm:$0xff]
  %v100 = vld [vmem:[%s2 + $0x48] sm:$0xff]
  %v101 = vld [vmem:[%s2 + $0x50] sm:$0xff]
  %v102 = vld [vmem:[%s2 + $0x58] sm:$0xff]
  %v103 = vld [vmem:[%s2 + $0x60] sm:$0xff]
  %v104 = vld [vmem:[%s2 + $0x68] sm:$0xff]
  %v105 = vld [vmem:[%s2 + $0x70] sm:$0xff]
  %v106 = vld [vmem:[%s2 + $0x78] sm:$0xff]
  %v107 = vld [vmem:[%s2 + $0x80] sm:$0xff]
  %v108 = vld [vmem:[%s2 + $0x88] sm:$0xff]
  %v109 = vld [vmem:[%s2 + $0x90] sm:$0xff]
  %v110 = vld [vmem:[%s2 + $0x98] sm:$0xff]
  %v111 = vld [vmem:[%s2 + $0xa0] sm:$0xff]
  %v112 = vld [vmem:[%s2 + $0xa8] sm:$0xff]
  %v113 = vld [vmem:[%s2 + $0xb0] sm:$0xff]
  %v114 = vld [vmem:[%s2 + $0xb8] sm:$0xff]
  %v115 = vld [vmem:[%s2 + $0xc0] sm:$0xff]
  %v116 = vld [vmem:[%s2 + $0xc8] sm:$0xff]
  %v117 = vld [vmem:[%s2 + $0xd0] sm:$0xff]
  %v118 = vld [vmem:[%s2 + $0xd8] sm:$0xff]
  %v119 = vld [vmem:[%s2 + $0xe0] sm:$0xff]
  %v120 = vld [vmem:[%s2 + $0xe8] sm:$0xff]
  %v121 = vld [vmem:[%s2 + $0xf0] sm:$0xff]
  %v122 = vld [vmem:[%s2 + $0xf8] sm:$0xff]
  %v155 = vunpack.c.l.b16 %v91
  %v156 = vunpack.c.h.b16 %v91
  %v157 = vunpack.c.l.b16 %v92
  %v158 = vunpack.c.h.b16 %v92
  %v159 = vunpack.c.l.b16 %v93
  %v160 = vunpack.c.h.b16 %v93
  %v161 = vunpack.c.l.b16 %v94
  %v162 = vunpack.c.h.b16 %v94
  %v163 = vunpack.c.l.b16 %v95
  %v164 = vunpack.c.h.b16 %v95
  %v165 = vunpack.c.l.b16 %v96
  %v166 = vunpack.c.h.b16 %v96
  %v167 = vunpack.c.l.b16 %v97
  %v168 = vunpack.c.h.b16 %v97
  %v169 = vunpack.c.l.b16 %v98
  %v170 = vunpack.c.h.b16 %v98
  %v171 = vunpack.c.l.b16 %v99
  %v172 = vunpack.c.h.b16 %v99
  %v173 = vunpack.c.l.b16 %v100
  %v174 = vunpack.c.h.b16 %v100
  %v175 = vunpack.c.l.b16 %v101
  %v176 = vunpack.c.h.b16 %v101
  %v177 = vunpack.c.l.b16 %v102
  %v178 = vunpack.c.h.b16 %v102
  %v179 = vunpack.c.l.b16 %v103
  %v180 = vunpack.c.h.b16 %v103
  %v181 = vunpack.c.l.b16 %v104
  %v182 = vunpack.c.h.b16 %v104
  %v183 = vunpack.c.l.b16 %v105
  %v184 = vunpack.c.h.b16 %v105
  %v185 = vunpack.c.l.b16 %v106
  %v186 = vunpack.c.h.b16 %v106
  %v187 = vunpack.c.l.b16 %v107
  %v188 = vunpack.c.h.b16 %v107
  %v189 = vunpack.c.l.b16 %v108
  %v190 = vunpack.c.h.b16 %v108
  %v191 = vunpack.c.l.b16 %v109
  %v192 = vunpack.c.h.b16 %v109
  %v193 = vunpack.c.l.b16 %v110
  %v194 = vunpack.c.h.b16 %v110
  %v195 = vunpack.c.l.b16 %v111
  %v196 = vunpack.c.h.b16 %v111
  %v197 = vunpack.c.l.b16 %v112
  %v198 = vunpack.c.h.b16 %v112
  %v199 = vunpack.c.l.b16 %v113
  %v200 = vunpack.c.h.b16 %v113
  %v201 = vunpack.c.l.b16 %v114
  %v202 = vunpack.c.h.b16 %v114
  %v203 = vunpack.c.l.b16 %v115
  %v204 = vunpack.c.h.b16 %v115
  %v205 = vunpack.c.l.b16 %v116
  %v206 = vunpack.c.h.b16 %v116
  %v207 = vunpack.c.l.b16 %v117
  %v208 = vunpack.c.h.b16 %v117
  %v209 = vunpack.c.l.b16 %v118
  %v210 = vunpack.c.h.b16 %v118
  %v211 = vunpack.c.l.b16 %v119
  %v212 = vunpack.c.h.b16 %v119
  %v213 = vunpack.c.l.b16 %v120
  %v214 = vunpack.c.h.b16 %v120
  %v215 = vunpack.c.l.b16 %v121
  %v216 = vunpack.c.h.b16 %v121
  %v217 = vunpack.c.l.b16 %v122
  %v218 = vunpack.c.h.b16 %v122
  %v219 = vpack.c.b16 %v159, %v155
  %v220 = vpack.c.b16 %v160, %v156
  %v221 = vpack.c.b16 %v161, %v157
  %v222 = vpack.c.b16 %v162, %v158
  %v223 = vpack.c.b16 %v167, %v163
  %v224 = vpack.c.b16 %v168, %v164
  %v225 = vpack.c.b16 %v169, %v165
  %v226 = vpack.c.b16 %v170, %v166
  %v227 = vpack.c.b16 %v175, %v171
  %v228 = vpack.c.b16 %v176, %v172
  %v229 = vpack.c.b16 %v177, %v173
  %v230 = vpack.c.b16 %v178, %v174
  %v231 = vpack.c.b16 %v183, %v179
  %v232 = vpack.c.b16 %v184, %v180
  %v233 = vpack.c.b16 %v185, %v181
  %v234 = vpack.c.b16 %v186, %v182
  %v235 = vpack.c.b16 %v191, %v187
  %v236 = vpack.c.b16 %v192, %v188
  %v237 = vpack.c.b16 %v193, %v189
  %v238 = vpack.c.b16 %v194, %v190
  %v239 = vpack.c.b16 %v199, %v195
  %v240 = vpack.c.b16 %v200, %v196
  %v241 = vpack.c.b16 %v201, %v197
  %v242 = vpack.c.b16 %v202, %v198
  %v243 = vpack.c.b16 %v207, %v203
  %v244 = vpack.c.b16 %v208, %v204
  %v245 = vpack.c.b16 %v209, %v205
  %v246 = vpack.c.b16 %v210, %v206
  %v247 = vpack.c.b16 %v215, %v211
  %v248 = vpack.c.b16 %v216, %v212
  %v249 = vpack.c.b16 %v217, %v213
  %v250 = vpack.c.b16 %v218, %v214
  %283 = vmatpush.bf16.msra.mxu0 %v247
  %284 = vmatpush.bf16.msra.mxu0 %v243
  %285 = vmatpush.bf16.msra.mxu0 %v239
  %286 = vmatpush.bf16.msra.mxu0 %v235
  %287 = vmatpush.bf16.msra.mxu0 %v231
  %288 = vmatpush.bf16.msra.mxu0 %v227
  %289 = vmatpush.bf16.msra.mxu0 %v223
  %290 = vmatpush.bf16.msra.mxu0 %v219
  %291 = vmatmul.bf16.gmra.mxu0 %v87
  %v292 = vpop.f32.mrf.mxu0
  %v293 = vadd.f32 0.0, %v292
  %v294 = vpop.f32.mrf.mxu0
  %v295 = vadd.f32 0.0, %v294
  %296 = vmatmul.bf16.gmra.mxu0 %v88
  %v297 = vpop.f32.mrf.mxu0
  %v298 = vadd.f32 0.0, %v297
  %v299 = vpop.f32.mrf.mxu0
  %v300 = vadd.f32 0.0, %v299
  %301 = vmatmul.bf16.gmra.mxu0 %v89
  %v302 = vpop.f32.mrf.mxu0
  %v303 = vadd.f32 0.0, %v302
  %v304 = vpop.f32.mrf.mxu0
  %v305 = vadd.f32 0.0, %v304
  %306 = vmatmul.bf16.gmra.mxu0 %v90
  %v307 = vpop.f32.mrf.mxu0
  %v308 = vadd.f32 0.0, %v307
  %v309 = vpop.f32.mrf.mxu0
  %v310 = vadd.f32 0.0, %v309
  %311 = vdwg.mxu0
  %312 = vmatpush.bf16.msra.mxu0 %v248
  %313 = vmatpush.bf16.msra.mxu0 %v244
  %314 = vmatpush.bf16.msra.mxu0 %v240
  %315 = vmatpush.bf16.msra.mxu0 %v236
  %316 = vmatpush.bf16.msra.mxu0 %v232
  %317 = vmatpush.bf16.msra.mxu0 %v228
  %318 = vmatpush.bf16.msra.mxu0 %v224
  %319 = vmatpush.bf16.msra.mxu0 %v220
  %320 = vmatmul.bf16.gmra.mxu0 %v87
  %v321 = vpop.f32.mrf.mxu0
  %v322 = vadd.f32 0.0, %v321
  %v323 = vpop.f32.mrf.mxu0
  %v324 = vadd.f32 0.0, %v323
  %325 = vmatmul.bf16.gmra.mxu0 %v88
  %v326 = vpop.f32.mrf.mxu0
  %v327 = vadd.f32 0.0, %v326
  %v328 = vpop.f32.mrf.mxu0
  %v329 = vadd.f32 0.0, %v328
  %330 = vmatmul.bf16.gmra.mxu0 %v89
  %v331 = vpop.f32.mrf.mxu0
  %v332 = vadd.f32 0.0, %v331
  %v333 = vpop.f32.mrf.mxu0
  %v334 = vadd.f32 0.0, %v333
  %335 = vmatmul.bf16.gmra.mxu0 %v90
  %v336 = vpop.f32.mrf.mxu0
  %v337 = vadd.f32 0.0, %v336
  %v338 = vpop.f32.mrf.mxu0
  %v339 = vadd.f32 0.0, %v338
  %340 = vdwg.mxu0
  %341 = vmatpush.bf16.msra.mxu0 %v249
  %342 = vmatpush.bf16.msra.mxu0 %v245
  %343 = vmatpush.bf16.msra.mxu0 %v241
  %344 = vmatpush.bf16.msra.mxu0 %v237
  %345 = vmatpush.bf16.msra.mxu0 %v233
  %346 = vmatpush.bf16.msra.mxu0 %v229
  %347 = vmatpush.bf16.msra.mxu0 %v225
  %348 = vmatpush.bf16.msra.mxu0 %v221
  %349 = vmatmul.bf16.gmra.mxu0 %v87
  %v350 = vpop.f32.mrf.mxu0
  %v351 = vadd.f32 0.0, %v350
  %v352 = vpop.f32.mrf.mxu0
  %v353 = vadd.f32 0.0, %v352
  %354 = vmatmul.bf16.gmra.mxu0 %v88
  %v355 = vpop.f32.mrf.mxu0
  %v356 = vadd.f32 0.0, %v355
  %v357 = vpop.f32.mrf.mxu0
  %v358 = vadd.f32 0.0, %v357
  %359 = vmatmul.bf16.gmra.mxu0 %v89
  %v360 = vpop.f32.mrf.mxu0
  %v361 = vadd.f32 0.0, %v360
  %v362 = vpop.f32.mrf.mxu0
  %v363 = vadd.f32 0.0, %v362
  %364 = vmatmul.bf16.gmra.mxu0 %v90
  %v365 = vpop.f32.mrf.mxu0
  %v366 = vadd.f32 0.0, %v365
  %v367 = vpop.f32.mrf.mxu0
  %v368 = vadd.f32 0.0, %v367
  %369 = vdwg.mxu0
  %370 = vmatpush.bf16.msra.mxu0 %v250
  %371 = vmatpush.bf16.msra.mxu0 %v246
  %372 = vmatpush.bf16.msra.mxu0 %v242
  %373 = vmatpush.bf16.msra.mxu0 %v238
  %374 = vmatpush.bf16.msra.mxu0 %v234
  %375 = vmatpush.bf16.msra.mxu0 %v230
  %376 = vmatpush.bf16.msra.mxu0 %v226
  %377 = vmatpush.bf16.msra.mxu0 %v222
  %378 = vmatmul.bf16.gmra.mxu0 %v87
  %v379 = vpop.f32.mrf.mxu0
  %v380 = vadd.f32 0.0, %v379
  %v381 = vpop.f32.mrf.mxu0
  %v382 = vadd.f32 0.0, %v381
  %383 = vmatmul.bf16.gmra.mxu0 %v88
  %v384 = vpop.f32.mrf.mxu0
  %v385 = vadd.f32 0.0, %v384
  %v386 = vpop.f32.mrf.mxu0
  %v387 = vadd.f32 0.0, %v386
  %388 = vmatmul.bf16.gmra.mxu0 %v89
  %v389 = vpop.f32.mrf.mxu0
  %v390 = vadd.f32 0.0, %v389
  %v391 = vpop.f32.mrf.mxu0
  %v392 = vadd.f32 0.0, %v391
  %393 = vmatmul.bf16.gmra.mxu0 %v90
  %v394 = vpop.f32.mrf.mxu0
  %v395 = vadd.f32 0.0, %v394
  %v396 = vpop.f32.mrf.mxu0
  %v397 = vadd.f32 0.0, %v396
  %398 = vdwg.mxu0
  %v399 = vpack.c.bf16 %v322, %v293
  %v400 = vpack.c.bf16 %v380, %v351
  %v401 = vpack.c.bf16 %v324, %v295
  %v402 = vpack.c.bf16 %v382, %v353
  %v403 = vpack.c.bf16 %v327, %v298
  %v404 = vpack.c.bf16 %v385, %v356
  %v405 = vpack.c.bf16 %v329, %v300
  %v406 = vpack.c.bf16 %v387, %v358
  %v407 = vpack.c.bf16 %v332, %v303
  %v408 = vpack.c.bf16 %v390, %v361
  %v409 = vpack.c.bf16 %v334, %v305
  %v410 = vpack.c.bf16 %v392, %v363
  %v411 = vpack.c.bf16 %v337, %v308
  %v412 = vpack.c.bf16 %v395, %v366
  %v413 = vpack.c.bf16 %v339, %v310
  %v414 = vpack.c.bf16 %v397, %v368
  %415 = vst [vmem:[#allocation2] sm:$0xff] %v399
  %416 = vst [vmem:[#allocation2 + $0x8] sm:$0xff] %v400
  %417 = vst [vmem:[#allocation2 + $0x10] sm:$0xff] %v401
  %418 = vst [vmem:[#allocation2 + $0x18] sm:$0xff] %v402
  %419 = vst [vmem:[#allocation2 + $0x20] sm:$0xff] %v403
  %420 = vst [vmem:[#allocation2 + $0x28] sm:$0xff] %v404
  %421 = vst [vmem:[#allocation2 + $0x30] sm:$0xff] %v405
  %422 = vst [vmem:[#allocation2 + $0x38] sm:$0xff] %v406
  %423 = vst [vmem:[#allocation2 + $0x40] sm:$0xff] %v407
  %424 = vst [vmem:[#allocation2 + $0x48] sm:$0xff] %v408
  %425 = vst [vmem:[#allocation2 + $0x50] sm:$0xff] %v409
  %426 = vst [vmem:[#allocation2 + $0x58] sm:$0xff] %v410
  %427 = vst [vmem:[#allocation2 + $0x60] sm:$0xff] %v411
  %428 = vst [vmem:[#allocation2 + $0x68] sm:$0xff] %v412
  %429 = vst [vmem:[#allocation2 + $0x70] sm:$0xff] %v413
  %430 = vst [vmem:[#allocation2 + $0x78] sm:$0xff] %v414
  %v431 = vld [vmem:[%s4] sm:$0xf]
  %432 = vst [vmem:[#allocation5] sm:$0xff] 0.0
  %v433 = vld [vmem:[#allocation2] sm:$0xff]
  %v434 = vld [vmem:[#allocation2 + $0x8] sm:$0xff]
  %v435 = vunpack.c.l.bf16 %v433
  %v436 = vunpack.c.h.bf16 %v433
  %v437 = vunpack.c.l.bf16 %v434
  %v438 = vunpack.c.h.bf16 %v434
  %v440 = vperm.slane %v431, 0
  %v441 = vperm.slane %v431, 1
  %v442 = vperm.slane %v431, 2
  %v443 = vperm.slane %v431, 3
  %v448 = vadd.f32 %v435, %v440
  %v449 = vadd.f32 %v436, %v441
  %v450 = vadd.f32 %v437, %v442
  %v451 = vadd.f32 %v438, %v443
  %v452 = vadd.f32 %v448, 0.0
  %v453 = vadd.f32 %v449, 0.0
  %v454 = vadd.f32 %v450, 0.0
  %v455 = vadd.f32 %v451, 0.0
  %456 = vst [vmem:[#allocation4] sm:$0xff] %v452
  %457 = vst [vmem:[#allocation4 + $0x8] sm:$0xff] %v453
  %458 = vst [vmem:[#allocation4 + $0x10] sm:$0xff] %v454
  %459 = vst [vmem:[#allocation4 + $0x18] sm:$0xff] %v455
  %v460 = vld [vmem:[#allocation4] sm:$0xff]
  %v461 = vmul.f32 %v460, 0.5
  %v462 = vtanh.pop %v461
  %v463 = vmul.f32 %v462, 0.5
  %v464 = vadd.f32 %v463, 0.5
  %v465 = vld [vmem:[#allocation4 + $0x8] sm:$0xff]
  %v466 = vmul.f32 %v465, 0.5
  %v467 = vtanh.pop %v466
  %v468 = vmul.f32 %v467, 0.5
  %v469 = vadd.f32 %v468, 0.5
  %v470 = vld [vmem:[#allocation4 + $0x10] sm:$0xff]
  %v471 = vtanh.pop %v470
  %v472 = vld [vmem:[#allocation4 + $0x18] sm:$0xff]
  %v473 = vmul.f32 %v472, 0.5
  %v474 = vtanh.pop %v473
  %v475 = vmul.f32 %v474, 0.5
  %v476 = vadd.f32 %v475, 0.5
  %v477 = vld [vmem:[#allocation5] sm:$0xff]
  %v478 = vmul.f32 %v469, %v477
  %v479 = vmul.f32 %v464, %v471
  %v480 = vadd.f32 %v478, %v479
  %481 = vst [vmem:[#allocation5] sm:$0xff] %v480
  %v482 = vld [vmem:[#allocation5] sm:$0xff]
  %v483 = vtanh.pop %v482
  %v484 = vmul.f32 %v476, %v483
  %485 = vst [vmem:[#allocation3] sm:$0xff] %v484
  %v486 = vld [vmem:[#allocation3] sm:$0xff]
  %v487 = vpack.c.bf16 %v486, %v486
  %v488 = vld [vmem:[%s3] sm:$0xff]
  %v489 = vld [vmem:[%s3 + $0x8] sm:$0xff]
  %v490 = vld [vmem:[%s3 + $0x10] sm:$0xff]
  %v491 = vld [vmem:[%s3 + $0x18] sm:$0xff]
  %v492 = vld [vmem:[%s3 + $0x20] sm:$0xff]
  %v493 = vld [vmem:[%s3 + $0x28] sm:$0xff]
  %v494 = vld [vmem:[%s3 + $0x30] sm:$0xff]
  %v495 = vld [vmem:[%s3 + $0x38] sm:$0xff]
  %v496 = vld [vmem:[%s3 + $0x40] sm:$0xff]
  %v497 = vld [vmem:[%s3 + $0x48] sm:$0xff]
  %v498 = vld [vmem:[%s3 + $0x50] sm:$0xff]
  %v499 = vld [vmem:[%s3 + $0x58] sm:$0xff]
  %v500 = vld [vmem:[%s3 + $0x60] sm:$0xff]
  %v501 = vld [vmem:[%s3 + $0x68] sm:$0xff]
  %v502 = vld [vmem:[%s3 + $0x70] sm:$0xff]
  %v503 = vld [vmem:[%s3 + $0x78] sm:$0xff]
  %v504 = vld [vmem:[%s3 + $0x80] sm:$0xff]
  %v505 = vld [vmem:[%s3 + $0x88] sm:$0xff]
  %v506 = vld [vmem:[%s3 + $0x90] sm:$0xff]
  %v507 = vld [vmem:[%s3 + $0x98] sm:$0xff]
  %v508 = vld [vmem:[%s3 + $0xa0] sm:$0xff]
  %v509 = vld [vmem:[%s3 + $0xa8] sm:$0xff]
  %v510 = vld [vmem:[%s3 + $0xb0] sm:$0xff]
  %v511 = vld [vmem:[%s3 + $0xb8] sm:$0xff]
  %v512 = vld [vmem:[%s3 + $0xc0] sm:$0xff]
  %v513 = vld [vmem:[%s3 + $0xc8] sm:$0xff]
  %v514 = vld [vmem:[%s3 + $0xd0] sm:$0xff]
  %v515 = vld [vmem:[%s3 + $0xd8] sm:$0xff]
  %v516 = vld [vmem:[%s3 + $0xe0] sm:$0xff]
  %v517 = vld [vmem:[%s3 + $0xe8] sm:$0xff]
  %v518 = vld [vmem:[%s3 + $0xf0] sm:$0xff]
  %v519 = vld [vmem:[%s3 + $0xf8] sm:$0xff]
  %v552 = vunpack.c.l.b16 %v488
  %v553 = vunpack.c.h.b16 %v488
  %v554 = vunpack.c.l.b16 %v489
  %v555 = vunpack.c.h.b16 %v489
  %v556 = vunpack.c.l.b16 %v490
  %v557 = vunpack.c.h.b16 %v490
  %v558 = vunpack.c.l.b16 %v491
  %v559 = vunpack.c.h.b16 %v491
  %v560 = vunpack.c.l.b16 %v492
  %v561 = vunpack.c.h.b16 %v492
  %v562 = vunpack.c.l.b16 %v493
  %v563 = vunpack.c.h.b16 %v493
  %v564 = vunpack.c.l.b16 %v494
  %v565 = vunpack.c.h.b16 %v494
  %v566 = vunpack.c.l.b16 %v495
  %v567 = vunpack.c.h.b16 %v495
  %v568 = vunpack.c.l.b16 %v496
  %v569 = vunpack.c.h.b16 %v496
  %v570 = vunpack.c.l.b16 %v497
  %v571 = vunpack.c.h.b16 %v497
  %v572 = vunpack.c.l.b16 %v498
  %v573 = vunpack.c.h.b16 %v498
  %v574 = vunpack.c.l.b16 %v499
  %v575 = vunpack.c.h.b16 %v499
  %v576 = vunpack.c.l.b16 %v500
  %v577 = vunpack.c.h.b16 %v500
  %v578 = vunpack.c.l.b16 %v501
  %v579 = vunpack.c.h.b16 %v501
  %v580 = vunpack.c.l.b16 %v502
  %v581 = vunpack.c.h.b16 %v502
  %v582 = vunpack.c.l.b16 %v503
  %v583 = vunpack.c.h.b16 %v503
  %v584 = vunpack.c.l.b16 %v504
  %v585 = vunpack.c.h.b16 %v504
  %v586 = vunpack.c.l.b16 %v505
  %v587 = vunpack.c.h.b16 %v505
  %v588 = vunpack.c.l.b16 %v506
  %v589 = vunpack.c.h.b16 %v506
  %v590 = vunpack.c.l.b16 %v507
  %v591 = vunpack.c.h.b16 %v507
  %v592 = vunpack.c.l.b16 %v508
  %v593 = vunpack.c.h.b16 %v508
  %v594 = vunpack.c.l.b16 %v509
  %v595 = vunpack.c.h.b16 %v509
  %v596 = vunpack.c.l.b16 %v510
  %v597 = vunpack.c.h.b16 %v510
  %v598 = vunpack.c.l.b16 %v511
  %v599 = vunpack.c.h.b16 %v511
  %v600 = vunpack.c.l.b16 %v512
  %v601 = vunpack.c.h.b16 %v512
  %v602 = vunpack.c.l.b16 %v513
  %v603 = vunpack.c.h.b16 %v513
  %v604 = vunpack.c.l.b16 %v514
  %v605 = vunpack.c.h.b16 %v514
  %v606 = vunpack.c.l.b16 %v515
  %v607 = vunpack.c.h.b16 %v515
  %v608 = vunpack.c.l.b16 %v516
  %v609 = vunpack.c.h.b16 %v516
  %v610 = vunpack.c.l.b16 %v517
  %v611 = vunpack.c.h.b16 %v517
  %v612 = vunpack.c.l.b16 %v518
  %v613 = vunpack.c.h.b16 %v518
  %v614 = vunpack.c.l.b16 %v519
  %v615 = vunpack.c.h.b16 %v519
  %v616 = vpack.c.b16 %v556, %v552
  %v617 = vpack.c.b16 %v557, %v553
  %v618 = vpack.c.b16 %v558, %v554
  %v619 = vpack.c.b16 %v559, %v555
  %v620 = vpack.c.b16 %v564, %v560
  %v621 = vpack.c.b16 %v565, %v561
  %v622 = vpack.c.b16 %v566, %v562
  %v623 = vpack.c.b16 %v567, %v563
  %v624 = vpack.c.b16 %v572, %v568
  %v625 = vpack.c.b16 %v573, %v569
  %v626 = vpack.c.b16 %v574, %v570
  %v627 = vpack.c.b16 %v575, %v571
  %v628 = vpack.c.b16 %v580, %v576
  %v629 = vpack.c.b16 %v581, %v577
  %v630 = vpack.c.b16 %v582, %v578
  %v631 = vpack.c.b16 %v583, %v579
  %v632 = vpack.c.b16 %v588, %v584
  %v633 = vpack.c.b16 %v589, %v585
  %v634 = vpack.c.b16 %v590, %v586
  %v635 = vpack.c.b16 %v591, %v587
  %v636 = vpack.c.b16 %v596, %v592
  %v637 = vpack.c.b16 %v597, %v593
  %v638 = vpack.c.b16 %v598, %v594
  %v639 = vpack.c.b16 %v599, %v595
  %v640 = vpack.c.b16 %v604, %v600
  %v641 = vpack.c.b16 %v605, %v601
  %v642 = vpack.c.b16 %v606, %v602
  %v643 = vpack.c.b16 %v607, %v603
  %v644 = vpack.c.b16 %v612, %v608
  %v645 = vpack.c.b16 %v613, %v609
  %v646 = vpack.c.b16 %v614, %v610
  %v647 = vpack.c.b16 %v615, %v611
  %680 = vmatpush.bf16.msra.mxu0 %v644
  %681 = vmatpush.bf16.msra.mxu0 %v640
  %682 = vmatpush.bf16.msra.mxu0 %v636
  %683 = vmatpush.bf16.msra.mxu0 %v632
  %684 = vmatpush.bf16.msra.mxu0 %v628
  %685 = vmatpush.bf16.msra.mxu0 %v624
  %686 = vmatpush.bf16.msra.mxu0 %v620
  %687 = vmatpush.bf16.msra.mxu0 %v616
  %688 = vmatmul.bf16.gmra.mxu0 %v487
  %v689 = vpop.f32.mrf.mxu0
  %v690 = vadd.f32 0.0, %v689
  %v691 = vpop.f32.mrf.mxu0
  %692 = vdwg.mxu0
  %693 = vmatpush.bf16.msra.mxu0 %v645
  %694 = vmatpush.bf16.msra.mxu0 %v641
  %695 = vmatpush.bf16.msra.mxu0 %v637
  %696 = vmatpush.bf16.msra.mxu0 %v633
  %697 = vmatpush.bf16.msra.mxu0 %v629
  %698 = vmatpush.bf16.msra.mxu0 %v625
  %699 = vmatpush.bf16.msra.mxu0 %v621
  %700 = vmatpush.bf16.msra.mxu0 %v617
  %701 = vmatmul.bf16.gmra.mxu0 %v487
  %v702 = vpop.f32.mrf.mxu0
  %v703 = vadd.f32 0.0, %v702
  %v704 = vpop.f32.mrf.mxu0
  %705 = vdwg.mxu0
  %706 = vmatpush.bf16.msra.mxu0 %v646
  %707 = vmatpush.bf16.msra.mxu0 %v642
  %708 = vmatpush.bf16.msra.mxu0 %v638
  %709 = vmatpush.bf16.msra.mxu0 %v634
  %710 = vmatpush.bf16.msra.mxu0 %v630
  %711 = vmatpush.bf16.msra.mxu0 %v626
  %712 = vmatpush.bf16.msra.mxu0 %v622
  %713 = vmatpush.bf16.msra.mxu0 %v618
  %714 = vmatmul.bf16.gmra.mxu0 %v487
  %v715 = vpop.f32.mrf.mxu0
  %v716 = vadd.f32 0.0, %v715
  %v717 = vpop.f32.mrf.mxu0
  %718 = vdwg.mxu0
  %719 = vmatpush.bf16.msra.mxu0 %v647
  %720 = vmatpush.bf16.msra.mxu0 %v643
  %721 = vmatpush.bf16.msra.mxu0 %v639
  %722 = vmatpush.bf16.msra.mxu0 %v635
  %723 = vmatpush.bf16.msra.mxu0 %v631
  %724 = vmatpush.bf16.msra.mxu0 %v627
  %725 = vmatpush.bf16.msra.mxu0 %v623
  %726 = vmatpush.bf16.msra.mxu0 %v619
  %727 = vmatmul.bf16.gmra.mxu0 %v487
  %v728 = vpop.f32.mrf.mxu0
  %v729 = vadd.f32 0.0, %v728
  %v730 = vpop.f32.mrf.mxu0
  %731 = vdwg.mxu0
  %v732 = vld [vmem:[#allocation2 + $0x10] sm:$0xff]
  %v733 = vld [vmem:[#allocation2 + $0x18] sm:$0xff]
  %v734 = vunpack.c.l.bf16 %v732
  %v735 = vunpack.c.h.bf16 %v732
  %v736 = vunpack.c.l.bf16 %v733
  %v737 = vunpack.c.h.bf16 %v733
  %v738 = vadd.f32 %v734, %v440
  %v739 = vadd.f32 %v735, %v441
  %v740 = vadd.f32 %v736, %v442
  %v741 = vadd.f32 %v737, %v443
  %v742 = vadd.f32 %v738, %v690
  %v743 = vadd.f32 %v739, %v703
  %v744 = vadd.f32 %v740, %v716
  %v745 = vadd.f32 %v741, %v729
  %746 = vst [vmem:[#allocation4] sm:$0xff] %v742
  %747 = vst [vmem:[#allocation4 + $0x8] sm:$0xff] %v743
  %748 = vst [vmem:[#allocation4 + $0x10] sm:$0xff] %v744
  %749 = vst [vmem:[#allocation4 + $0x18] sm:$0xff] %v745
  %v750 = vld [vmem:[#allocation4] sm:$0xff]
  %v751 = vmul.f32 %v750, 0.5
  %v752 = vtanh.pop %v751
  %v753 = vmul.f32 %v752, 0.5
  %v754 = vadd.f32 %v753, 0.5
  %v755 = vld [vmem:[#allocation4 + $0x8] sm:$0xff]
  %v756 = vmul.f32 %v755, 0.5
  %v757 = vtanh.pop %v756
  %v758 = vmul.f32 %v757, 0.5
  %v759 = vadd.f32 %v758, 0.5
  %v760 = vld [vmem:[#allocation4 + $0x10] sm:$0xff]
  %v761 = vtanh.pop %v760
  %v762 = vld [vmem:[#allocation4 + $0x18] sm:$0xff]
  %v763 = vmul.f32 %v762, 0.5
  %v764 = vtanh.pop %v763
  %v765 = vmul.f32 %v764, 0.5
  %v766 = vadd.f32 %v765, 0.5
  %v767 = vld [vmem:[#allocation5] sm:$0xff]
  %v768 = vmul.f32 %v759, %v767
  %v769 = vmul.f32 %v754, %v761
  %v770 = vadd.f32 %v768, %v769
  %771 = vst [vmem:[#allocation5] sm:$0xff] %v770
  %v772 = vld [vmem:[#allocation5] sm:$0xff]
  %v773 = vtanh.pop %v772
  %v774 = vmul.f32 %v766, %v773
  %775 = vst [vmem:[#allocation3 + $0x8] sm:$0xff] %v774
  %v776 = vld [vmem:[#allocation3 + $0x8] sm:$0xff]
  %v777 = vpack.c.bf16 %v776, %v776
  %v778 = vld [vmem:[%s3] sm:$0xff]
  %v779 = vld [vmem:[%s3 + $0x8] sm:$0xff]
  %v780 = vld [vmem:[%s3 + $0x10] sm:$0xff]
  %v781 = vld [vmem:[%s3 + $0x18] sm:$0xff]
  %v782 = vld [vmem:[%s3 + $0x20] sm:$0xff]
  %v783 = vld [vmem:[%s3 + $0x28] sm:$0xff]
  %v784 = vld [vmem:[%s3 + $0x30] sm:$0xff]
  %v785 = vld [vmem:[%s3 + $0x38] sm:$0xff]
  %v786 = vld [vmem:[%s3 + $0x40] sm:$0xff]
  %v787 = vld [vmem:[%s3 + $0x48] sm:$0xff]
  %v788 = vld [vmem:[%s3 + $0x50] sm:$0xff]
  %v789 = vld [vmem:[%s3 + $0x58] sm:$0xff]
  %v790 = vld [vmem:[%s3 + $0x60] sm:$0xff]
  %v791 = vld [vmem:[%s3 + $0x68] sm:$0xff]
  %v792 = vld [vmem:[%s3 + $0x70] sm:$0xff]
  %v793 = vld [vmem:[%s3 + $0x78] sm:$0xff]
  %v794 = vld [vmem:[%s3 + $0x80] sm:$0xff]
  %v795 = vld [vmem:[%s3 + $0x88] sm:$0xff]
  %v796 = vld [vmem:[%s3 + $0x90] sm:$0xff]
  %v797 = vld [vmem:[%s3 + $0x98] sm:$0xff]
  %v798 = vld [vmem:[%s3 + $0xa0] sm:$0xff]
  %v799 = vld [vmem:[%s3 + $0xa8] sm:$0xff]
  %v800 = vld [vmem:[%s3 + $0xb0] sm:$0xff]
  %v801 = vld [vmem:[%s3 + $0xb8] sm:$0xff]
  %v802 = vld [vmem:[%s3 + $0xc0] sm:$0xff]
  %v803 = vld [vmem:[%s3 + $0xc8] sm:$0xff]
  %v804 = vld [vmem:[%s3 + $0xd0] sm:$0xff]
  %v805 = vld [vmem:[%s3 + $0xd8] sm:$0xff]
  %v806 = vld [vmem:[%s3 + $0xe0] sm:$0xff]
  %v807 = vld [vmem:[%s3 + $0xe8] sm:$0xff]
  %v808 = vld [vmem:[%s3 + $0xf0] sm:$0xff]
  %v809 = vld [vmem:[%s3 + $0xf8] sm:$0xff]
  %v842 = vunpack.c.l.b16 %v778
  %v843 = vunpack.c.h.b16 %v778
  %v844 = vunpack.c.l.b16 %v779
  %v845 = vunpack.c.h.b16 %v779
  %v846 = vunpack.c.l.b16 %v780
  %v847 = vunpack.c.h.b16 %v780
  %v848 = vunpack.c.l.b16 %v781
  %v849 = vunpack.c.h.b16 %v781
  %v850 = vunpack.c.l.b16 %v782
  %v851 = vunpack.c.h.b16 %v782
  %v852 = vunpack.c.l.b16 %v783
  %v853 = vunpack.c.h.b16 %v783
  %v854 = vunpack.c.l.b16 %v784
  %v855 = vunpack.c.h.b16 %v784
  %v856 = vunpack.c.l.b16 %v785
  %v857 = vunpack.c.h.b16 %v785
  %v858 = vunpack.c.l.b16 %v786
  %v859 = vunpack.c.h.b16 %v786
  %v860 = vunpack.c.l.b16 %v787
  %v861 = vunpack.c.h.b16 %v787
  %v862 = vunpack.c.l.b16 %v788
  %v863 = vunpack.c.h.b16 %v788
  %v864 = vunpack.c.l.b16 %v789
  %v865 = vunpack.c.h.b16 %v789
  %v866 = vunpack.c.l.b16 %v790
  %v867 = vunpack.c.h.b16 %v790
  %v868 = vunpack.c.l.b16 %v791
  %v869 = vunpack.c.h.b16 %v791
  %v870 = vunpack.c.l.b16 %v792
  %v871 = vunpack.c.h.b16 %v792
  %v872 = vunpack.c.l.b16 %v793
  %v873 = vunpack.c.h.b16 %v793
  %v874 = vunpack.c.l.b16 %v794
  %v875 = vunpack.c.h.b16 %v794
  %v876 = vunpack.c.l.b16 %v795
  %v877 = vunpack.c.h.b16 %v795
  %v878 = vunpack.c.l.b16 %v796
  %v879 = vunpack.c.h.b16 %v796
  %v880 = vunpack.c.l.b16 %v797
  %v881 = vunpack.c.h.b16 %v797
  %v882 = vunpack.c.l.b16 %v798
  %v883 = vunpack.c.h.b16 %v798
  %v884 = vunpack.c.l.b16 %v799
  %v885 = vunpack.c.h.b16 %v799
  %v886 = vunpack.c.l.b16 %v800
  %v887 = vunpack.c.h.b16 %v800
  %v888 = vunpack.c.l.b16 %v801
  %v889 = vunpack.c.h.b16 %v801
  %v890 = vunpack.c.l.b16 %v802
  %v891 = vunpack.c.h.b16 %v802
  %v892 = vunpack.c.l.b16 %v803
  %v893 = vunpack.c.h.b16 %v803
  %v894 = vunpack.c.l.b16 %v804
  %v895 = vunpack.c.h.b16 %v804
  %v896 = vunpack.c.l.b16 %v805
  %v897 = vunpack.c.h.b16 %v805
  %v898 = vunpack.c.l.b16 %v806
  %v899 = vunpack.c.h.b16 %v806
  %v900 = vunpack.c.l.b16 %v807
  %v901 = vunpack.c.h.b16 %v807
  %v902 = vunpack.c.l.b16 %v808
  %v903 = vunpack.c.h.b16 %v808
  %v904 = vunpack.c.l.b16 %v809
  %v905 = vunpack.c.h.b16 %v809
  %v906 = vpack.c.b16 %v846, %v842
  %v907 = vpack.c.b16 %v847, %v843
  %v908 = vpack.c.b16 %v848, %v844
  %v909 = vpack.c.b16 %v849, %v845
  %v910 = vpack.c.b16 %v854, %v850
  %v911 = vpack.c.b16 %v855, %v851
  %v912 = vpack.c.b16 %v856, %v852
  %v913 = vpack.c.b16 %v857, %v853
  %v914 = vpack.c.b16 %v862, %v858
  %v915 = vpack.c.b16 %v863, %v859
  %v916 = vpack.c.b16 %v864, %v860
  %v917 = vpack.c.b16 %v865, %v861
  %v918 = vpack.c.b16 %v870, %v866
  %v919 = vpack.c.b16 %v871, %v867
  %v920 = vpack.c.b16 %v872, %v868
  %v921 = vpack.c.b16 %v873, %v869
  %v922 = vpack.c.b16 %v878, %v874
  %v923 = vpack.c.b16 %v879, %v875
  %v924 = vpack.c.b16 %v880, %v876
  %v925 = vpack.c.b16 %v881, %v877
  %v926 = vpack.c.b16 %v886, %v882
  %v927 = vpack.c.b16 %v887, %v883
  %v928 = vpack.c.b16 %v888, %v884
  %v929 = vpack.c.b16 %v889, %v885
  %v930 = vpack.c.b16 %v894, %v890
  %v931 = vpack.c.b16 %v895, %v891
  %v932 = vpack.c.b16 %v896, %v892
  %v933 = vpack.c.b16 %v897, %v893
  %v934 = vpack.c.b16 %v902, %v898
  %v935 = vpack.c.b16 %v903, %v899
  %v936 = vpack.c.b16 %v904, %v900
  %v937 = vpack.c.b16 %v905, %v901
  %970 = vmatpush.bf16.msra.mxu0 %v934
  %971 = vmatpush.bf16.msra.mxu0 %v930
  %972 = vmatpush.bf16.msra.mxu0 %v926
  %973 = vmatpush.bf16.msra.mxu0 %v922
  %974 = vmatpush.bf16.msra.mxu0 %v918
  %975 = vmatpush.bf16.msra.mxu0 %v914
  %976 = vmatpush.bf16.msra.mxu0 %v910
  %977 = vmatpush.bf16.msra.mxu0 %v906
  %978 = vmatmul.bf16.gmra.mxu0 %v777
  %v979 = vpop.f32.mrf.mxu0
  %v980 = vadd.f32 0.0, %v979
  %v981 = vpop.f32.mrf.mxu0
  %982 = vdwg.mxu0
  %983 = vmatpush.bf16.msra.mxu0 %v935
  %984 = vmatpush.bf16.msra.mxu0 %v931
  %985 = vmatpush.bf16.msra.mxu0 %v927
  %986 = vmatpush.bf16.msra.mxu0 %v923
  %987 = vmatpush.bf16.msra.mxu0 %v919
  %988 = vmatpush.bf16.msra.mxu0 %v915
  %989 = vmatpush.bf16.msra.mxu0 %v911
  %990 = vmatpush.bf16.msra.mxu0 %v907
  %991 = vmatmul.bf16.gmra.mxu0 %v777
  %v992 = vpop.f32.mrf.mxu0
  %v993 = vadd.f32 0.0, %v992
  %v994 = vpop.f32.mrf.mxu0
  %995 = vdwg.mxu0
  %996 = vmatpush.bf16.msra.mxu0 %v936
  %997 = vmatpush.bf16.msra.mxu0 %v932
  %998 = vmatpush.bf16.msra.mxu0 %v928
  %999 = vmatpush.bf16.msra.mxu0 %v924
  %1000 = vmatpush.bf16.msra.mxu0 %v920
  %1001 = vmatpush.bf16.msra.mxu0 %v916
  %1002 = vmatpush.bf16.msra.mxu0 %v912
  %1003 = vmatpush.bf16.msra.mxu0 %v908
  %1004 = vmatmul.bf16.gmra.mxu0 %v777
  %v1005 = vpop.f32.mrf.mxu0
  %v1006 = vadd.f32 0.0, %v1005
  %v1007 = vpop.f32.mrf.mxu0
  %1008 = vdwg.mxu0
  %1009 = vmatpush.bf16.msra.mxu0 %v937
  %1010 = vmatpush.bf16.msra.mxu0 %v933
  %1011 = vmatpush.bf16.msra.mxu0 %v929
  %1012 = vmatpush.bf16.msra.mxu0 %v925
  %1013 = vmatpush.bf16.msra.mxu0 %v921
  %1014 = vmatpush.bf16.msra.mxu0 %v917
  %1015 = vmatpush.bf16.msra.mxu0 %v913
  %1016 = vmatpush.bf16.msra.mxu0 %v909
  %1017 = vmatmul.bf16.gmra.mxu0 %v777
  %v1018 = vpop.f32.mrf.mxu0
  %v1019 = vadd.f32 0.0, %v1018
  %v1020 = vpop.f32.mrf.mxu0
  %1021 = vdwg.mxu0
  %v1022 = vld [vmem:[#allocation2 + $0x20] sm:$0xff]
  %v1023 = vld [vmem:[#allocation2 + $0x28] sm:$0xff]
  %v1024 = vunpack.c.l.bf16 %v1022
  %v1025 = vunpack.c.h.bf16 %v1022
  %v1026 = vunpack.c.l.bf16 %v1023
  %v1027 = vunpack.c.h.bf16 %v1023
  %v1028 = vadd.f32 %v1024, %v440
  %v1029 = vadd.f32 %v1025, %v441
  %v1030 = vadd.f32 %v1026, %v442
  %v1031 = vadd.f32 %v1027, %v443
  %v1032 = vadd.f32 %v1028, %v980
  %v1033 = vadd.f32 %v1029, %v993
  %v1034 = vadd.f32 %v1030, %v1006
  %v1035 = vadd.f32 %v1031, %v1019
  %1036 = vst [vmem:[#allocation4] sm:$0xff] %v1032
  %1037 = vst [vmem:[#allocation4 + $0x8] sm:$0xff] %v1033
  %1038 = vst [vmem:[#allocation4 + $0x10] sm:$0xff] %v1034
  %1039 = vst [vmem:[#allocation4 + $0x18] sm:$0xff] %v1035
  %v1040 = vld [vmem:[#allocation4] sm:$0xff]
  %v1041 = vmul.f32 %v1040, 0.5
  %v1042 = vtanh.pop %v1041
  %v1043 = vmul.f32 %v1042, 0.5
  %v1044 = vadd.f32 %v1043, 0.5
  %v1045 = vld [vmem:[#allocation4 + $0x8] sm:$0xff]
  %v1046 = vmul.f32 %v1045, 0.5
  %v1047 = vtanh.pop %v1046
  %v1048 = vmul.f32 %v1047, 0.5
  %v1049 = vadd.f32 %v1048, 0.5
  %v1050 = vld [vmem:[#allocation4 + $0x10] sm:$0xff]
  %v1051 = vtanh.pop %v1050
  %v1052 = vld [vmem:[#allocation4 + $0x18] sm:$0xff]
  %v1053 = vmul.f32 %v1052, 0.5
  %v1054 = vtanh.pop %v1053
  %v1055 = vmul.f32 %v1054, 0.5
  %v1056 = vadd.f32 %v1055, 0.5
  %v1057 = vld [vmem:[#allocation5] sm:$0xff]
  %v1058 = vmul.f32 %v1049, %v1057
  %v1059 = vmul.f32 %v1044, %v1051
  %v1060 = vadd.f32 %v1058, %v1059
  %1061 = vst [vmem:[#allocation5] sm:$0xff] %v1060
  %v1062 = vld [vmem:[#allocation5] sm:$0xff]
  %v1063 = vtanh.pop %v1062
  %v1064 = vmul.f32 %v1056, %v1063
  %1065 = vst [vmem:[#allocation3 + $0x10] sm:$0xff] %v1064
  %v1066 = vld [vmem:[#allocation3 + $0x10] sm:$0xff]
  %v1067 = vpack.c.bf16 %v1066, %v1066
  %v1068 = vld [vmem:[%s3] sm:$0xff]
  %v1069 = vld [vmem:[%s3 + $0x8] sm:$0xff]
  %v1070 = vld [vmem:[%s3 + $0x10] sm:$0xff]
  %v1071 = vld [vmem:[%s3 + $0x18] sm:$0xff]
  %v1072 = vld [vmem:[%s3 + $0x20] sm:$0xff]
  %v1073 = vld [vmem:[%s3 + $0x28] sm:$0xff]
  %v1074 = vld [vmem:[%s3 + $0x30] sm:$0xff]
  %v1075 = vld [vmem:[%s3 + $0x38] sm:$0xff]
  %v1076 = vld [vmem:[%s3 + $0x40] sm:$0xff]
  %v1077 = vld [vmem:[%s3 + $0x48] sm:$0xff]
  %v1078 = vld [vmem:[%s3 + $0x50] sm:$0xff]
  %v1079 = vld [vmem:[%s3 + $0x58] sm:$0xff]
  %v1080 = vld [vmem:[%s3 + $0x60] sm:$0xff]
  %v1081 = vld [vmem:[%s3 + $0x68] sm:$0xff]
  %v1082 = vld [vmem:[%s3 + $0x70] sm:$0xff]
  %v1083 = vld [vmem:[%s3 + $0x78] sm:$0xff]
  %v1084 = vld [vmem:[%s3 + $0x80] sm:$0xff]
  %v1085 = vld [vmem:[%s3 + $0x88] sm:$0xff]
  %v1086 = vld [vmem:[%s3 + $0x90] sm:$0xff]
  %v1087 = vld [vmem:[%s3 + $0x98] sm:$0xff]
  %v1088 = vld [vmem:[%s3 + $0xa0] sm:$0xff]
  %v1089 = vld [vmem:[%s3 + $0xa8] sm:$0xff]
  %v1090 = vld [vmem:[%s3 + $0xb0] sm:$0xff]
  %v1091 = vld [vmem:[%s3 + $0xb8] sm:$0xff]
  %v1092 = vld [vmem:[%s3 + $0xc0] sm:$0xff]
  %v1093 = vld [vmem:[%s3 + $0xc8] sm:$0xff]
  %v1094 = vld [vmem:[%s3 + $0xd0] sm:$0xff]
  %v1095 = vld [vmem:[%s3 + $0xd8] sm:$0xff]
  %v1096 = vld [vmem:[%s3 + $0xe0] sm:$0xff]
  %v1097 = vld [vmem:[%s3 + $0xe8] sm:$0xff]
  %v1098 = vld [vmem:[%s3 + $0xf0] sm:$0xff]
  %v1099 = vld [vmem:[%s3 + $0xf8] sm:$0xff]
  %v1132 = vunpack.c.l.b16 %v1068
  %v1133 = vunpack.c.h.b16 %v1068
  %v1134 = vunpack.c.l.b16 %v1069
  %v1135 = vunpack.c.h.b16 %v1069
  %v1136 = vunpack.c.l.b16 %v1070
  %v1137 = vunpack.c.h.b16 %v1070
  %v1138 = vunpack.c.l.b16 %v1071
  %v1139 = vunpack.c.h.b16 %v1071
  %v1140 = vunpack.c.l.b16 %v1072
  %v1141 = vunpack.c.h.b16 %v1072
  %v1142 = vunpack.c.l.b16 %v1073
  %v1143 = vunpack.c.h.b16 %v1073
  %v1144 = vunpack.c.l.b16 %v1074
  %v1145 = vunpack.c.h.b16 %v1074
  %v1146 = vunpack.c.l.b16 %v1075
  %v1147 = vunpack.c.h.b16 %v1075
  %v1148 = vunpack.c.l.b16 %v1076
  %v1149 = vunpack.c.h.b16 %v1076
  %v1150 = vunpack.c.l.b16 %v1077
  %v1151 = vunpack.c.h.b16 %v1077
  %v1152 = vunpack.c.l.b16 %v1078
  %v1153 = vunpack.c.h.b16 %v1078
  %v1154 = vunpack.c.l.b16 %v1079
  %v1155 = vunpack.c.h.b16 %v1079
  %v1156 = vunpack.c.l.b16 %v1080
  %v1157 = vunpack.c.h.b16 %v1080
  %v1158 = vunpack.c.l.b16 %v1081
  %v1159 = vunpack.c.h.b16 %v1081
  %v1160 = vunpack.c.l.b16 %v1082
  %v1161 = vunpack.c.h.b16 %v1082
  %v1162 = vunpack.c.l.b16 %v1083
  %v1163 = vunpack.c.h.b16 %v1083
  %v1164 = vunpack.c.l.b16 %v1084
  %v1165 = vunpack.c.h.b16 %v1084
  %v1166 = vunpack.c.l.b16 %v1085
  %v1167 = vunpack.c.h.b16 %v1085
  %v1168 = vunpack.c.l.b16 %v1086
  %v1169 = vunpack.c.h.b16 %v1086
  %v1170 = vunpack.c.l.b16 %v1087
  %v1171 = vunpack.c.h.b16 %v1087
  %v1172 = vunpack.c.l.b16 %v1088
  %v1173 = vunpack.c.h.b16 %v1088
  %v1174 = vunpack.c.l.b16 %v1089
  %v1175 = vunpack.c.h.b16 %v1089
  %v1176 = vunpack.c.l.b16 %v1090
  %v1177 = vunpack.c.h.b16 %v1090
  %v1178 = vunpack.c.l.b16 %v1091
  %v1179 = vunpack.c.h.b16 %v1091
  %v1180 = vunpack.c.l.b16 %v1092
  %v1181 = vunpack.c.h.b16 %v1092
  %v1182 = vunpack.c.l.b16 %v1093
  %v1183 = vunpack.c.h.b16 %v1093
  %v1184 = vunpack.c.l.b16 %v1094
  %v1185 = vunpack.c.h.b16 %v1094
  %v1186 = vunpack.c.l.b16 %v1095
  %v1187 = vunpack.c.h.b16 %v1095
  %v1188 = vunpack.c.l.b16 %v1096
  %v1189 = vunpack.c.h.b16 %v1096
  %v1190 = vunpack.c.l.b16 %v1097
  %v1191 = vunpack.c.h.b16 %v1097
  %v1192 = vunpack.c.l.b16 %v1098
  %v1193 = vunpack.c.h.b16 %v1098
  %v1194 = vunpack.c.l.b16 %v1099
  %v1195 = vunpack.c.h.b16 %v1099
  %v1196 = vpack.c.b16 %v1136, %v1132
  %v1197 = vpack.c.b16 %v1137, %v1133
  %v1198 = vpack.c.b16 %v1138, %v1134
  %v1199 = vpack.c.b16 %v1139, %v1135
  %v1200 = vpack.c.b16 %v1144, %v1140
  %v1201 = vpack.c.b16 %v1145, %v1141
  %v1202 = vpack.c.b16 %v1146, %v1142
  %v1203 = vpack.c.b16 %v1147, %v1143
  %v1204 = vpack.c.b16 %v1152, %v1148
  %v1205 = vpack.c.b16 %v1153, %v1149
  %v1206 = vpack.c.b16 %v1154, %v1150
  %v1207 = vpack.c.b16 %v1155, %v1151
  %v1208 = vpack.c.b16 %v1160, %v1156
  %v1209 = vpack.c.b16 %v1161, %v1157
  %v1210 = vpack.c.b16 %v1162, %v1158
  %v1211 = vpack.c.b16 %v1163, %v1159
  %v1212 = vpack.c.b16 %v1168, %v1164
  %v1213 = vpack.c.b16 %v1169, %v1165
  %v1214 = vpack.c.b16 %v1170, %v1166
  %v1215 = vpack.c.b16 %v1171, %v1167
  %v1216 = vpack.c.b16 %v1176, %v1172
  %v1217 = vpack.c.b16 %v1177, %v1173
  %v1218 = vpack.c.b16 %v1178, %v1174
  %v1219 = vpack.c.b16 %v1179, %v1175
  %v1220 = vpack.c.b16 %v1184, %v1180
  %v1221 = vpack.c.b16 %v1185, %v1181
  %v1222 = vpack.c.b16 %v1186, %v1182
  %v1223 = vpack.c.b16 %v1187, %v1183
  %v1224 = vpack.c.b16 %v1192, %v1188
  %v1225 = vpack.c.b16 %v1193, %v1189
  %v1226 = vpack.c.b16 %v1194, %v1190
  %v1227 = vpack.c.b16 %v1195, %v1191
  %1260 = vmatpush.bf16.msra.mxu0 %v1224
  %1261 = vmatpush.bf16.msra.mxu0 %v1220
  %1262 = vmatpush.bf16.msra.mxu0 %v1216
  %1263 = vmatpush.bf16.msra.mxu0 %v1212
  %1264 = vmatpush.bf16.msra.mxu0 %v1208
  %1265 = vmatpush.bf16.msra.mxu0 %v1204
  %1266 = vmatpush.bf16.msra.mxu0 %v1200
  %1267 = vmatpush.bf16.msra.mxu0 %v1196
  %1268 = vmatmul.bf16.gmra.mxu0 %v1067
  %v1269 = vpop.f32.mrf.mxu0
  %v1270 = vadd.f32 0.0, %v1269
  %v1271 = vpop.f32.mrf.mxu0
  %1272 = vdwg.mxu0
  %1273 = vmatpush.bf16.msra.mxu0 %v1225
  %1274 = vmatpush.bf16.msra.mxu0 %v1221
  %1275 = vmatpush.bf16.msra.mxu0 %v1217
  %1276 = vmatpush.bf16.msra.mxu0 %v1213
  %1277 = vmatpush.bf16.msra.mxu0 %v1209
  %1278 = vmatpush.bf16.msra.mxu0 %v1205
  %1279 = vmatpush.bf16.msra.mxu0 %v1201
  %1280 = vmatpush.bf16.msra.mxu0 %v1197
  %1281 = vmatmul.bf16.gmra.mxu0 %v1067
  %v1282 = vpop.f32.mrf.mxu0
  %v1283 = vadd.f32 0.0, %v1282
  %v1284 = vpop.f32.mrf.mxu0
  %1285 = vdwg.mxu0
  %1286 = vmatpush.bf16.msra.mxu0 %v1226
  %1287 = vmatpush.bf16.msra.mxu0 %v1222
  %1288 = vmatpush.bf16.msra.mxu0 %v1218
  %1289 = vmatpush.bf16.msra.mxu0 %v1214
  %1290 = vmatpush.bf16.msra.mxu0 %v1210
  %1291 = vmatpush.bf16.msra.mxu0 %v1206
  %1292 = vmatpush.bf16.msra.mxu0 %v1202
  %1293 = vmatpush.bf16.msra.mxu0 %v1198
  %1294 = vmatmul.bf16.gmra.mxu0 %v1067
  %v1295 = vpop.f32.mrf.mxu0
  %v1296 = vadd.f32 0.0, %v1295
  %v1297 = vpop.f32.mrf.mxu0
  %1298 = vdwg.mxu0
  %1299 = vmatpush.bf16.msra.mxu0 %v1227
  %1300 = vmatpush.bf16.msra.mxu0 %v1223
  %1301 = vmatpush.bf16.msra.mxu0 %v1219
  %1302 = vmatpush.bf16.msra.mxu0 %v1215
  %1303 = vmatpush.bf16.msra.mxu0 %v1211
  %1304 = vmatpush.bf16.msra.mxu0 %v1207
  %1305 = vmatpush.bf16.msra.mxu0 %v1203
  %1306 = vmatpush.bf16.msra.mxu0 %v1199
  %1307 = vmatmul.bf16.gmra.mxu0 %v1067
  %v1308 = vpop.f32.mrf.mxu0
  %v1309 = vadd.f32 0.0, %v1308
  %v1310 = vpop.f32.mrf.mxu0
  %1311 = vdwg.mxu0
  %v1312 = vld [vmem:[#allocation2 + $0x30] sm:$0xff]
  %v1313 = vld [vmem:[#allocation2 + $0x38] sm:$0xff]
  %v1314 = vunpack.c.l.bf16 %v1312
  %v1315 = vunpack.c.h.bf16 %v1312
  %v1316 = vunpack.c.l.bf16 %v1313
  %v1317 = vunpack.c.h.bf16 %v1313
  %v1318 = vadd.f32 %v1314, %v440
  %v1319 = vadd.f32 %v1315, %v441
  %v1320 = vadd.f32 %v1316, %v442
  %v1321 = vadd.f32 %v1317, %v443
  %v1322 = vadd.f32 %v1318, %v1270
  %v1323 = vadd.f32 %v1319, %v1283
  %v1324 = vadd.f32 %v1320, %v1296
  %v1325 = vadd.f32 %v1321, %v1309
  %1326 = vst [vmem:[#allocation4] sm:$0xff] %v1322
  %1327 = vst [vmem:[#allocation4 + $0x8] sm:$0xff] %v1323
  %1328 = vst [vmem:[#allocation4 + $0x10] sm:$0xff] %v1324
  %1329 = vst [vmem:[#allocation4 + $0x18] sm:$0xff] %v1325
  %v1330 = vld [vmem:[#allocation4] sm:$0xff]
  %v1331 = vmul.f32 %v1330, 0.5
  %v1332 = vtanh.pop %v1331
  %v1333 = vmul.f32 %v1332, 0.5
  %v1334 = vadd.f32 %v1333, 0.5
  %v1335 = vld [vmem:[#allocation4 + $0x8] sm:$0xff]
  %v1336 = vmul.f32 %v1335, 0.5
  %v1337 = vtanh.pop %v1336
  %v1338 = vmul.f32 %v1337, 0.5
  %v1339 = vadd.f32 %v1338, 0.5
  %v1340 = vld [vmem:[#allocation4 + $0x10] sm:$0xff]
  %v1341 = vtanh.pop %v1340
  %v1342 = vld [vmem:[#allocation4 + $0x18] sm:$0xff]
  %v1343 = vmul.f32 %v1342, 0.5
  %v1344 = vtanh.pop %v1343
  %v1345 = vmul.f32 %v1344, 0.5
  %v1346 = vadd.f32 %v1345, 0.5
  %v1347 = vld [vmem:[#allocation5] sm:$0xff]
  %v1348 = vmul.f32 %v1339, %v1347
  %v1349 = vmul.f32 %v1334, %v1341
  %v1350 = vadd.f32 %v1348, %v1349
  %1351 = vst [vmem:[#allocation5] sm:$0xff] %v1350
  %v1352 = vld [vmem:[#allocation5] sm:$0xff]
  %v1353 = vtanh.pop %v1352
  %v1354 = vmul.f32 %v1346, %v1353
  %1355 = vst [vmem:[#allocation3 + $0x18] sm:$0xff] %v1354
  %v1356 = vld [vmem:[#allocation3 + $0x18] sm:$0xff]
  %v1357 = vpack.c.bf16 %v1356, %v1356
  %v1358 = vld [vmem:[%s3] sm:$0xff]
  %v1359 = vld [vmem:[%s3 + $0x8] sm:$0xff]
  %v1360 = vld [vmem:[%s3 + $0x10] sm:$0xff]
  %v1361 = vld [vmem:[%s3 + $0x18] sm:$0xff]
  %v1362 = vld [vmem:[%s3 + $0x20] sm:$0xff]
  %v1363 = vld [vmem:[%s3 + $0x28] sm:$0xff]
  %v1364 = vld [vmem:[%s3 + $0x30] sm:$0xff]
  %v1365 = vld [vmem:[%s3 + $0x38] sm:$0xff]
  %v1366 = vld [vmem:[%s3 + $0x40] sm:$0xff]
  %v1367 = vld [vmem:[%s3 + $0x48] sm:$0xff]
  %v1368 = vld [vmem:[%s3 + $0x50] sm:$0xff]
  %v1369 = vld [vmem:[%s3 + $0x58] sm:$0xff]
  %v1370 = vld [vmem:[%s3 + $0x60] sm:$0xff]
  %v1371 = vld [vmem:[%s3 + $0x68] sm:$0xff]
  %v1372 = vld [vmem:[%s3 + $0x70] sm:$0xff]
  %v1373 = vld [vmem:[%s3 + $0x78] sm:$0xff]
  %v1374 = vld [vmem:[%s3 + $0x80] sm:$0xff]
  %v1375 = vld [vmem:[%s3 + $0x88] sm:$0xff]
  %v1376 = vld [vmem:[%s3 + $0x90] sm:$0xff]
  %v1377 = vld [vmem:[%s3 + $0x98] sm:$0xff]
  %v1378 = vld [vmem:[%s3 + $0xa0] sm:$0xff]
  %v1379 = vld [vmem:[%s3 + $0xa8] sm:$0xff]
  %v1380 = vld [vmem:[%s3 + $0xb0] sm:$0xff]
  %v1381 = vld [vmem:[%s3 + $0xb8] sm:$0xff]
  %v1382 = vld [vmem:[%s3 + $0xc0] sm:$0xff]
  %v1383 = vld [vmem:[%s3 + $0xc8] sm:$0xff]
  %v1384 = vld [vmem:[%s3 + $0xd0] sm:$0xff]
  %v1385 = vld [vmem:[%s3 + $0xd8] sm:$0xff]
  %v1386 = vld [vmem:[%s3 + $0xe0] sm:$0xff]
  %v1387 = vld [vmem:[%s3 + $0xe8] sm:$0xff]
  %v1388 = vld [vmem:[%s3 + $0xf0] sm:$0xff]
  %v1389 = vld [vmem:[%s3 + $0xf8] sm:$0xff]
  %v1422 = vunpack.c.l.b16 %v1358
  %v1423 = vunpack.c.h.b16 %v1358
  %v1424 = vunpack.c.l.b16 %v1359
  %v1425 = vunpack.c.h.b16 %v1359
  %v1426 = vunpack.c.l.b16 %v1360
  %v1427 = vunpack.c.h.b16 %v1360
  %v1428 = vunpack.c.l.b16 %v1361
  %v1429 = vunpack.c.h.b16 %v1361
  %v1430 = vunpack.c.l.b16 %v1362
  %v1431 = vunpack.c.h.b16 %v1362
  %v1432 = vunpack.c.l.b16 %v1363
  %v1433 = vunpack.c.h.b16 %v1363
  %v1434 = vunpack.c.l.b16 %v1364
  %v1435 = vunpack.c.h.b16 %v1364
  %v1436 = vunpack.c.l.b16 %v1365
  %v1437 = vunpack.c.h.b16 %v1365
  %v1438 = vunpack.c.l.b16 %v1366
  %v1439 = vunpack.c.h.b16 %v1366
  %v1440 = vunpack.c.l.b16 %v1367
  %v1441 = vunpack.c.h.b16 %v1367
  %v1442 = vunpack.c.l.b16 %v1368
  %v1443 = vunpack.c.h.b16 %v1368
  %v1444 = vunpack.c.l.b16 %v1369
  %v1445 = vunpack.c.h.b16 %v1369
  %v1446 = vunpack.c.l.b16 %v1370
  %v1447 = vunpack.c.h.b16 %v1370
  %v1448 = vunpack.c.l.b16 %v1371
  %v1449 = vunpack.c.h.b16 %v1371
  %v1450 = vunpack.c.l.b16 %v1372
  %v1451 = vunpack.c.h.b16 %v1372
  %v1452 = vunpack.c.l.b16 %v1373
  %v1453 = vunpack.c.h.b16 %v1373
  %v1454 = vunpack.c.l.b16 %v1374
  %v1455 = vunpack.c.h.b16 %v1374
  %v1456 = vunpack.c.l.b16 %v1375
  %v1457 = vunpack.c.h.b16 %v1375
  %v1458 = vunpack.c.l.b16 %v1376
  %v1459 = vunpack.c.h.b16 %v1376
  %v1460 = vunpack.c.l.b16 %v1377
  %v1461 = vunpack.c.h.b16 %v1377
  %v1462 = vunpack.c.l.b16 %v1378
  %v1463 = vunpack.c.h.b16 %v1378
  %v1464 = vunpack.c.l.b16 %v1379
  %v1465 = vunpack.c.h.b16 %v1379
  %v1466 = vunpack.c.l.b16 %v1380
  %v1467 = vunpack.c.h.b16 %v1380
  %v1468 = vunpack.c.l.b16 %v1381
  %v1469 = vunpack.c.h.b16 %v1381
  %v1470 = vunpack.c.l.b16 %v1382
  %v1471 = vunpack.c.h.b16 %v1382
  %v1472 = vunpack.c.l.b16 %v1383
  %v1473 = vunpack.c.h.b16 %v1383
  %v1474 = vunpack.c.l.b16 %v1384
  %v1475 = vunpack.c.h.b16 %v1384
  %v1476 = vunpack.c.l.b16 %v1385
  %v1477 = vunpack.c.h.b16 %v1385
  %v1478 = vunpack.c.l.b16 %v1386
  %v1479 = vunpack.c.h.b16 %v1386
  %v1480 = vunpack.c.l.b16 %v1387
  %v1481 = vunpack.c.h.b16 %v1387
  %v1482 = vunpack.c.l.b16 %v1388
  %v1483 = vunpack.c.h.b16 %v1388
  %v1484 = vunpack.c.l.b16 %v1389
  %v1485 = vunpack.c.h.b16 %v1389
  %v1486 = vpack.c.b16 %v1426, %v1422
  %v1487 = vpack.c.b16 %v1427, %v1423
  %v1488 = vpack.c.b16 %v1428, %v1424
  %v1489 = vpack.c.b16 %v1429, %v1425
  %v1490 = vpack.c.b16 %v1434, %v1430
  %v1491 = vpack.c.b16 %v1435, %v1431
  %v1492 = vpack.c.b16 %v1436, %v1432
  %v1493 = vpack.c.b16 %v1437, %v1433
  %v1494 = vpack.c.b16 %v1442, %v1438
  %v1495 = vpack.c.b16 %v1443, %v1439
  %v1496 = vpack.c.b16 %v1444, %v1440
  %v1497 = vpack.c.b16 %v1445, %v1441
  %v1498 = vpack.c.b16 %v1450, %v1446
  %v1499 = vpack.c.b16 %v1451, %v1447
  %v1500 = vpack.c.b16 %v1452, %v1448
  %v1501 = vpack.c.b16 %v1453, %v1449
  %v1502 = vpack.c.b16 %v1458, %v1454
  %v1503 = vpack.c.b16 %v1459, %v1455
  %v1504 = vpack.c.b16 %v1460, %v1456
  %v1505 = vpack.c.b16 %v1461, %v1457
  %v1506 = vpack.c.b16 %v1466, %v1462
  %v1507 = vpack.c.b16 %v1467, %v1463
  %v1508 = vpack.c.b16 %v1468, %v1464
  %v1509 = vpack.c.b16 %v1469, %v1465
  %v1510 = vpack.c.b16 %v1474, %v1470
  %v1511 = vpack.c.b16 %v1475, %v1471
  %v1512 = vpack.c.b16 %v1476, %v1472
  %v1513 = vpack.c.b16 %v1477, %v1473
  %v1514 = vpack.c.b16 %v1482, %v1478
  %v1515 = vpack.c.b16 %v1483, %v1479
  %v1516 = vpack.c.b16 %v1484, %v1480
  %v1517 = vpack.c.b16 %v1485, %v1481
  %1550 = vmatpush.bf16.msra.mxu0 %v1514
  %1551 = vmatpush.bf16.msra.mxu0 %v1510
  %1552 = vmatpush.bf16.msra.mxu0 %v1506
  %1553 = vmatpush.bf16.msra.mxu0 %v1502
  %1554 = vmatpush.bf16.msra.mxu0 %v1498
  %1555 = vmatpush.bf16.msra.mxu0 %v1494
  %1556 = vmatpush.bf16.msra.mxu0 %v1490
  %1557 = vmatpush.bf16.msra.mxu0 %v1486
  %1558 = vmatmul.bf16.gmra.mxu0 %v1357
  %v1559 = vpop.f32.mrf.mxu0
  %v1560 = vadd.f32 0.0, %v1559
  %v1561 = vpop.f32.mrf.mxu0
  %1562 = vdwg.mxu0
  %1563 = vmatpush.bf16.msra.mxu0 %v1515
  %1564 = vmatpush.bf16.msra.mxu0 %v1511
  %1565 = vmatpush.bf16.msra.mxu0 %v1507
  %1566 = vmatpush.bf16.msra.mxu0 %v1503
  %1567 = vmatpush.bf16.msra.mxu0 %v1499
  %1568 = vmatpush.bf16.msra.mxu0 %v1495
  %1569 = vmatpush.bf16.msra.mxu0 %v1491
  %1570 = vmatpush.bf16.msra.mxu0 %v1487
  %1571 = vmatmul.bf16.gmra.mxu0 %v1357
  %v1572 = vpop.f32.mrf.mxu0
  %v1573 = vadd.f32 0.0, %v1572
  %v1574 = vpop.f32.mrf.mxu0
  %1575 = vdwg.mxu0
  %1576 = vmatpush.bf16.msra.mxu0 %v1516
  %1577 = vmatpush.bf16.msra.mxu0 %v1512
  %1578 = vmatpush.bf16.msra.mxu0 %v1508
  %1579 = vmatpush.bf16.msra.mxu0 %v1504
  %1580 = vmatpush.bf16.msra.mxu0 %v1500
  %1581 = vmatpush.bf16.msra.mxu0 %v1496
  %1582 = vmatpush.bf16.msra.mxu0 %v1492
  %1583 = vmatpush.bf16.msra.mxu0 %v1488
  %1584 = vmatmul.bf16.gmra.mxu0 %v1357
  %v1585 = vpop.f32.mrf.mxu0
  %v1586 = vadd.f32 0.0, %v1585
  %v1587 = vpop.f32.mrf.mxu0
  %1588 = vdwg.mxu0
  %1589 = vmatpush.bf16.msra.mxu0 %v1517
  %1590 = vmatpush.bf16.msra.mxu0 %v1513
  %1591 = vmatpush.bf16.msra.mxu0 %v1509
  %1592 = vmatpush.bf16.msra.mxu0 %v1505
  %1593 = vmatpush.bf16.msra.mxu0 %v1501
  %1594 = vmatpush.bf16.msra.mxu0 %v1497
  %1595 = vmatpush.bf16.msra.mxu0 %v1493
  %1596 = vmatpush.bf16.msra.mxu0 %v1489
  %1597 = vmatmul.bf16.gmra.mxu0 %v1357
  %v1598 = vpop.f32.mrf.mxu0
  %v1599 = vadd.f32 0.0, %v1598
  %v1600 = vpop.f32.mrf.mxu0
  %1601 = vdwg.mxu0
  %v1602 = vld [vmem:[#allocation2 + $0x40] sm:$0xff]
  %v1603 = vld [vmem:[#allocation2 + $0x48] sm:$0xff]
  %v1604 = vunpack.c.l.bf16 %v1602
  %v1605 = vunpack.c.h.bf16 %v1602
  %v1606 = vunpack.c.l.bf16 %v1603
  %v1607 = vunpack.c.h.bf16 %v1603
  %v1608 = vadd.f32 %v1604, %v440
  %v1609 = vadd.f32 %v1605, %v441
  %v1610 = vadd.f32 %v1606, %v442
  %v1611 = vadd.f32 %v1607, %v443
  %v1612 = vadd.f32 %v1608, %v1560
  %v1613 = vadd.f32 %v1609, %v1573
  %v1614 = vadd.f32 %v1610, %v1586
  %v1615 = vadd.f32 %v1611, %v1599
  %1616 = vst [vmem:[#allocation4] sm:$0xff] %v1612
  %1617 = vst [vmem:[#allocation4 + $0x8] sm:$0xff] %v1613
  %1618 = vst [vmem:[#allocation4 + $0x10] sm:$0xff] %v1614
  %1619 = vst [vmem:[#allocation4 + $0x18] sm:$0xff] %v1615
  %v1620 = vld [vmem:[#allocation4] sm:$0xff]
  %v1621 = vmul.f32 %v1620, 0.5
  %v1622 = vtanh.pop %v1621
  %v1623 = vmul.f32 %v1622, 0.5
  %v1624 = vadd.f32 %v1623, 0.5
  %v1625 = vld [vmem:[#allocation4 + $0x8] sm:$0xff]
  %v1626 = vmul.f32 %v1625, 0.5
  %v1627 = vtanh.pop %v1626
  %v1628 = vmul.f32 %v1627, 0.5
  %v1629 = vadd.f32 %v1628, 0.5
  %v1630 = vld [vmem:[#allocation4 + $0x10] sm:$0xff]
  %v1631 = vtanh.pop %v1630
  %v1632 = vld [vmem:[#allocation4 + $0x18] sm:$0xff]
  %v1633 = vmul.f32 %v1632, 0.5
  %v1634 = vtanh.pop %v1633
  %v1635 = vmul.f32 %v1634, 0.5
  %v1636 = vadd.f32 %v1635, 0.5
  %v1637 = vld [vmem:[#allocation5] sm:$0xff]
  %v1638 = vmul.f32 %v1629, %v1637
  %v1639 = vmul.f32 %v1624, %v1631
  %v1640 = vadd.f32 %v1638, %v1639
  %1641 = vst [vmem:[#allocation5] sm:$0xff] %v1640
  %v1642 = vld [vmem:[#allocation5] sm:$0xff]
  %v1643 = vtanh.pop %v1642
  %v1644 = vmul.f32 %v1636, %v1643
  %1645 = vst [vmem:[#allocation3 + $0x20] sm:$0xff] %v1644
  %v1646 = vld [vmem:[#allocation3 + $0x20] sm:$0xff]
  %v1647 = vpack.c.bf16 %v1646, %v1646
  %v1648 = vld [vmem:[%s3] sm:$0xff]
  %v1649 = vld [vmem:[%s3 + $0x8] sm:$0xff]
  %v1650 = vld [vmem:[%s3 + $0x10] sm:$0xff]
  %v1651 = vld [vmem:[%s3 + $0x18] sm:$0xff]
  %v1652 = vld [vmem:[%s3 + $0x20] sm:$0xff]
  %v1653 = vld [vmem:[%s3 + $0x28] sm:$0xff]
  %v1654 = vld [vmem:[%s3 + $0x30] sm:$0xff]
  %v1655 = vld [vmem:[%s3 + $0x38] sm:$0xff]
  %v1656 = vld [vmem:[%s3 + $0x40] sm:$0xff]
  %v1657 = vld [vmem:[%s3 + $0x48] sm:$0xff]
  %v1658 = vld [vmem:[%s3 + $0x50] sm:$0xff]
  %v1659 = vld [vmem:[%s3 + $0x58] sm:$0xff]
  %v1660 = vld [vmem:[%s3 + $0x60] sm:$0xff]
  %v1661 = vld [vmem:[%s3 + $0x68] sm:$0xff]
  %v1662 = vld [vmem:[%s3 + $0x70] sm:$0xff]
  %v1663 = vld [vmem:[%s3 + $0x78] sm:$0xff]
  %v1664 = vld [vmem:[%s3 + $0x80] sm:$0xff]
  %v1665 = vld [vmem:[%s3 + $0x88] sm:$0xff]
  %v1666 = vld [vmem:[%s3 + $0x90] sm:$0xff]
  %v1667 = vld [vmem:[%s3 + $0x98] sm:$0xff]
  %v1668 = vld [vmem:[%s3 + $0xa0] sm:$0xff]
  %v1669 = vld [vmem:[%s3 + $0xa8] sm:$0xff]
  %v1670 = vld [vmem:[%s3 + $0xb0] sm:$0xff]
  %v1671 = vld [vmem:[%s3 + $0xb8] sm:$0xff]
  %v1672 = vld [vmem:[%s3 + $0xc0] sm:$0xff]
  %v1673 = vld [vmem:[%s3 + $0xc8] sm:$0xff]
  %v1674 = vld [vmem:[%s3 + $0xd0] sm:$0xff]
  %v1675 = vld [vmem:[%s3 + $0xd8] sm:$0xff]
  %v1676 = vld [vmem:[%s3 + $0xe0] sm:$0xff]
  %v1677 = vld [vmem:[%s3 + $0xe8] sm:$0xff]
  %v1678 = vld [vmem:[%s3 + $0xf0] sm:$0xff]
  %v1679 = vld [vmem:[%s3 + $0xf8] sm:$0xff]
  %v1712 = vunpack.c.l.b16 %v1648
  %v1713 = vunpack.c.h.b16 %v1648
  %v1714 = vunpack.c.l.b16 %v1649
  %v1715 = vunpack.c.h.b16 %v1649
  %v1716 = vunpack.c.l.b16 %v1650
  %v1717 = vunpack.c.h.b16 %v1650
  %v1718 = vunpack.c.l.b16 %v1651
  %v1719 = vunpack.c.h.b16 %v1651
  %v1720 = vunpack.c.l.b16 %v1652
  %v1721 = vunpack.c.h.b16 %v1652
  %v1722 = vunpack.c.l.b16 %v1653
  %v1723 = vunpack.c.h.b16 %v1653
  %v1724 = vunpack.c.l.b16 %v1654
  %v1725 = vunpack.c.h.b16 %v1654
  %v1726 = vunpack.c.l.b16 %v1655
  %v1727 = vunpack.c.h.b16 %v1655
  %v1728 = vunpack.c.l.b16 %v1656
  %v1729 = vunpack.c.h.b16 %v1656
  %v1730 = vunpack.c.l.b16 %v1657
  %v1731 = vunpack.c.h.b16 %v1657
  %v1732 = vunpack.c.l.b16 %v1658
  %v1733 = vunpack.c.h.b16 %v1658
  %v1734 = vunpack.c.l.b16 %v1659
  %v1735 = vunpack.c.h.b16 %v1659
  %v1736 = vunpack.c.l.b16 %v1660
  %v1737 = vunpack.c.h.b16 %v1660
  %v1738 = vunpack.c.l.b16 %v1661
  %v1739 = vunpack.c.h.b16 %v1661
  %v1740 = vunpack.c.l.b16 %v1662
  %v1741 = vunpack.c.h.b16 %v1662
  %v1742 = vunpack.c.l.b16 %v1663
  %v1743 = vunpack.c.h.b16 %v1663
  %v1744 = vunpack.c.l.b16 %v1664
  %v1745 = vunpack.c.h.b16 %v1664
  %v1746 = vunpack.c.l.b16 %v1665
  %v1747 = vunpack.c.h.b16 %v1665
  %v1748 = vunpack.c.l.b16 %v1666
  %v1749 = vunpack.c.h.b16 %v1666
  %v1750 = vunpack.c.l.b16 %v1667
  %v1751 = vunpack.c.h.b16 %v1667
  %v1752 = vunpack.c.l.b16 %v1668
  %v1753 = vunpack.c.h.b16 %v1668
  %v1754 = vunpack.c.l.b16 %v1669
  %v1755 = vunpack.c.h.b16 %v1669
  %v1756 = vunpack.c.l.b16 %v1670
  %v1757 = vunpack.c.h.b16 %v1670
  %v1758 = vunpack.c.l.b16 %v1671
  %v1759 = vunpack.c.h.b16 %v1671
  %v1760 = vunpack.c.l.b16 %v1672
  %v1761 = vunpack.c.h.b16 %v1672
  %v1762 = vunpack.c.l.b16 %v1673
  %v1763 = vunpack.c.h.b16 %v1673
  %v1764 = vunpack.c.l.b16 %v1674
  %v1765 = vunpack.c.h.b16 %v1674
  %v1766 = vunpack.c.l.b16 %v1675
  %v1767 = vunpack.c.h.b16 %v1675
  %v1768 = vunpack.c.l.b16 %v1676
  %v1769 = vunpack.c.h.b16 %v1676
  %v1770 = vunpack.c.l.b16 %v1677
  %v1771 = vunpack.c.h.b16 %v1677
  %v1772 = vunpack.c.l.b16 %v1678
  %v1773 = vunpack.c.h.b16 %v1678
  %v1774 = vunpack.c.l.b16 %v1679
  %v1775 = vunpack.c.h.b16 %v1679
  %v1776 = vpack.c.b16 %v1716, %v1712
  %v1777 = vpack.c.b16 %v1717, %v1713
  %v1778 = vpack.c.b16 %v1718, %v1714
  %v1779 = vpack.c.b16 %v1719, %v1715
  %v1780 = vpack.c.b16 %v1724, %v1720
  %v1781 = vpack.c.b16 %v1725, %v1721
  %v1782 = vpack.c.b16 %v1726, %v1722
  %v1783 = vpack.c.b16 %v1727, %v1723
  %v1784 = vpack.c.b16 %v1732, %v1728
  %v1785 = vpack.c.b16 %v1733, %v1729
  %v1786 = vpack.c.b16 %v1734, %v1730
  %v1787 = vpack.c.b16 %v1735, %v1731
  %v1788 = vpack.c.b16 %v1740, %v1736
  %v1789 = vpack.c.b16 %v1741, %v1737
  %v1790 = vpack.c.b16 %v1742, %v1738
  %v1791 = vpack.c.b16 %v1743, %v1739
  %v1792 = vpack.c.b16 %v1748, %v1744
  %v1793 = vpack.c.b16 %v1749, %v1745
  %v1794 = vpack.c.b16 %v1750, %v1746
  %v1795 = vpack.c.b16 %v1751, %v1747
  %v1796 = vpack.c.b16 %v1756, %v1752
  %v1797 = vpack.c.b16 %v1757, %v1753
  %v1798 = vpack.c.b16 %v1758, %v1754
  %v1799 = vpack.c.b16 %v1759, %v1755
  %v1800 = vpack.c.b16 %v1764, %v1760
  %v1801 = vpack.c.b16 %v1765, %v1761
  %v1802 = vpack.c.b16 %v1766, %v1762
  %v1803 = vpack.c.b16 %v1767, %v1763
  %v1804 = vpack.c.b16 %v1772, %v1768
  %v1805 = vpack.c.b16 %v1773, %v1769
  %v1806 = vpack.c.b16 %v1774, %v1770
  %v1807 = vpack.c.b16 %v1775, %v1771
  %1840 = vmatpush.bf16.msra.mxu0 %v1804
  %1841 = vmatpush.bf16.msra.mxu0 %v1800
  %1842 = vmatpush.bf16.msra.mxu0 %v1796
  %1843 = vmatpush.bf16.msra.mxu0 %v1792
  %1844 = vmatpush.bf16.msra.mxu0 %v1788
  %1845 = vmatpush.bf16.msra.mxu0 %v1784
  %1846 = vmatpush.bf16.msra.mxu0 %v1780
  %1847 = vmatpush.bf16.msra.mxu0 %v1776
  %1848 = vmatmul.bf16.gmra.mxu0 %v1647
  %v1849 = vpop.f32.mrf.mxu0
  %v1850 = vadd.f32 0.0, %v1849
  %v1851 = vpop.f32.mrf.mxu0
  %1852 = vdwg.mxu0
  %1853 = vmatpush.bf16.msra.mxu0 %v1805
  %1854 = vmatpush.bf16.msra.mxu0 %v1801
  %1855 = vmatpush.bf16.msra.mxu0 %v1797
  %1856 = vmatpush.bf16.msra.mxu0 %v1793
  %1857 = vmatpush.bf16.msra.mxu0 %v1789
  %1858 = vmatpush.bf16.msra.mxu0 %v1785
  %1859 = vmatpush.bf16.msra.mxu0 %v1781
  %1860 = vmatpush.bf16.msra.mxu0 %v1777
  %1861 = vmatmul.bf16.gmra.mxu0 %v1647
  %v1862 = vpop.f32.mrf.mxu0
  %v1863 = vadd.f32 0.0, %v1862
  %v1864 = vpop.f32.mrf.mxu0
  %1865 = vdwg.mxu0
  %1866 = vmatpush.bf16.msra.mxu0 %v1806
  %1867 = vmatpush.bf16.msra.mxu0 %v1802
  %1868 = vmatpush.bf16.msra.mxu0 %v1798
  %1869 = vmatpush.bf16.msra.mxu0 %v1794
  %1870 = vmatpush.bf16.msra.mxu0 %v1790
  %1871 = vmatpush.bf16.msra.mxu0 %v1786
  %1872 = vmatpush.bf16.msra.mxu0 %v1782
  %1873 = vmatpush.bf16.msra.mxu0 %v1778
  %1874 = vmatmul.bf16.gmra.mxu0 %v1647
  %v1875 = vpop.f32.mrf.mxu0
  %v1876 = vadd.f32 0.0, %v1875
  %v1877 = vpop.f32.mrf.mxu0
  %1878 = vdwg.mxu0
  %1879 = vmatpush.bf16.msra.mxu0 %v1807
  %1880 = vmatpush.bf16.msra.mxu0 %v1803
  %1881 = vmatpush.bf16.msra.mxu0 %v1799
  %1882 = vmatpush.bf16.msra.mxu0 %v1795
  %1883 = vmatpush.bf16.msra.mxu0 %v1791
  %1884 = vmatpush.bf16.msra.mxu0 %v1787
  %1885 = vmatpush.bf16.msra.mxu0 %v1783
  %1886 = vmatpush.bf16.msra.mxu0 %v1779
  %1887 = vmatmul.bf16.gmra.mxu0 %v1647
  %v1888 = vpop.f32.mrf.mxu0
  %v1889 = vadd.f32 0.0, %v1888
  %v1890 = vpop.f32.mrf.mxu0
  %1891 = vdwg.mxu0
  %v1892 = vld [vmem:[#allocation2 + $0x50] sm:$0xff]
  %v1893 = vld [vmem:[#allocation2 + $0x58] sm:$0xff]
  %v1894 = vunpack.c.l.bf16 %v1892
  %v1895 = vunpack.c.h.bf16 %v1892
  %v1896 = vunpack.c.l.bf16 %v1893
  %v1897 = vunpack.c.h.bf16 %v1893
  %v1898 = vadd.f32 %v1894, %v440
  %v1899 = vadd.f32 %v1895, %v441
  %v1900 = vadd.f32 %v1896, %v442
  %v1901 = vadd.f32 %v1897, %v443
  %v1902 = vadd.f32 %v1898, %v1850
  %v1903 = vadd.f32 %v1899, %v1863
  %v1904 = vadd.f32 %v1900, %v1876
  %v1905 = vadd.f32 %v1901, %v1889
  %1906 = vst [vmem:[#allocation4] sm:$0xff] %v1902
  %1907 = vst [vmem:[#allocation4 + $0x8] sm:$0xff] %v1903
  %1908 = vst [vmem:[#allocation4 + $0x10] sm:$0xff] %v1904
  %1909 = vst [vmem:[#allocation4 + $0x18] sm:$0xff] %v1905
  %v1910 = vld [vmem:[#allocation4] sm:$0xff]
  %v1911 = vmul.f32 %v1910, 0.5
  %v1912 = vtanh.pop %v1911
  %v1913 = vmul.f32 %v1912, 0.5
  %v1914 = vadd.f32 %v1913, 0.5
  %v1915 = vld [vmem:[#allocation4 + $0x8] sm:$0xff]
  %v1916 = vmul.f32 %v1915, 0.5
  %v1917 = vtanh.pop %v1916
  %v1918 = vmul.f32 %v1917, 0.5
  %v1919 = vadd.f32 %v1918, 0.5
  %v1920 = vld [vmem:[#allocation4 + $0x10] sm:$0xff]
  %v1921 = vtanh.pop %v1920
  %v1922 = vld [vmem:[#allocation4 + $0x18] sm:$0xff]
  %v1923 = vmul.f32 %v1922, 0.5
  %v1924 = vtanh.pop %v1923
  %v1925 = vmul.f32 %v1924, 0.5
  %v1926 = vadd.f32 %v1925, 0.5
  %v1927 = vld [vmem:[#allocation5] sm:$0xff]
  %v1928 = vmul.f32 %v1919, %v1927
  %v1929 = vmul.f32 %v1914, %v1921
  %v1930 = vadd.f32 %v1928, %v1929
  %1931 = vst [vmem:[#allocation5] sm:$0xff] %v1930
  %v1932 = vld [vmem:[#allocation5] sm:$0xff]
  %v1933 = vtanh.pop %v1932
  %v1934 = vmul.f32 %v1926, %v1933
  %1935 = vst [vmem:[#allocation3 + $0x28] sm:$0xff] %v1934
  %v1936 = vld [vmem:[#allocation3 + $0x28] sm:$0xff]
  %v1937 = vpack.c.bf16 %v1936, %v1936
  %v1938 = vld [vmem:[%s3] sm:$0xff]
  %v1939 = vld [vmem:[%s3 + $0x8] sm:$0xff]
  %v1940 = vld [vmem:[%s3 + $0x10] sm:$0xff]
  %v1941 = vld [vmem:[%s3 + $0x18] sm:$0xff]
  %v1942 = vld [vmem:[%s3 + $0x20] sm:$0xff]
  %v1943 = vld [vmem:[%s3 + $0x28] sm:$0xff]
  %v1944 = vld [vmem:[%s3 + $0x30] sm:$0xff]
  %v1945 = vld [vmem:[%s3 + $0x38] sm:$0xff]
  %v1946 = vld [vmem:[%s3 + $0x40] sm:$0xff]
  %v1947 = vld [vmem:[%s3 + $0x48] sm:$0xff]
  %v1948 = vld [vmem:[%s3 + $0x50] sm:$0xff]
  %v1949 = vld [vmem:[%s3 + $0x58] sm:$0xff]
  %v1950 = vld [vmem:[%s3 + $0x60] sm:$0xff]
  %v1951 = vld [vmem:[%s3 + $0x68] sm:$0xff]
  %v1952 = vld [vmem:[%s3 + $0x70] sm:$0xff]
  %v1953 = vld [vmem:[%s3 + $0x78] sm:$0xff]
  %v1954 = vld [vmem:[%s3 + $0x80] sm:$0xff]
  %v1955 = vld [vmem:[%s3 + $0x88] sm:$0xff]
  %v1956 = vld [vmem:[%s3 + $0x90] sm:$0xff]
  %v1957 = vld [vmem:[%s3 + $0x98] sm:$0xff]
  %v1958 = vld [vmem:[%s3 + $0xa0] sm:$0xff]
  %v1959 = vld [vmem:[%s3 + $0xa8] sm:$0xff]
  %v1960 = vld [vmem:[%s3 + $0xb0] sm:$0xff]
  %v1961 = vld [vmem:[%s3 + $0xb8] sm:$0xff]
  %v1962 = vld [vmem:[%s3 + $0xc0] sm:$0xff]
  %v1963 = vld [vmem:[%s3 + $0xc8] sm:$0xff]
  %v1964 = vld [vmem:[%s3 + $0xd0] sm:$0xff]
  %v1965 = vld [vmem:[%s3 + $0xd8] sm:$0xff]
  %v1966 = vld [vmem:[%s3 + $0xe0] sm:$0xff]
  %v1967 = vld [vmem:[%s3 + $0xe8] sm:$0xff]
  %v1968 = vld [vmem:[%s3 + $0xf0] sm:$0xff]
  %v1969 = vld [vmem:[%s3 + $0xf8] sm:$0xff]
  %v2002 = vunpack.c.l.b16 %v1938
  %v2003 = vunpack.c.h.b16 %v1938
  %v2004 = vunpack.c.l.b16 %v1939
  %v2005 = vunpack.c.h.b16 %v1939
  %v2006 = vunpack.c.l.b16 %v1940
  %v2007 = vunpack.c.h.b16 %v1940
  %v2008 = vunpack.c.l.b16 %v1941
  %v2009 = vunpack.c.h.b16 %v1941
  %v2010 = vunpack.c.l.b16 %v1942
  %v2011 = vunpack.c.h.b16 %v1942
  %v2012 = vunpack.c.l.b16 %v1943
  %v2013 = vunpack.c.h.b16 %v1943
  %v2014 = vunpack.c.l.b16 %v1944
  %v2015 = vunpack.c.h.b16 %v1944
  %v2016 = vunpack.c.l.b16 %v1945
  %v2017 = vunpack.c.h.b16 %v1945
  %v2018 = vunpack.c.l.b16 %v1946
  %v2019 = vunpack.c.h.b16 %v1946
  %v2020 = vunpack.c.l.b16 %v1947
  %v2021 = vunpack.c.h.b16 %v1947
  %v2022 = vunpack.c.l.b16 %v1948
  %v2023 = vunpack.c.h.b16 %v1948
  %v2024 = vunpack.c.l.b16 %v1949
  %v2025 = vunpack.c.h.b16 %v1949
  %v2026 = vunpack.c.l.b16 %v1950
  %v2027 = vunpack.c.h.b16 %v1950
  %v2028 = vunpack.c.l.b16 %v1951
  %v2029 = vunpack.c.h.b16 %v1951
  %v2030 = vunpack.c.l.b16 %v1952
  %v2031 = vunpack.c.h.b16 %v1952
  %v2032 = vunpack.c.l.b16 %v1953
  %v2033 = vunpack.c.h.b16 %v1953
  %v2034 = vunpack.c.l.b16 %v1954
  %v2035 = vunpack.c.h.b16 %v1954
  %v2036 = vunpack.c.l.b16 %v1955
  %v2037 = vunpack.c.h.b16 %v1955
  %v2038 = vunpack.c.l.b16 %v1956
  %v2039 = vunpack.c.h.b16 %v1956
  %v2040 = vunpack.c.l.b16 %v1957
  %v2041 = vunpack.c.h.b16 %v1957
  %v2042 = vunpack.c.l.b16 %v1958
  %v2043 = vunpack.c.h.b16 %v1958
  %v2044 = vunpack.c.l.b16 %v1959
  %v2045 = vunpack.c.h.b16 %v1959
  %v2046 = vunpack.c.l.b16 %v1960
  %v2047 = vunpack.c.h.b16 %v1960
  %v2048 = vunpack.c.l.b16 %v1961
  %v2049 = vunpack.c.h.b16 %v1961
  %v2050 = vunpack.c.l.b16 %v1962
  %v2051 = vunpack.c.h.b16 %v1962
  %v2052 = vunpack.c.l.b16 %v1963
  %v2053 = vunpack.c.h.b16 %v1963
  %v2054 = vunpack.c.l.b16 %v1964
  %v2055 = vunpack.c.h.b16 %v1964
  %v2056 = vunpack.c.l.b16 %v1965
  %v2057 = vunpack.c.h.b16 %v1965
  %v2058 = vunpack.c.l.b16 %v1966
  %v2059 = vunpack.c.h.b16 %v1966
  %v2060 = vunpack.c.l.b16 %v1967
  %v2061 = vunpack.c.h.b16 %v1967
  %v2062 = vunpack.c.l.b16 %v1968
  %v2063 = vunpack.c.h.b16 %v1968
  %v2064 = vunpack.c.l.b16 %v1969
  %v2065 = vunpack.c.h.b16 %v1969
  %v2066 = vpack.c.b16 %v2006, %v2002
  %v2067 = vpack.c.b16 %v2007, %v2003
  %v2068 = vpack.c.b16 %v2008, %v2004
  %v2069 = vpack.c.b16 %v2009, %v2005
  %v2070 = vpack.c.b16 %v2014, %v2010
  %v2071 = vpack.c.b16 %v2015, %v2011
  %v2072 = vpack.c.b16 %v2016, %v2012
  %v2073 = vpack.c.b16 %v2017, %v2013
  %v2074 = vpack.c.b16 %v2022, %v2018
  %v2075 = vpack.c.b16 %v2023, %v2019
  %v2076 = vpack.c.b16 %v2024, %v2020
  %v2077 = vpack.c.b16 %v2025, %v2021
  %v2078 = vpack.c.b16 %v2030, %v2026
  %v2079 = vpack.c.b16 %v2031, %v2027
  %v2080 = vpack.c.b16 %v2032, %v2028
  %v2081 = vpack.c.b16 %v2033, %v2029
  %v2082 = vpack.c.b16 %v2038, %v2034
  %v2083 = vpack.c.b16 %v2039, %v2035
  %v2084 = vpack.c.b16 %v2040, %v2036
  %v2085 = vpack.c.b16 %v2041, %v2037
  %v2086 = vpack.c.b16 %v2046, %v2042
  %v2087 = vpack.c.b16 %v2047, %v2043
  %v2088 = vpack.c.b16 %v2048, %v2044
  %v2089 = vpack.c.b16 %v2049, %v2045
  %v2090 = vpack.c.b16 %v2054, %v2050
  %v2091 = vpack.c.b16 %v2055, %v2051
  %v2092 = vpack.c.b16 %v2056, %v2052
  %v2093 = vpack.c.b16 %v2057, %v2053
  %v2094 = vpack.c.b16 %v2062, %v2058
  %v2095 = vpack.c.b16 %v2063, %v2059
  %v2096 = vpack.c.b16 %v2064, %v2060
  %v2097 = vpack.c.b16 %v2065, %v2061
  %2130 = vmatpush.bf16.msra.mxu0 %v2094
  %2131 = vmatpush.bf16.msra.mxu0 %v2090
  %2132 = vmatpush.bf16.msra.mxu0 %v2086
  %2133 = vmatpush.bf16.msra.mxu0 %v2082
  %2134 = vmatpush.bf16.msra.mxu0 %v2078
  %2135 = vmatpush.bf16.msra.mxu0 %v2074
  %2136 = vmatpush.bf16.msra.mxu0 %v2070
  %2137 = vmatpush.bf16.msra.mxu0 %v2066
  %2138 = vmatmul.bf16.gmra.mxu0 %v1937
  %v2139 = vpop.f32.mrf.mxu0
  %v2140 = vadd.f32 0.0, %v2139
  %v2141 = vpop.f32.mrf.mxu0
  %2142 = vdwg.mxu0
  %2143 = vmatpush.bf16.msra.mxu0 %v2095
  %2144 = vmatpush.bf16.msra.mxu0 %v2091
  %2145 = vmatpush.bf16.msra.mxu0 %v2087
  %2146 = vmatpush.bf16.msra.mxu0 %v2083
  %2147 = vmatpush.bf16.msra.mxu0 %v2079
  %2148 = vmatpush.bf16.msra.mxu0 %v2075
  %2149 = vmatpush.bf16.msra.mxu0 %v2071
  %2150 = vmatpush.bf16.msra.mxu0 %v2067
  %2151 = vmatmul.bf16.gmra.mxu0 %v1937
  %v2152 = vpop.f32.mrf.mxu0
  %v2153 = vadd.f32 0.0, %v2152
  %v2154 = vpop.f32.mrf.mxu0
  %2155 = vdwg.mxu0
  %2156 = vmatpush.bf16.msra.mxu0 %v2096
  %2157 = vmatpush.bf16.msra.mxu0 %v2092
  %2158 = vmatpush.bf16.msra.mxu0 %v2088
  %2159 = vmatpush.bf16.msra.mxu0 %v2084
  %2160 = vmatpush.bf16.msra.mxu0 %v2080
  %2161 = vmatpush.bf16.msra.mxu0 %v2076
  %2162 = vmatpush.bf16.msra.mxu0 %v2072
  %2163 = vmatpush.bf16.msra.mxu0 %v2068
  %2164 = vmatmul.bf16.gmra.mxu0 %v1937
  %v2165 = vpop.f32.mrf.mxu0
  %v2166 = vadd.f32 0.0, %v2165
  %v2167 = vpop.f32.mrf.mxu0
  %2168 = vdwg.mxu0
  %2169 = vmatpush.bf16.msra.mxu0 %v2097
  %2170 = vmatpush.bf16.msra.mxu0 %v2093
  %2171 = vmatpush.bf16.msra.mxu0 %v2089
  %2172 = vmatpush.bf16.msra.mxu0 %v2085
  %2173 = vmatpush.bf16.msra.mxu0 %v2081
  %2174 = vmatpush.bf16.msra.mxu0 %v2077
  %2175 = vmatpush.bf16.msra.mxu0 %v2073
  %2176 = vmatpush.bf16.msra.mxu0 %v2069
  %2177 = vmatmul.bf16.gmra.mxu0 %v1937
  %v2178 = vpop.f32.mrf.mxu0
  %v2179 = vadd.f32 0.0, %v2178
  %v2180 = vpop.f32.mrf.mxu0
  %2181 = vdwg.mxu0
  %v2182 = vld [vmem:[#allocation2 + $0x60] sm:$0xff]
  %v2183 = vld [vmem:[#allocation2 + $0x68] sm:$0xff]
  %v2184 = vunpack.c.l.bf16 %v2182
  %v2185 = vunpack.c.h.bf16 %v2182
  %v2186 = vunpack.c.l.bf16 %v2183
  %v2187 = vunpack.c.h.bf16 %v2183
  %v2188 = vadd.f32 %v2184, %v440
  %v2189 = vadd.f32 %v2185, %v441
  %v2190 = vadd.f32 %v2186, %v442
  %v2191 = vadd.f32 %v2187, %v443
  %v2192 = vadd.f32 %v2188, %v2140
  %v2193 = vadd.f32 %v2189, %v2153
  %v2194 = vadd.f32 %v2190, %v2166
  %v2195 = vadd.f32 %v2191, %v2179
  %2196 = vst [vmem:[#allocation4] sm:$0xff] %v2192
  %2197 = vst [vmem:[#allocation4 + $0x8] sm:$0xff] %v2193
  %2198 = vst [vmem:[#allocation4 + $0x10] sm:$0xff] %v2194
  %2199 = vst [vmem:[#allocation4 + $0x18] sm:$0xff] %v2195
  %v2200 = vld [vmem:[#allocation4] sm:$0xff]
  %v2201 = vmul.f32 %v2200, 0.5
  %v2202 = vtanh.pop %v2201
  %v2203 = vmul.f32 %v2202, 0.5
  %v2204 = vadd.f32 %v2203, 0.5
  %v2205 = vld [vmem:[#allocation4 + $0x8] sm:$0xff]
  %v2206 = vmul.f32 %v2205, 0.5
  %v2207 = vtanh.pop %v2206
  %v2208 = vmul.f32 %v2207, 0.5
  %v2209 = vadd.f32 %v2208, 0.5
  %v2210 = vld [vmem:[#allocation4 + $0x10] sm:$0xff]
  %v2211 = vtanh.pop %v2210
  %v2212 = vld [vmem:[#allocation4 + $0x18] sm:$0xff]
  %v2213 = vmul.f32 %v2212, 0.5
  %v2214 = vtanh.pop %v2213
  %v2215 = vmul.f32 %v2214, 0.5
  %v2216 = vadd.f32 %v2215, 0.5
  %v2217 = vld [vmem:[#allocation5] sm:$0xff]
  %v2218 = vmul.f32 %v2209, %v2217
  %v2219 = vmul.f32 %v2204, %v2211
  %v2220 = vadd.f32 %v2218, %v2219
  %2221 = vst [vmem:[#allocation5] sm:$0xff] %v2220
  %v2222 = vld [vmem:[#allocation5] sm:$0xff]
  %v2223 = vtanh.pop %v2222
  %v2224 = vmul.f32 %v2216, %v2223
  %2225 = vst [vmem:[#allocation3 + $0x30] sm:$0xff] %v2224
  %v2226 = vld [vmem:[#allocation3 + $0x30] sm:$0xff]
  %v2227 = vpack.c.bf16 %v2226, %v2226
  %v2228 = vld [vmem:[%s3] sm:$0xff]
  %v2229 = vld [vmem:[%s3 + $0x8] sm:$0xff]
  %v2230 = vld [vmem:[%s3 + $0x10] sm:$0xff]
  %v2231 = vld [vmem:[%s3 + $0x18] sm:$0xff]
  %v2232 = vld [vmem:[%s3 + $0x20] sm:$0xff]
  %v2233 = vld [vmem:[%s3 + $0x28] sm:$0xff]
  %v2234 = vld [vmem:[%s3 + $0x30] sm:$0xff]
  %v2235 = vld [vmem:[%s3 + $0x38] sm:$0xff]
  %v2236 = vld [vmem:[%s3 + $0x40] sm:$0xff]
  %v2237 = vld [vmem:[%s3 + $0x48] sm:$0xff]
  %v2238 = vld [vmem:[%s3 + $0x50] sm:$0xff]
  %v2239 = vld [vmem:[%s3 + $0x58] sm:$0xff]
  %v2240 = vld [vmem:[%s3 + $0x60] sm:$0xff]
  %v2241 = vld [vmem:[%s3 + $0x68] sm:$0xff]
  %v2242 = vld [vmem:[%s3 + $0x70] sm:$0xff]
  %v2243 = vld [vmem:[%s3 + $0x78] sm:$0xff]
  %v2244 = vld [vmem:[%s3 + $0x80] sm:$0xff]
  %v2245 = vld [vmem:[%s3 + $0x88] sm:$0xff]
  %v2246 = vld [vmem:[%s3 + $0x90] sm:$0xff]
  %v2247 = vld [vmem:[%s3 + $0x98] sm:$0xff]
  %v2248 = vld [vmem:[%s3 + $0xa0] sm:$0xff]
  %v2249 = vld [vmem:[%s3 + $0xa8] sm:$0xff]
  %v2250 = vld [vmem:[%s3 + $0xb0] sm:$0xff]
  %v2251 = vld [vmem:[%s3 + $0xb8] sm:$0xff]
  %v2252 = vld [vmem:[%s3 + $0xc0] sm:$0xff]
  %v2253 = vld [vmem:[%s3 + $0xc8] sm:$0xff]
  %v2254 = vld [vmem:[%s3 + $0xd0] sm:$0xff]
  %v2255 = vld [vmem:[%s3 + $0xd8] sm:$0xff]
  %v2256 = vld [vmem:[%s3 + $0xe0] sm:$0xff]
  %v2257 = vld [vmem:[%s3 + $0xe8] sm:$0xff]
  %v2258 = vld [vmem:[%s3 + $0xf0] sm:$0xff]
  %v2259 = vld [vmem:[%s3 + $0xf8] sm:$0xff]
  %v2292 = vunpack.c.l.b16 %v2228
  %v2293 = vunpack.c.h.b16 %v2228
  %v2294 = vunpack.c.l.b16 %v2229
  %v2295 = vunpack.c.h.b16 %v2229
  %v2296 = vunpack.c.l.b16 %v2230
  %v2297 = vunpack.c.h.b16 %v2230
  %v2298 = vunpack.c.l.b16 %v2231
  %v2299 = vunpack.c.h.b16 %v2231
  %v2300 = vunpack.c.l.b16 %v2232
  %v2301 = vunpack.c.h.b16 %v2232
  %v2302 = vunpack.c.l.b16 %v2233
  %v2303 = vunpack.c.h.b16 %v2233
  %v2304 = vunpack.c.l.b16 %v2234
  %v2305 = vunpack.c.h.b16 %v2234
  %v2306 = vunpack.c.l.b16 %v2235
  %v2307 = vunpack.c.h.b16 %v2235
  %v2308 = vunpack.c.l.b16 %v2236
  %v2309 = vunpack.c.h.b16 %v2236
  %v2310 = vunpack.c.l.b16 %v2237
  %v2311 = vunpack.c.h.b16 %v2237
  %v2312 = vunpack.c.l.b16 %v2238
  %v2313 = vunpack.c.h.b16 %v2238
  %v2314 = vunpack.c.l.b16 %v2239
  %v2315 = vunpack.c.h.b16 %v2239
  %v2316 = vunpack.c.l.b16 %v2240
  %v2317 = vunpack.c.h.b16 %v2240
  %v2318 = vunpack.c.l.b16 %v2241
  %v2319 = vunpack.c.h.b16 %v2241
  %v2320 = vunpack.c.l.b16 %v2242
  %v2321 = vunpack.c.h.b16 %v2242
  %v2322 = vunpack.c.l.b16 %v2243
  %v2323 = vunpack.c.h.b16 %v2243
  %v2324 = vunpack.c.l.b16 %v2244
  %v2325 = vunpack.c.h.b16 %v2244
  %v2326 = vunpack.c.l.b16 %v2245
  %v2327 = vunpack.c.h.b16 %v2245
  %v2328 = vunpack.c.l.b16 %v2246
  %v2329 = vunpack.c.h.b16 %v2246
  %v2330 = vunpack.c.l.b16 %v2247
  %v2331 = vunpack.c.h.b16 %v2247
  %v2332 = vunpack.c.l.b16 %v2248
  %v2333 = vunpack.c.h.b16 %v2248
  %v2334 = vunpack.c.l.b16 %v2249
  %v2335 = vunpack.c.h.b16 %v2249
  %v2336 = vunpack.c.l.b16 %v2250
  %v2337 = vunpack.c.h.b16 %v2250
  %v2338 = vunpack.c.l.b16 %v2251
  %v2339 = vunpack.c.h.b16 %v2251
  %v2340 = vunpack.c.l.b16 %v2252
  %v2341 = vunpack.c.h.b16 %v2252
  %v2342 = vunpack.c.l.b16 %v2253
  %v2343 = vunpack.c.h.b16 %v2253
  %v2344 = vunpack.c.l.b16 %v2254
  %v2345 = vunpack.c.h.b16 %v2254
  %v2346 = vunpack.c.l.b16 %v2255
  %v2347 = vunpack.c.h.b16 %v2255
  %v2348 = vunpack.c.l.b16 %v2256
  %v2349 = vunpack.c.h.b16 %v2256
  %v2350 = vunpack.c.l.b16 %v2257
  %v2351 = vunpack.c.h.b16 %v2257
  %v2352 = vunpack.c.l.b16 %v2258
  %v2353 = vunpack.c.h.b16 %v2258
  %v2354 = vunpack.c.l.b16 %v2259
  %v2355 = vunpack.c.h.b16 %v2259
  %v2356 = vpack.c.b16 %v2296, %v2292
  %v2357 = vpack.c.b16 %v2297, %v2293
  %v2358 = vpack.c.b16 %v2298, %v2294
  %v2359 = vpack.c.b16 %v2299, %v2295
  %v2360 = vpack.c.b16 %v2304, %v2300
  %v2361 = vpack.c.b16 %v2305, %v2301
  %v2362 = vpack.c.b16 %v2306, %v2302
  %v2363 = vpack.c.b16 %v2307, %v2303
  %v2364 = vpack.c.b16 %v2312, %v2308
  %v2365 = vpack.c.b16 %v2313, %v2309
  %v2366 = vpack.c.b16 %v2314, %v2310
  %v2367 = vpack.c.b16 %v2315, %v2311
  %v2368 = vpack.c.b16 %v2320, %v2316
  %v2369 = vpack.c.b16 %v2321, %v2317
  %v2370 = vpack.c.b16 %v2322, %v2318
  %v2371 = vpack.c.b16 %v2323, %v2319
  %v2372 = vpack.c.b16 %v2328, %v2324
  %v2373 = vpack.c.b16 %v2329, %v2325
  %v2374 = vpack.c.b16 %v2330, %v2326
  %v2375 = vpack.c.b16 %v2331, %v2327
  %v2376 = vpack.c.b16 %v2336, %v2332
  %v2377 = vpack.c.b16 %v2337, %v2333
  %v2378 = vpack.c.b16 %v2338, %v2334
  %v2379 = vpack.c.b16 %v2339, %v2335
  %v2380 = vpack.c.b16 %v2344, %v2340
  %v2381 = vpack.c.b16 %v2345, %v2341
  %v2382 = vpack.c.b16 %v2346, %v2342
  %v2383 = vpack.c.b16 %v2347, %v2343
  %v2384 = vpack.c.b16 %v2352, %v2348
  %v2385 = vpack.c.b16 %v2353, %v2349
  %v2386 = vpack.c.b16 %v2354, %v2350
  %v2387 = vpack.c.b16 %v2355, %v2351
  %2420 = vmatpush.bf16.msra.mxu0 %v2384
  %2421 = vmatpush.bf16.msra.mxu0 %v2380
  %2422 = vmatpush.bf16.msra.mxu0 %v2376
  %2423 = vmatpush.bf16.msra.mxu0 %v2372
  %2424 = vmatpush.bf16.msra.mxu0 %v2368
  %2425 = vmatpush.bf16.msra.mxu0 %v2364
  %2426 = vmatpush.bf16.msra.mxu0 %v2360
  %2427 = vmatpush.bf16.msra.mxu0 %v2356
  %2428 = vmatmul.bf16.gmra.mxu0 %v2227
  %v2429 = vpop.f32.mrf.mxu0
  %v2430 = vadd.f32 0.0, %v2429
  %v2431 = vpop.f32.mrf.mxu0
  %2432 = vdwg.mxu0
  %2433 = vmatpush.bf16.msra.mxu0 %v2385
  %2434 = vmatpush.bf16.msra.mxu0 %v2381
  %2435 = vmatpush.bf16.msra.mxu0 %v2377
  %2436 = vmatpush.bf16.msra.mxu0 %v2373
  %2437 = vmatpush.bf16.msra.mxu0 %v2369
  %2438 = vmatpush.bf16.msra.mxu0 %v2365
  %2439 = vmatpush.bf16.msra.mxu0 %v2361
  %2440 = vmatpush.bf16.msra.mxu0 %v2357
  %2441 = vmatmul.bf16.gmra.mxu0 %v2227
  %v2442 = vpop.f32.mrf.mxu0
  %v2443 = vadd.f32 0.0, %v2442
  %v2444 = vpop.f32.mrf.mxu0
  %2445 = vdwg.mxu0
  %2446 = vmatpush.bf16.msra.mxu0 %v2386
  %2447 = vmatpush.bf16.msra.mxu0 %v2382
  %2448 = vmatpush.bf16.msra.mxu0 %v2378
  %2449 = vmatpush.bf16.msra.mxu0 %v2374
  %2450 = vmatpush.bf16.msra.mxu0 %v2370
  %2451 = vmatpush.bf16.msra.mxu0 %v2366
  %2452 = vmatpush.bf16.msra.mxu0 %v2362
  %2453 = vmatpush.bf16.msra.mxu0 %v2358
  %2454 = vmatmul.bf16.gmra.mxu0 %v2227
  %v2455 = vpop.f32.mrf.mxu0
  %v2456 = vadd.f32 0.0, %v2455
  %v2457 = vpop.f32.mrf.mxu0
  %2458 = vdwg.mxu0
  %2459 = vmatpush.bf16.msra.mxu0 %v2387
  %2460 = vmatpush.bf16.msra.mxu0 %v2383
  %2461 = vmatpush.bf16.msra.mxu0 %v2379
  %2462 = vmatpush.bf16.msra.mxu0 %v2375
  %2463 = vmatpush.bf16.msra.mxu0 %v2371
  %2464 = vmatpush.bf16.msra.mxu0 %v2367
  %2465 = vmatpush.bf16.msra.mxu0 %v2363
  %2466 = vmatpush.bf16.msra.mxu0 %v2359
  %2467 = vmatmul.bf16.gmra.mxu0 %v2227
  %v2468 = vpop.f32.mrf.mxu0
  %v2469 = vadd.f32 0.0, %v2468
  %v2470 = vpop.f32.mrf.mxu0
  %2471 = vdwg.mxu0
  %v2472 = vld [vmem:[#allocation2 + $0x70] sm:$0xff]
  %v2473 = vld [vmem:[#allocation2 + $0x78] sm:$0xff]
  %v2474 = vunpack.c.l.bf16 %v2472
  %v2475 = vunpack.c.h.bf16 %v2472
  %v2476 = vunpack.c.l.bf16 %v2473
  %v2477 = vunpack.c.h.bf16 %v2473
  %v2478 = vadd.f32 %v2474, %v440
  %v2479 = vadd.f32 %v2475, %v441
  %v2480 = vadd.f32 %v2476, %v442
  %v2481 = vadd.f32 %v2477, %v443
  %v2482 = vadd.f32 %v2478, %v2430
  %v2483 = vadd.f32 %v2479, %v2443
  %v2484 = vadd.f32 %v2480, %v2456
  %v2485 = vadd.f32 %v2481, %v2469
  %2486 = vst [vmem:[#allocation4] sm:$0xff] %v2482
  %2487 = vst [vmem:[#allocation4 + $0x8] sm:$0xff] %v2483
  %2488 = vst [vmem:[#allocation4 + $0x10] sm:$0xff] %v2484
  %2489 = vst [vmem:[#allocation4 + $0x18] sm:$0xff] %v2485
  %v2490 = vld [vmem:[#allocation4] sm:$0xff]
  %v2491 = vmul.f32 %v2490, 0.5
  %v2492 = vtanh.pop %v2491
  %v2493 = vmul.f32 %v2492, 0.5
  %v2494 = vadd.f32 %v2493, 0.5
  %v2495 = vld [vmem:[#allocation4 + $0x8] sm:$0xff]
  %v2496 = vmul.f32 %v2495, 0.5
  %v2497 = vtanh.pop %v2496
  %v2498 = vmul.f32 %v2497, 0.5
  %v2499 = vadd.f32 %v2498, 0.5
  %v2500 = vld [vmem:[#allocation4 + $0x10] sm:$0xff]
  %v2501 = vtanh.pop %v2500
  %v2502 = vld [vmem:[#allocation4 + $0x18] sm:$0xff]
  %v2503 = vmul.f32 %v2502, 0.5
  %v2504 = vtanh.pop %v2503
  %v2505 = vmul.f32 %v2504, 0.5
  %v2506 = vadd.f32 %v2505, 0.5
  %v2507 = vld [vmem:[#allocation5] sm:$0xff]
  %v2508 = vmul.f32 %v2499, %v2507
  %v2509 = vmul.f32 %v2494, %v2501
  %v2510 = vadd.f32 %v2508, %v2509
  %2511 = vst [vmem:[#allocation5] sm:$0xff] %v2510
  %v2512 = vld [vmem:[#allocation5] sm:$0xff]
  %v2513 = vtanh.pop %v2512
  %v2514 = vmul.f32 %v2506, %v2513
  %2515 = vst [vmem:[#allocation3 + $0x38] sm:$0xff] %v2514
  %v2516 = vld [vmem:[%s0] sm:$0xff]
  %vm2517 = vcmp.gt.s32.totalorder %v2516, 0
  %vm2518 = vcmp.gt.s32.totalorder %v2516, 1
  %vm2519 = vcmp.gt.s32.totalorder %v2516, 2
  %vm2520 = vcmp.gt.s32.totalorder %v2516, 3
  %vm2521 = vcmp.gt.s32.totalorder %v2516, 4
  %vm2522 = vcmp.gt.s32.totalorder %v2516, 5
  %vm2523 = vcmp.gt.s32.totalorder %v2516, 6
  %vm2524 = vcmp.gt.s32.totalorder %v2516, 7
  %v2525 = vsel %vm2517, 1, 0
  %v2526 = vsel %vm2518, 1, 0
  %v2527 = vsel %vm2519, 1, 0
  %v2528 = vsel %vm2520, 1, 0
  %v2529 = vsel %vm2521, 1, 0
  %v2530 = vsel %vm2522, 1, 0
  %v2531 = vsel %vm2523, 1, 0
  %v2532 = vsel %vm2524, 1, 0
  %v2533 = vcvt.s32.f32 %v2525
  %v2534 = vcvt.s32.f32 %v2526
  %v2535 = vcvt.s32.f32 %v2527
  %v2536 = vcvt.s32.f32 %v2528
  %v2537 = vcvt.s32.f32 %v2529
  %v2538 = vcvt.s32.f32 %v2530
  %v2539 = vcvt.s32.f32 %v2531
  %v2540 = vcvt.s32.f32 %v2532
  %v2541 = vld [vmem:[#allocation3] sm:$0xff]
  %v2542 = vld [vmem:[#allocation3 + $0x8] sm:$0xff]
  %v2543 = vld [vmem:[#allocation3 + $0x10] sm:$0xff]
  %v2544 = vld [vmem:[#allocation3 + $0x18] sm:$0xff]
  %v2545 = vld [vmem:[#allocation3 + $0x20] sm:$0xff]
  %v2546 = vld [vmem:[#allocation3 + $0x28] sm:$0xff]
  %v2547 = vld [vmem:[#allocation3 + $0x30] sm:$0xff]
  %v2548 = vld [vmem:[#allocation3 + $0x38] sm:$0xff]
  %2550 = vset.pattern.permute.xlu0 0
  %2551 = vperm.xlu0 %2550, %v2533
  %v2552 = vpop.permute.xlu0 %2551
  %2555 = vset.pattern.permute.xlu0 0
  %2556 = vperm.xlu0 %2555, %v2534
  %v2557 = vpop.permute.xlu0 %2556
  %2560 = vset.pattern.permute.xlu0 0
  %2561 = vperm.xlu0 %2560, %v2535
  %v2562 = vpop.permute.xlu0 %2561
  %2565 = vset.pattern.permute.xlu0 0
  %2566 = vperm.xlu0 %2565, %v2536
  %v2567 = vpop.permute.xlu0 %2566
  %2570 = vset.pattern.permute.xlu0 0
  %2571 = vperm.xlu0 %2570, %v2537
  %v2572 = vpop.permute.xlu0 %2571
  %2575 = vset.pattern.permute.xlu0 0
  %2576 = vperm.xlu0 %2575, %v2538
  %v2577 = vpop.permute.xlu0 %2576
  %2580 = vset.pattern.permute.xlu0 0
  %2581 = vperm.xlu0 %2580, %v2539
  %v2582 = vpop.permute.xlu0 %2581
  %2585 = vset.pattern.permute.xlu0 0
  %2586 = vperm.xlu0 %2585, %v2540
  %v2587 = vpop.permute.xlu0 %2586
  %v2589 = vmul.f32 %v2541, %v2552
  %v2590 = vmul.f32 %v2542, %v2557
  %v2591 = vmul.f32 %v2543, %v2562
  %v2592 = vmul.f32 %v2544, %v2567
  %v2593 = vmul.f32 %v2545, %v2572
  %v2594 = vmul.f32 %v2546, %v2577
  %v2595 = vmul.f32 %v2547, %v2582
  %v2596 = vmul.f32 %v2548, %v2587
  %v2597 = vld [vmem:[%s5] sm:$0x1]
  %v2599 = vperm.slane %v2597, 0
  %v2601 = vmul.f32 %v2589, %v2599
  %v2602 = vmul.f32 %v2590, %v2599
  %v2603 = vmul.f32 %v2591, %v2599
  %v2604 = vmul.f32 %v2592, %v2599
  %v2605 = vmul.f32 %v2593, %v2599
  %v2606 = vmul.f32 %v2594, %v2599
  %v2607 = vmul.f32 %v2595, %v2599
  %v2608 = vmul.f32 %v2596, %v2599
  %2609 = vadd.xlane.f32.xlu0 %v2601
  %v2610 = vpop.xlane.xlu0 %2609
  %2611 = vadd.xlane.f32.xlu0 %v2602
  %v2612 = vpop.xlane.xlu0 %2611
  %2613 = vadd.xlane.f32.xlu0 %v2603
  %v2614 = vpop.xlane.xlu0 %2613
  %2615 = vadd.xlane.f32.xlu0 %v2604
  %v2616 = vpop.xlane.xlu0 %2615
  %2617 = vadd.xlane.f32.xlu0 %v2605
  %v2618 = vpop.xlane.xlu0 %2617
  %2619 = vadd.xlane.f32.xlu0 %v2606
  %v2620 = vpop.xlane.xlu0 %2619
  %2621 = vadd.xlane.f32.xlu0 %v2607
  %v2622 = vpop.xlane.xlu0 %2621
  %2623 = vadd.xlane.f32.xlu0 %v2608
  %v2624 = vpop.xlane.xlu0 %2623
  %v2625 = vtanh.pop %v2610
  %v2626 = vtanh.pop %v2612
  %v2627 = vtanh.pop %v2614
  %v2628 = vtanh.pop %v2616
  %v2629 = vtanh.pop %v2618
  %v2630 = vtanh.pop %v2620
  %v2631 = vtanh.pop %v2622
  %v2632 = vtanh.pop %v2624
  %v2633 = vmax.f32 %v2625, %v2629
  %v2634 = vmax.f32 %v2626, %v2630
  %v2635 = vmax.f32 %v2627, %v2631
  %v2636 = vmax.f32 %v2628, %v2632
  %v2637 = vmax.f32 %v2633, %v2634
  %v2638 = vmax.f32 %v2635, %v2636
  %v2639 = vmax.f32 %v2637, %v2638
  %v2640 = vsub.f32 %v2625, %v2639
  %v2641 = vsub.f32 %v2626, %v2639
  %v2642 = vsub.f32 %v2627, %v2639
  %v2643 = vsub.f32 %v2628, %v2639
  %v2644 = vsub.f32 %v2629, %v2639
  %v2645 = vsub.f32 %v2630, %v2639
  %v2646 = vsub.f32 %v2631, %v2639
  %v2647 = vsub.f32 %v2632, %v2639
  %v2648 = vmul.f32 %v2640, 1.442695
  %v2649 = vpow.pop %v2648
  %v2650 = vmul.f32 %v2641, 1.442695
  %v2651 = vpow.pop %v2650
  %v2652 = vmul.f32 %v2642, 1.442695
  %v2653 = vpow.pop %v2652
  %v2654 = vmul.f32 %v2643, 1.442695
  %v2655 = vpow.pop %v2654
  %v2656 = vmul.f32 %v2644, 1.442695
  %v2657 = vpow.pop %v2656
  %v2658 = vmul.f32 %v2645, 1.442695
  %v2659 = vpow.pop %v2658
  %v2660 = vmul.f32 %v2646, 1.442695
  %v2661 = vpow.pop %v2660
  %v2662 = vmul.f32 %v2647, 1.442695
  %v2663 = vpow.pop %v2662
  %v2664 = vadd.f32 %v2649, %v2651
  %v2665 = vadd.f32 %v2664, %v2653
  %v2666 = vadd.f32 %v2665, %v2655
  %v2667 = vadd.f32 %v2666, %v2657
  %v2668 = vadd.f32 %v2667, %v2659
  %v2669 = vadd.f32 %v2668, %v2661
  %v2670 = vadd.f32 %v2669, %v2663
  %v2671 = vrcp.pop %v2670
  %v2672 = vmul.f32 %v2670, %v2671
  %v2673 = vsub.f32 1.0, %v2672
  %v2674 = vmul.f32 %v2671, %v2673
  %v2675 = vadd.f32 %v2671, %v2674
  %vm2676 = vweird.f32 %v2670
  %vm2677 = vweird.f32 %v2671
  %vm2678 = vmor %vm2676, %vm2677
  %v2679 = vsel %vm2678, %v2671, %v2675
  %v2680 = vand.u32 2147483647, %v2670
  %vm2681 = vcmp.eq.f32.partialorder %v2680, 8.507059e+37
  %v2682 = vand.u32 %v2670, 2147483648
  %v2683 = vor.u32 1.1754944e-38, %v2682
  %v2684 = vsel %vm2681, %v2683, %v2679
  %v2685 = vmul.f32 %v2649, %v2684
  %v2686 = vmul.f32 %v2651, %v2684
  %v2687 = vmul.f32 %v2653, %v2684
  %v2688 = vmul.f32 %v2655, %v2684
  %v2689 = vmul.f32 %v2657, %v2684
  %v2690 = vmul.f32 %v2659, %v2684
  %v2691 = vmul.f32 %v2661, %v2684
  %v2692 = vmul.f32 %v2663, %v2684
  %v2693 = vmul.f32 %v2685, %v2533
  %v2694 = vmul.f32 %v2686, %v2534
  %v2695 = vmul.f32 %v2687, %v2535
  %v2696 = vmul.f32 %v2688, %v2536
  %v2697 = vmul.f32 %v2689, %v2537
  %v2698 = vmul.f32 %v2690, %v2538
  %v2699 = vmul.f32 %v2691, %v2539
  %v2700 = vmul.f32 %v2692, %v2540
  %vm2701 = vcmask 7168
  %v2702 = vsel %vm2701, %v2693, 0.0
  %v2703 = vsel %vm2701, %v2694, 0.0
  %v2704 = vadd.f32 %v2702, %v2703
  %v2705 = vsel %vm2701, %v2695, 0.0
  %v2706 = vadd.f32 %v2704, %v2705
  %v2707 = vsel %vm2701, %v2696, 0.0
  %v2708 = vadd.f32 %v2706, %v2707
  %v2709 = vsel %vm2701, %v2697, 0.0
  %v2710 = vadd.f32 %v2708, %v2709
  %v2711 = vsel %vm2701, %v2698, 0.0
  %v2712 = vadd.f32 %v2710, %v2711
  %v2713 = vsel %vm2701, %v2699, 0.0
  %v2714 = vadd.f32 %v2712, %v2713
  %v2715 = vsel %vm2701, %v2700, 0.0
  %v2716 = vadd.f32 %v2714, %v2715
  %v2717 = vmax.f32 %v2716, 1e-09
  %v2718 = vrcp.pop %v2717
  %v2719 = vmul.f32 %v2717, %v2718
  %v2720 = vsub.f32 1.0, %v2719
  %v2721 = vmul.f32 %v2718, %v2720
  %v2722 = vadd.f32 %v2718, %v2721
  %vm2723 = vweird.f32 %v2717
  %vm2724 = vweird.f32 %v2718
  %vm2725 = vmor %vm2723, %vm2724
  %v2726 = vsel %vm2725, %v2718, %v2722
  %v2727 = vand.u32 2147483647, %v2717
  %vm2728 = vcmp.eq.f32.partialorder %v2727, 8.507059e+37
  %v2729 = vand.u32 %v2717, 2147483648
  %v2730 = vor.u32 1.1754944e-38, %v2729
  %v2731 = vsel %vm2728, %v2730, %v2726
  %v2732 = vmul.f32 %v2693, %v2731
  %v2733 = vmul.f32 %v2694, %v2731
  %v2734 = vmul.f32 %v2695, %v2731
  %v2735 = vmul.f32 %v2696, %v2731
  %v2736 = vmul.f32 %v2697, %v2731
  %v2737 = vmul.f32 %v2698, %v2731
  %v2738 = vmul.f32 %v2699, %v2731
  %v2739 = vmul.f32 %v2700, %v2731
  %2741 = vset.pattern.permute.xlu0 0
  %2742 = vperm.xlu0 %2741, %v2732
  %v2743 = vpop.permute.xlu0 %2742
  %2746 = vset.pattern.permute.xlu0 0
  %2747 = vperm.xlu0 %2746, %v2733
  %v2748 = vpop.permute.xlu0 %2747
  %2751 = vset.pattern.permute.xlu0 0
  %2752 = vperm.xlu0 %2751, %v2734
  %v2753 = vpop.permute.xlu0 %2752
  %2756 = vset.pattern.permute.xlu0 0
  %2757 = vperm.xlu0 %2756, %v2735
  %v2758 = vpop.permute.xlu0 %2757
  %2761 = vset.pattern.permute.xlu0 0
  %2762 = vperm.xlu0 %2761, %v2736
  %v2763 = vpop.permute.xlu0 %2762
  %2766 = vset.pattern.permute.xlu0 0
  %2767 = vperm.xlu0 %2766, %v2737
  %v2768 = vpop.permute.xlu0 %2767
  %2771 = vset.pattern.permute.xlu0 0
  %2772 = vperm.xlu0 %2771, %v2738
  %v2773 = vpop.permute.xlu0 %2772
  %2776 = vset.pattern.permute.xlu0 0
  %2777 = vperm.xlu0 %2776, %v2739
  %v2778 = vpop.permute.xlu0 %2777
  %v2780 = vmul.f32 %v2589, %v2743
  %v2781 = vmul.f32 %v2590, %v2748
  %v2782 = vmul.f32 %v2591, %v2753
  %v2783 = vmul.f32 %v2592, %v2758
  %v2784 = vmul.f32 %v2593, %v2763
  %v2785 = vmul.f32 %v2594, %v2768
  %v2786 = vmul.f32 %v2595, %v2773
  %v2787 = vmul.f32 %v2596, %v2778
  %v2788 = vadd.f32 %v2780, %v2781
  %v2789 = vadd.f32 %v2788, %v2782
  %v2790 = vadd.f32 %v2789, %v2783
  %v2791 = vadd.f32 %v2790, %v2784
  %v2792 = vadd.f32 %v2791, %v2785
  %v2793 = vadd.f32 %v2792, %v2786
  %v2794 = vadd.f32 %v2793, %v2787
  %v2795 = vpack.c.bf16 %v2794, %v2794
  %v2796 = vld [vmem:[%s6] sm:$0xf]
  %v2797 = vld [vmem:[%s6 + $0x4] sm:$0xf]
  %v2798 = vld [vmem:[%s6 + $0x8] sm:$0xf]
  %v2799 = vld [vmem:[%s6 + $0xc] sm:$0xf]
  %v2800 = vld [vmem:[%s6 + $0x10] sm:$0xf]
  %v2801 = vld [vmem:[%s6 + $0x14] sm:$0xf]
  %v2802 = vld [vmem:[%s6 + $0x18] sm:$0xf]
  %v2803 = vld [vmem:[%s6 + $0x1c] sm:$0xf]
  %v2804 = vld [vmem:[%s6 + $0x20] sm:$0xf]
  %v2805 = vld [vmem:[%s6 + $0x24] sm:$0xf]
  %v2806 = vld [vmem:[%s6 + $0x28] sm:$0xf]
  %v2807 = vld [vmem:[%s6 + $0x2c] sm:$0xf]
  %v2808 = vld [vmem:[%s6 + $0x30] sm:$0xf]
  %v2809 = vld [vmem:[%s6 + $0x34] sm:$0xf]
  %v2810 = vld [vmem:[%s6 + $0x38] sm:$0xf]
  %v2811 = vld [vmem:[%s6 + $0x3c] sm:$0xf]
  %v2812 = vld [vmem:[%s7] sm:$0x1]
  %v2814 = vperm.slane %v2812, 0
  %v2832 = vunpack.c.l.b16 %v2796
  %v2833 = vunpack.c.l.b16 %v2797
  %v2834 = vunpack.c.l.b16 %v2798
  %v2835 = vunpack.c.l.b16 %v2799
  %v2836 = vunpack.c.l.b16 %v2800
  %v2837 = vunpack.c.l.b16 %v2801
  %v2838 = vunpack.c.l.b16 %v2802
  %v2839 = vunpack.c.l.b16 %v2803
  %v2840 = vunpack.c.l.b16 %v2804
  %v2841 = vunpack.c.l.b16 %v2805
  %v2842 = vunpack.c.l.b16 %v2806
  %v2843 = vunpack.c.l.b16 %v2807
  %v2844 = vunpack.c.l.b16 %v2808
  %v2845 = vunpack.c.l.b16 %v2809
  %v2846 = vunpack.c.l.b16 %v2810
  %v2847 = vunpack.c.l.b16 %v2811
  %v2848 = vpack.c.b16 %v2833, %v2832
  %v2849 = vpack.c.b16 %v2835, %v2834
  %v2850 = vpack.c.b16 %v2837, %v2836
  %v2851 = vpack.c.b16 %v2839, %v2838
  %v2852 = vpack.c.b16 %v2841, %v2840
  %v2853 = vpack.c.b16 %v2843, %v2842
  %v2854 = vpack.c.b16 %v2845, %v2844
  %v2855 = vpack.c.b16 %v2847, %v2846
  %2864 = vmatpush.bf16.msra.mxu0 %v2855
  %2865 = vmatpush.bf16.msra.mxu0 %v2854
  %2866 = vmatpush.bf16.msra.mxu0 %v2853
  %2867 = vmatpush.bf16.msra.mxu0 %v2852
  %2868 = vmatpush.bf16.msra.mxu0 %v2851
  %2869 = vmatpush.bf16.msra.mxu0 %v2850
  %2870 = vmatpush.bf16.msra.mxu0 %v2849
  %2871 = vmatpush.bf16.msra.mxu0 %v2848
  %2872 = vmatmul.bf16.gmra.mxu0 %v2795
  %v2873 = vpop.f32.mrf.mxu0
  %v2874 = vadd.f32 %v2814, %v2873
  %v2875 = vpop.f32.mrf.mxu0
  %2876 = vdwg.mxu0
  %2877 = vst [vmem:[%s8] sm:$0xff] %v2874
  // Predicated region
  $region34: #{self_attention_forward.1} parent=0 // pred_check
    _
  $region35: #{self_attention_forward.1} parent=0 // pred_check_branch
    %2879 = sbr.rel (0) target = $region37
  $region36: #{self_attention_forward.1} parent=0 // pred_region
    _
  $region37: #{self_attention_forward.1} parent=0 // pred_fallthru
    _
  // Predicated region
  $region38: #{self_attention_forward.1} parent=0 // pred_check
    _
  $region39: #{self_attention_forward.1} parent=0 // pred_check_branch
    %2881 = sbr.rel (0) target = $region41
  $region40: #{self_attention_forward.1} parent=0 // pred_region
    _
  $region41: #{self_attention_forward.1} parent=0 // pred_fallthru
    _

</llo_original>
